<compile_context>
chip_gen: v6e
topology: v6e:2x2x1
jax: 0.10.0
libtpu: 0.0.40
codegen_flags: <defaults>
</compile_context>

<pallas_src>
import jax
import jax.numpy as jnp
from jax.experimental import pallas as pl
from jax.experimental.pallas import tpu as pltpu

# ----------------------------- model dims (small) -----------------------------
IMG_SIZE = 16
PATCH = 4
IN_CH = 3
V_WIDTH = 32          # vision transformer width
T_WIDTH = 32          # text transformer width
HEADS = 2
HEAD_DIM = V_WIDTH // HEADS
MLP_DIM = 64
EMBED = 32            # joint embedding dim (output feature dim)
VOCAB = 64
CTX = 8               # text context length
N_PATCHES = (IMG_SIZE // PATCH) ** 2
V_SEQ = N_PATCHES + 1          # 17 (class token + patches)
V_SEQ_PAD = 24                 # padded to a sublane multiple
PATCH_DIM = IN_CH * PATCH * PATCH   # 48
PACK_W = 64                    # lane width of the packed parameter arrays


# ------------------------- packed-parameter layout ------------------------------
def _pack_layout(entries):
    """entries: list of (name, rows, cols). Every entry start is 8-row aligned."""
    layout = {}
    r = 0
    for name, nr, nc in entries:
        assert nc <= PACK_W, name
        layout[name] = (r, nr, nc)
        r += -(-nr // 8) * 8
    return layout, max(r, 8)


def _block_entry_list(width):
    e = [("ln1_g", 1, width), ("ln1_b", 1, width)]
    for hh in range(HEADS):
        e += [(f"wq{hh}", width, HEAD_DIM), (f"wk{hh}", width, HEAD_DIM),
              (f"wv{hh}", width, HEAD_DIM),
              (f"qb{hh}", 1, HEAD_DIM), (f"kb{hh}", 1, HEAD_DIM), (f"vb{hh}", 1, HEAD_DIM),
              (f"wo{hh}", HEAD_DIM, width)]
    e += [("out_b", 1, width), ("ln2_g", 1, width), ("ln2_b", 1, width),
          ("fc_w", width, MLP_DIM), ("fc_b", 1, MLP_DIM),
          ("pw", MLP_DIM, width), ("pb", 1, width)]
    return e


_V_ENTRIES = ([("clspos", V_SEQ_PAD, V_WIDTH),
               ("conv_w", PATCH_DIM, V_WIDTH),
               ("ln_pre_g", 1, V_WIDTH), ("ln_pre_b", 1, V_WIDTH)]
              + _block_entry_list(V_WIDTH)
              + [("ln_post_g", 1, V_WIDTH), ("ln_post_b", 1, V_WIDTH),
                 ("proj", V_WIDTH, EMBED)])

_T_ENTRIES = ([("tpos", CTX, T_WIDTH),
               ("tok_emb", VOCAB, T_WIDTH)]
              + _block_entry_list(T_WIDTH)
              + [("ln_final_g", 1, T_WIDTH), ("ln_final_b", 1, T_WIDTH),
                 ("proj", T_WIDTH, EMBED)])

V_LAYOUT, V_ROWS = _pack_layout(_V_ENTRIES)
T_LAYOUT, T_ROWS = _pack_layout(_T_ENTRIES)


def _make_getter(ref, layout):
    def get(name):
        r, nr, nc = layout[name]          # static Python ints -> static ref slice
        return ref[r:r + nr, 0:nc]
    return get


# ------------------------- in-kernel building blocks ---------------------------
def _layernorm(x, g, b, eps=1e-5):
    mu = jnp.mean(x, axis=-1, keepdims=True)
    xc = x - mu
    var = jnp.mean(xc * xc, axis=-1, keepdims=True)
    return xc * jax.lax.rsqrt(var + eps) * g + b


def _attn_mlp_block(x, mask, get):
    """Pre-LN transformer block (CLIP ResidualAttentionBlock), fully in VMEM.

    Per-head q/k/v weights are pre-split host-side (scale already folded into q),
    so there are no nonzero-offset lane slices inside the kernel."""
    S, D = x.shape

    # ---- x = x + attn(ln_1(x)) ----
    h = _layernorm(x, get("ln1_g"), get("ln1_b"))
    attn = jnp.zeros((S, D), jnp.float32)
    for hh in range(HEADS):                                  # static 2-iteration loop
        q = jnp.dot(h, get(f"wq{hh}"), preferred_element_type=jnp.float32) + get(f"qb{hh}")
        k = jnp.dot(h, get(f"wk{hh}"), preferred_element_type=jnp.float32) + get(f"kb{hh}")
        v = jnp.dot(h, get(f"wv{hh}"), preferred_element_type=jnp.float32) + get(f"vb{hh}")
        s = jax.lax.dot_general(q, k, (((1,), (1,)), ((), ())),
                                preferred_element_type=jnp.float32)        # q @ k^T [S,S]
        s = s + mask
        s = s - jnp.max(s, axis=-1, keepdims=True)
        p = jnp.exp(s)
        p = p * pl.reciprocal(jnp.sum(p, axis=-1, keepdims=True), approx=True)
        o = jnp.dot(p, v, preferred_element_type=jnp.float32)             # [S, Dh]
        # head-merge fused into the output projection
        attn = attn + jnp.dot(o, get(f"wo{hh}"), preferred_element_type=jnp.float32)
    x = x + attn + get("out_b")

    # ---- x = x + mlp(ln_2(x)) ----
    h2 = _layernorm(x, get("ln2_g"), get("ln2_b"))
    m = jnp.dot(h2, get("fc_w"), preferred_element_type=jnp.float32) + get("fc_b")
    m = m * pl.reciprocal(1.0 + jnp.exp(-1.702 * m), approx=True)          # QuickGELU (EUP)
    return x + jnp.dot(m, get("pw"), preferred_element_type=jnp.float32) + get("pb")


# ------------------------------- fused kernel ---------------------------------
def _clip_kernel(patches_ref, tok_ref, vp_ref, tp_ref, o_ref):
    tower = pl.program_id(0)

    @pl.when(tower == 0)
    def _vision_tower():
        get = _make_getter(vp_ref, V_LAYOUT)
        # patch-embed conv as one MXU matmul; row 0 of patches is zero (class slot),
        # rows >= V_SEQ are zero padding. clspos carries class_emb + pos_emb already.
        x = jnp.dot(patches_ref[...], get("conv_w"),
                    preferred_element_type=jnp.float32) + get("clspos")    # [24, 32]
        x = _layernorm(x, get("ln_pre_g"), get("ln_pre_b"))

        # key-padding mask generated in-kernel (no DMA'd broadcast array)
        col = jax.lax.broadcasted_iota(jnp.int32, (V_SEQ_PAD, V_SEQ_PAD), 1)
        mask = jnp.where(col < V_SEQ, 0.0, -1e9).astype(jnp.float32)

        x = _attn_mlp_block(x, mask, get)
        cls = _layernorm(x[0:1, :], get("ln_post_g"), get("ln_post_b"))    # class token
        o_ref[...] = jnp.dot(cls, get("proj"), preferred_element_type=jnp.float32)

    @pl.when(tower == 1)
    def _text_tower():
        get = _make_getter(tp_ref, T_LAYOUT)
        tok = tok_ref[...]                                   # [CTX, 1] int32
        # embedding lookup via in-kernel one-hot (iota == token id) -> tiny MXU matmul
        col = jax.lax.broadcasted_iota(jnp.int32, (CTX, VOCAB), 1)
        onehot = (col == tok).astype(jnp.float32)            # [CTX, VOCAB]
        x = jnp.dot(onehot, get("tok_emb"),
                    preferred_element_type=jnp.float32) + get("tpos")      # [CTX, 32]

        # causal mask generated in-kernel
        rr = jax.lax.broadcasted_iota(jnp.int32, (CTX, CTX), 0)
        cc = jax.lax.broadcasted_iota(jnp.int32, (CTX, CTX), 1)
        mask = jnp.where(cc <= rr, 0.0, -1e9).astype(jnp.float32)

        x = _attn_mlp_block(x, mask, get)
        x = _layernorm(x, get("ln_final_g"), get("ln_final_b"))

        # EOT pooling (CLIP: features at argmax token id), integer compare, first max row.
        ridx = jax.lax.broadcasted_iota(jnp.int32, (CTX, 1), 0)
        tmax = jnp.max(tok, keepdims=True)                   # [1,1]
        eot = jnp.min(jnp.where(tok == tmax, ridx, CTX), keepdims=True)    # [1,1]
        sel = (ridx == eot).astype(jnp.float32)              # [CTX, 1] one-hot row
        feat = jnp.sum(x * sel, axis=0, keepdims=True)       # [1, 32]
        o_ref[...] = jnp.dot(feat, get("proj"), preferred_element_type=jnp.float32)


# ------------------------------- fused wrapper ----------------------------------
def forward(packed, image, tokens):
    """Mirrors CLIPFeatureExtractor.forward: image.unsqueeze(0), encode image + text."""
    vis_pack, txt_pack = packed
    image = image[None, ...]                                 # [1, 3, 16, 16] NCHW
    _, C, H, W = image.shape
    gh, gw = H // PATCH, W // PATCH
    # data-dependent patch unfold (pure layout plumbing), row 0 = class slot, rows>=17 pad
    patches = (image[0].reshape(C, gh, PATCH, gw, PATCH)
               .transpose(1, 3, 0, 2, 4)
               .reshape(gh * gw, C * PATCH * PATCH))         # [16, 48]
    patches_pad = jnp.pad(patches, ((1, V_SEQ_PAD - V_SEQ), (0, 0)))       # [24, 48]
    tok_col = tokens[0].astype(jnp.int32).reshape(CTX, 1)

    out = pl.pallas_call(
        _clip_kernel,
        out_shape=jax.ShapeDtypeStruct((2, 1, EMBED), jnp.float32),
        grid=(2,),                                           # tower axis (v7x: 2 TCs)
        in_specs=[
            pl.BlockSpec((V_SEQ_PAD, PATCH_DIM), lambda i: (0, 0)),
            pl.BlockSpec((CTX, 1), lambda i: (0, 0)),
            pl.BlockSpec((V_ROWS, PACK_W), lambda i: (0, 0)),
            pl.BlockSpec((T_ROWS, PACK_W), lambda i: (0, 0)),
        ],
        out_specs=pl.BlockSpec((None, 1, EMBED), lambda i: (i, 0, 0)),
        compiler_params=pltpu.CompilerParams(dimension_semantics=("parallel",)),
    )(patches_pad, tok_col, vis_pack, txt_pack)

    image_features = out[0]                                  # [1, EMBED]
    text_features = out[1]                                   # [1, EMBED]
    return image_features, text_features


# ----------------------------------- params -------------------------------------
def init_params(key):
    keys = jax.random.split(key, 12)

    def norm(k, shape, scale=0.02):
        return (scale * jax.random.normal(k, shape)).astype(jnp.float32)

    def block_params(k, width, mlp):
        ks = jax.random.split(k, 4)
        return dict(
            ln1_g=jnp.ones((1, width), jnp.float32),
            ln1_b=jnp.zeros((1, width), jnp.float32),
            qkv_w=norm(ks[0], (width, 3 * width)),
            qkv_b=jnp.zeros((1, 3 * width), jnp.float32),
            out_w=norm(ks[1], (width, width)),
            out_b=jnp.zeros((1, width), jnp.float32),
            ln2_g=jnp.ones((1, width), jnp.float32),
            ln2_b=jnp.zeros((1, width), jnp.float32),
            fc_w=norm(ks[2], (width, mlp)),
            fc_b=jnp.zeros((1, mlp), jnp.float32),
            proj_w=norm(ks[3], (mlp, width)),
            proj_b=jnp.zeros((1, width), jnp.float32),
        )

    return dict(
        # vision tower
        conv_w=norm(keys[0], (PATCH_DIM, V_WIDTH)),
        class_emb=norm(keys[1], (1, V_WIDTH)),
        pos_emb=norm(keys[2], (V_SEQ, V_WIDTH)),
        ln_pre_g=jnp.ones((1, V_WIDTH), jnp.float32),
        ln_pre_b=jnp.zeros((1, V_WIDTH), jnp.float32),
        vblock=block_params(keys[3], V_WIDTH, MLP_DIM),
        ln_post_g=jnp.ones((1, V_WIDTH), jnp.float32),
        ln_post_b=jnp.zeros((1, V_WIDTH), jnp.float32),
        visual_proj=norm(keys[4], (V_WIDTH, EMBED)),
        # text tower
        tok_emb=norm(keys[5], (VOCAB, T_WIDTH)),
        tpos_emb=norm(keys[6], (CTX, T_WIDTH)),
        tblock=block_params(keys[7], T_WIDTH, MLP_DIM),
        ln_final_g=jnp.ones((1, T_WIDTH), jnp.float32),
        ln_final_b=jnp.zeros((1, T_WIDTH), jnp.float32),
        text_proj=norm(keys[8], (T_WIDTH, EMBED)),
    )


def pack_params(p):
    """One-time host/XLA-side transform: fold attention scale into q, split qkv per head,
    fold class_emb into the (padded) positional table, and pack each tower's parameters
    into a single [R, 64] f32 array."""
    scale = 1.0 / float(HEAD_DIM) ** 0.5

    def split_block(b, width):
        t = {}
        qkv_w = b["qkv_w"]
        qkv_b = b["qkv_b"][0]
        wq = qkv_w[:, 0:width] * scale          # scale folded into q weights
        wk = qkv_w[:, width:2 * width]
        wv = qkv_w[:, 2 * width:3 * width]
        qb = qkv_b[0:width] * scale             # ... and q bias
        kb = qkv_b[width:2 * width]
        vb = qkv_b[2 * width:3 * width]
        for hh in range(HEADS):
            lo, hi = hh * HEAD_DIM, (hh + 1) * HEAD_DIM
            t[f"wq{hh}"] = wq[:, lo:hi]
            t[f"wk{hh}"] = wk[:, lo:hi]
            t[f"wv{hh}"] = wv[:, lo:hi]
            t[f"qb{hh}"] = qb[lo:hi].reshape(1, HEAD_DIM)
            t[f"kb{hh}"] = kb[lo:hi].reshape(1, HEAD_DIM)
            t[f"vb{hh}"] = vb[lo:hi].reshape(1, HEAD_DIM)
            t[f"wo{hh}"] = b["out_w"][lo:hi, :]
        t.update(ln1_g=b["ln1_g"], ln1_b=b["ln1_b"], out_b=b["out_b"],
                 ln2_g=b["ln2_g"], ln2_b=b["ln2_b"],
                 fc_w=b["fc_w"], fc_b=b["fc_b"], pw=b["proj_w"], pb=b["proj_b"])
        return t

    def pack(layout, total_rows, tensors):
        buf = jnp.zeros((total_rows, PACK_W), jnp.float32)
        for name, (r, nr, nc) in layout.items():
            buf = buf.at[r:r + nr, 0:nc].set(tensors[name].astype(jnp.float32).reshape(nr, nc))
        return buf

    vis_t = split_block(p["vblock"], V_WIDTH)
    vis_t.update(
        clspos=jnp.pad(p["pos_emb"].at[0:1].add(p["class_emb"]),
                       ((0, V_SEQ_PAD - V_SEQ), (0, 0))),
        conv_w=p["conv_w"],
        ln_pre_g=p["ln_pre_g"], ln_pre_b=p["ln_pre_b"],
        ln_post_g=p["ln_post_g"], ln_post_b=p["ln_post_b"],
        proj=p["visual_proj"],
    )
    txt_t = split_block(p["tblock"], T_WIDTH)
    txt_t.update(
        tpos=p["tpos_emb"], tok_emb=p["tok_emb"],
        ln_final_g=p["ln_final_g"], ln_final_b=p["ln_final_b"],
        proj=p["text_proj"],
    )
    return pack(V_LAYOUT, V_ROWS, vis_t), pack(T_LAYOUT, T_ROWS, txt_t)


# ------------------------------------ main ---------------------------------------
if __name__ == "__main__":
    key = jax.random.PRNGKey(0)
    pkey, ikey = jax.random.split(key)

    packed = pack_params(init_params(pkey))                  # one-time packing (2 arrays)
    image = jax.random.normal(ikey, (IN_CH, IMG_SIZE, IMG_SIZE), dtype=jnp.float32)
    # pre-tokenized text; last token is the max id (acts as EOT for argmax pooling)
    tokens = jnp.array([[1, 5, 9, 3, 7, 2, 4, VOCAB - 1]], dtype=jnp.int32)

    img_feat, txt_feat = jax.jit(forward)(packed, image, tokens)
    jax.block_until_ready((img_feat, txt_feat))

    assert img_feat.shape == (1, EMBED), img_feat.shape
    assert txt_feat.shape == (1, EMBED), txt_feat.shape
    assert bool(jnp.all(jnp.isfinite(img_feat))) and bool(jnp.all(jnp.isfinite(txt_feat)))
    print("KERNEL_OK")
</pallas_src>

<mosaic_0001>
module attributes {stable_mosaic.version = 11 : i64} {
  func.func @_clip_kernel(%arg0: i32, %arg1: memref<24x48xf32, #tpu.memory_space<vmem>>, %arg2: memref<8x1xi32, #tpu.memory_space<vmem>>, %arg3: memref<560x64xf32, #tpu.memory_space<vmem>>, %arg4: memref<544x64xf32, #tpu.memory_space<vmem>>, %arg5: memref<1x1x32xf32, #tpu.memory_space<vmem>>) attributes {dimension_semantics = [#tpu.dimension_semantics<parallel>], iteration_bounds = array<i64: 2>, scalar_prefetch = 0 : i64, scratch_operands = 0 : i64, tpu.core_type = #tpu.core_type<tc>, window_params = [{pipeline_mode = #tpu.pipeline_mode<synchronous>, transform_indices = @transform_0, window_bounds = array<i64: 24, 48>}, {pipeline_mode = #tpu.pipeline_mode<synchronous>, transform_indices = @transform_1, window_bounds = array<i64: 8, 1>}, {pipeline_mode = #tpu.pipeline_mode<synchronous>, transform_indices = @transform_2, window_bounds = array<i64: 560, 64>}, {pipeline_mode = #tpu.pipeline_mode<synchronous>, transform_indices = @transform_3, window_bounds = array<i64: 544, 64>}, {transform_indices = @transform_4, window_bounds = array<i64: 1, 1, 32>}]} {
    %c0_i32 = arith.constant 0 : i32
    %0 = arith.cmpi eq, %arg0, %c0_i32 : i32
    %1 = arith.extui %0 : i1 to i32
    %c0_i32_0 = arith.constant 0 : i32
    %2 = arith.cmpi ne, %1, %c0_i32_0 : i32
    scf.if %2 {
      %c0 = arith.constant 0 : index
      %c0_2 = arith.constant 0 : index
      %6 = vector.load %arg1[%c0, %c0_2] : memref<24x48xf32, #tpu.memory_space<vmem>>, vector<24x48xf32>
      %c24 = arith.constant 24 : index
      %c0_3 = arith.constant 0 : index
      %7 = vector.load %arg3[%c24, %c0_3] : memref<560x64xf32, #tpu.memory_space<vmem>>, vector<48x32xf32>
      %cst = arith.constant dense<0.000000e+00> : vector<24x32xf32>
      %8 = tpu.matmul %6, %7, %cst {dimension_numbers = #tpu.dot_dimension_numbers<[1], [0], [0], [1], [0, 0, 1, 1], [], []>} : vector<24x48xf32>, vector<48x32xf32>, vector<24x32xf32> -> vector<24x32xf32>
      %c0_4 = arith.constant 0 : index
      %c0_5 = arith.constant 0 : index
      %9 = vector.load %arg3[%c0_4, %c0_5] : memref<560x64xf32, #tpu.memory_space<vmem>>, vector<24x32xf32>
      %10 = arith.addf %8, %9 : vector<24x32xf32>
      %c72 = arith.constant 72 : index
      %c0_6 = arith.constant 0 : index
      %11 = vector.load %arg3[%c72, %c0_6] : memref<560x64xf32, #tpu.memory_space<vmem>>, vector<1x32xf32>
      %c80 = arith.constant 80 : index
      %c0_7 = arith.constant 0 : index
      %12 = vector.load %arg3[%c80, %c0_7] : memref<560x64xf32, #tpu.memory_space<vmem>>, vector<1x32xf32>
      %cst_8 = arith.constant dense<0.000000e+00> : vector<24xf32>
      %13 = vector.multi_reduction <add>, %10, %cst_8 [1] : vector<24x32xf32> to vector<24xf32>
      %14 = vector.shape_cast %13 : vector<24xf32> to vector<24x1xf32>
      %cst_9 = arith.constant 3.200000e+01 : f32
      %15 = vector.broadcast %cst_9 : f32 to vector<24x1xf32>
      %16 = arith.divf %14, %15 : vector<24x1xf32>
      %17 = vector.broadcast %16 : vector<24x1xf32> to vector<24x32xf32>
      %18 = arith.subf %10, %17 : vector<24x32xf32>
      %19 = arith.mulf %18, %18 : vector<24x32xf32>
      %cst_10 = arith.constant dense<0.000000e+00> : vector<24xf32>
      %20 = vector.multi_reduction <add>, %19, %cst_10 [1] : vector<24x32xf32> to vector<24xf32>
      %21 = vector.shape_cast %20 : vector<24xf32> to vector<24x1xf32>
      %cst_11 = arith.constant 3.200000e+01 : f32
      %22 = vector.broadcast %cst_11 : f32 to vector<24x1xf32>
      %23 = arith.divf %21, %22 : vector<24x1xf32>
      %cst_12 = arith.constant 9.99999974E-6 : f32
      %24 = vector.broadcast %cst_12 : f32 to vector<24x1xf32>
      %25 = arith.addf %23, %24 : vector<24x1xf32>
      %26 = math.rsqrt %25 : vector<24x1xf32>
      %27 = vector.broadcast %26 : vector<24x1xf32> to vector<24x32xf32>
      %28 = arith.mulf %18, %27 : vector<24x32xf32>
      %29 = vector.broadcast %11 : vector<1x32xf32> to vector<24x32xf32>
      %30 = arith.mulf %28, %29 : vector<24x32xf32>
      %31 = vector.broadcast %12 : vector<1x32xf32> to vector<24x32xf32>
      %32 = arith.addf %30, %31 : vector<24x32xf32>
      %33 = tpu.iota {dimensions = array<i32: 1>} : vector<24x24xi32>
      %c17_i32 = arith.constant 17 : i32
      %34 = vector.broadcast %c17_i32 : i32 to vector<24x24xi32>
      %35 = arith.cmpi slt, %33, %34 : vector<24x24xi32>
      %cst_13 = arith.constant 0.000000e+00 : f32
      %cst_14 = arith.constant -1.000000e+09 : f32
      %36 = vector.broadcast %cst_13 : f32 to vector<24x24xf32>
      %37 = vector.broadcast %cst_14 : f32 to vector<24x24xf32>
      %38 = arith.select %35, %36, %37 : vector<24x24xi1>, vector<24x24xf32>
      %c88 = arith.constant 88 : index
      %c0_15 = arith.constant 0 : index
      %39 = vector.load %arg3[%c88, %c0_15] : memref<560x64xf32, #tpu.memory_space<vmem>>, vector<1x32xf32>
      %c96 = arith.constant 96 : index
      %c0_16 = arith.constant 0 : index
      %40 = vector.load %arg3[%c96, %c0_16] : memref<560x64xf32, #tpu.memory_space<vmem>>, vector<1x32xf32>
      %cst_17 = arith.constant dense<0.000000e+00> : vector<24xf32>
      %41 = vector.multi_reduction <add>, %32, %cst_17 [1] : vector<24x32xf32> to vector<24xf32>
      %42 = vector.shape_cast %41 : vector<24xf32> to vector<24x1xf32>
      %cst_18 = arith.constant 3.200000e+01 : f32
      %43 = vector.broadcast %cst_18 : f32 to vector<24x1xf32>
      %44 = arith.divf %42, %43 : vector<24x1xf32>
      %45 = vector.broadcast %44 : vector<24x1xf32> to vector<24x32xf32>
      %46 = arith.subf %32, %45 : vector<24x32xf32>
      %47 = arith.mulf %46, %46 : vector<24x32xf32>
      %cst_19 = arith.constant dense<0.000000e+00> : vector<24xf32>
      %48 = vector.multi_reduction <add>, %47, %cst_19 [1] : vector<24x32xf32> to vector<24xf32>
      %49 = vector.shape_cast %48 : vector<24xf32> to vector<24x1xf32>
      %cst_20 = arith.constant 3.200000e+01 : f32
      %50 = vector.broadcast %cst_20 : f32 to vector<24x1xf32>
      %51 = arith.divf %49, %50 : vector<24x1xf32>
      %cst_21 = arith.constant 9.99999974E-6 : f32
      %52 = vector.broadcast %cst_21 : f32 to vector<24x1xf32>
      %53 = arith.addf %51, %52 : vector<24x1xf32>
      %54 = math.rsqrt %53 : vector<24x1xf32>
      %55 = vector.broadcast %54 : vector<24x1xf32> to vector<24x32xf32>
      %56 = arith.mulf %46, %55 : vector<24x32xf32>
      %57 = vector.broadcast %39 : vector<1x32xf32> to vector<24x32xf32>
      %58 = arith.mulf %56, %57 : vector<24x32xf32>
      %59 = vector.broadcast %40 : vector<1x32xf32> to vector<24x32xf32>
      %60 = arith.addf %58, %59 : vector<24x32xf32>
      %cst_22 = arith.constant 0.000000e+00 : f32
      %61 = vector.broadcast %cst_22 : f32 to vector<24x32xf32>
      %c104 = arith.constant 104 : index
      %c0_23 = arith.constant 0 : index
      %62 = vector.load %arg3[%c104, %c0_23] : memref<560x64xf32, #tpu.memory_space<vmem>>, vector<32x16xf32>
      %cst_24 = arith.constant dense<0.000000e+00> : vector<24x16xf32>
      %63 = tpu.matmul %60, %62, %cst_24 {dimension_numbers = #tpu.dot_dimension_numbers<[1], [0], [0], [1], [0, 0, 1, 1], [], []>} : vector<24x32xf32>, vector<32x16xf32>, vector<24x16xf32> -> vector<24x16xf32>
      %c200 = arith.constant 200 : index
      %c0_25 = arith.constant 0 : index
      %64 = vector.load %arg3[%c200, %c0_25] : memref<560x64xf32, #tpu.memory_space<vmem>>, vector<1x16xf32>
      %65 = vector.broadcast %64 : vector<1x16xf32> to vector<24x16xf32>
      %66 = arith.addf %63, %65 : vector<24x16xf32>
      %c136 = arith.constant 136 : index
      %c0_26 = arith.constant 0 : index
      %67 = vector.load %arg3[%c136, %c0_26] : memref<560x64xf32, #tpu.memory_space<vmem>>, vector<32x16xf32>
      %cst_27 = arith.constant dense<0.000000e+00> : vector<24x16xf32>
      %68 = tpu.matmul %60, %67, %cst_27 {dimension_numbers = #tpu.dot_dimension_numbers<[1], [0], [0], [1], [0, 0, 1, 1], [], []>} : vector<24x32xf32>, vector<32x16xf32>, vector<24x16xf32> -> vector<24x16xf32>
      %c208 = arith.constant 208 : index
      %c0_28 = arith.constant 0 : index
      %69 = vector.load %arg3[%c208, %c0_28] : memref<560x64xf32, #tpu.memory_space<vmem>>, vector<1x16xf32>
      %70 = vector.broadcast %69 : vector<1x16xf32> to vector<24x16xf32>
      %71 = arith.addf %68, %70 : vector<24x16xf32>
      %c168 = arith.constant 168 : index
      %c0_29 = arith.constant 0 : index
      %72 = vector.load %arg3[%c168, %c0_29] : memref<560x64xf32, #tpu.memory_space<vmem>>, vector<32x16xf32>
      %cst_30 = arith.constant dense<0.000000e+00> : vector<24x16xf32>
      %73 = tpu.matmul %60, %72, %cst_30 {dimension_numbers = #tpu.dot_dimension_numbers<[1], [0], [0], [1], [0, 0, 1, 1], [], []>} : vector<24x32xf32>, vector<32x16xf32>, vector<24x16xf32> -> vector<24x16xf32>
      %c216 = arith.constant 216 : index
      %c0_31 = arith.constant 0 : index
      %74 = vector.load %arg3[%c216, %c0_31] : memref<560x64xf32, #tpu.memory_space<vmem>>, vector<1x16xf32>
      %75 = vector.broadcast %74 : vector<1x16xf32> to vector<24x16xf32>
      %76 = arith.addf %73, %75 : vector<24x16xf32>
      %cst_32 = arith.constant dense<0.000000e+00> : vector<24x24xf32>
      %77 = tpu.matmul %66, %71, %cst_32 {dimension_numbers = #tpu.dot_dimension_numbers<[1], [1], [0], [0], [0, 0, 1, 0], [], []>} : vector<24x16xf32>, vector<24x16xf32>, vector<24x24xf32> -> vector<24x24xf32>
      %78 = arith.addf %77, %38 : vector<24x24xf32>
      %cst_33 = arith.constant dense<0xFF800000> : vector<24xf32>
      %79 = vector.multi_reduction <maximumf>, %78, %cst_33 [1] : vector<24x24xf32> to vector<24xf32>
      %80 = vector.shape_cast %79 : vector<24xf32> to vector<24x1xf32>
      %81 = vector.broadcast %80 : vector<24x1xf32> to vector<24x24xf32>
      %82 = arith.subf %78, %81 : vector<24x24xf32>
      %83 = math.exp %82 : vector<24x24xf32>
      %cst_34 = arith.constant dense<0.000000e+00> : vector<24xf32>
      %84 = vector.multi_reduction <add>, %83, %cst_34 [1] : vector<24x24xf32> to vector<24xf32>
      %85 = vector.shape_cast %84 : vector<24xf32> to vector<24x1xf32>
      %86 = tpu.reciprocal %85 {approx = true} : vector<24x1xf32> -> vector<24x1xf32>
      %87 = vector.broadcast %86 : vector<24x1xf32> to vector<24x24xf32>
      %88 = arith.mulf %83, %87 : vector<24x24xf32>
      %cst_35 = arith.constant dense<0.000000e+00> : vector<24x16xf32>
      %89 = tpu.matmul %88, %76, %cst_35 {dimension_numbers = #tpu.dot_dimension_numbers<[1], [0], [0], [1], [0, 0, 1, 1], [], []>} : vector<24x24xf32>, vector<24x16xf32>, vector<24x16xf32> -> vector<24x16xf32>
      %c224 = arith.constant 224 : index
      %c0_36 = arith.constant 0 : index
      %90 = vector.load %arg3[%c224, %c0_36] : memref<560x64xf32, #tpu.memory_space<vmem>>, vector<16x32xf32>
      %cst_37 = arith.constant dense<0.000000e+00> : vector<24x32xf32>
      %91 = tpu.matmul %89, %90, %cst_37 {dimension_numbers = #tpu.dot_dimension_numbers<[1], [0], [0], [1], [0, 0, 1, 1], [], []>} : vector<24x16xf32>, vector<16x32xf32>, vector<24x32xf32> -> vector<24x32xf32>
      %92 = arith.addf %61, %91 : vector<24x32xf32>
      %c240 = arith.constant 240 : index
      %c0_38 = arith.constant 0 : index
      %93 = vector.load %arg3[%c240, %c0_38] : memref<560x64xf32, #tpu.memory_space<vmem>>, vector<32x16xf32>
      %cst_39 = arith.constant dense<0.000000e+00> : vector<24x16xf32>
      %94 = tpu.matmul %60, %93, %cst_39 {dimension_numbers = #tpu.dot_dimension_numbers<[1], [0], [0], [1], [0, 0, 1, 1], [], []>} : vector<24x32xf32>, vector<32x16xf32>, vector<24x16xf32> -> vector<24x16xf32>
      %c336 = arith.constant 336 : index
      %c0_40 = arith.constant 0 : index
      %95 = vector.load %arg3[%c336, %c0_40] : memref<560x64xf32, #tpu.memory_space<vmem>>, vector<1x16xf32>
      %96 = vector.broadcast %95 : vector<1x16xf32> to vector<24x16xf32>
      %97 = arith.addf %94, %96 : vector<24x16xf32>
      %c272 = arith.constant 272 : index
      %c0_41 = arith.constant 0 : index
      %98 = vector.load %arg3[%c272, %c0_41] : memref<560x64xf32, #tpu.memory_space<vmem>>, vector<32x16xf32>
      %cst_42 = arith.constant dense<0.000000e+00> : vector<24x16xf32>
      %99 = tpu.matmul %60, %98, %cst_42 {dimension_numbers = #tpu.dot_dimension_numbers<[1], [0], [0], [1], [0, 0, 1, 1], [], []>} : vector<24x32xf32>, vector<32x16xf32>, vector<24x16xf32> -> vector<24x16xf32>
      %c344 = arith.constant 344 : index
      %c0_43 = arith.constant 0 : index
      %100 = vector.load %arg3[%c344, %c0_43] : memref<560x64xf32, #tpu.memory_space<vmem>>, vector<1x16xf32>
      %101 = vector.broadcast %100 : vector<1x16xf32> to vector<24x16xf32>
      %102 = arith.addf %99, %101 : vector<24x16xf32>
      %c304 = arith.constant 304 : index
      %c0_44 = arith.constant 0 : index
      %103 = vector.load %arg3[%c304, %c0_44] : memref<560x64xf32, #tpu.memory_space<vmem>>, vector<32x16xf32>
      %cst_45 = arith.constant dense<0.000000e+00> : vector<24x16xf32>
      %104 = tpu.matmul %60, %103, %cst_45 {dimension_numbers = #tpu.dot_dimension_numbers<[1], [0], [0], [1], [0, 0, 1, 1], [], []>} : vector<24x32xf32>, vector<32x16xf32>, vector<24x16xf32> -> vector<24x16xf32>
      %c352 = arith.constant 352 : index
      %c0_46 = arith.constant 0 : index
      %105 = vector.load %arg3[%c352, %c0_46] : memref<560x64xf32, #tpu.memory_space<vmem>>, vector<1x16xf32>
      %106 = vector.broadcast %105 : vector<1x16xf32> to vector<24x16xf32>
      %107 = arith.addf %104, %106 : vector<24x16xf32>
      %cst_47 = arith.constant dense<0.000000e+00> : vector<24x24xf32>
      %108 = tpu.matmul %97, %102, %cst_47 {dimension_numbers = #tpu.dot_dimension_numbers<[1], [1], [0], [0], [0, 0, 1, 0], [], []>} : vector<24x16xf32>, vector<24x16xf32>, vector<24x24xf32> -> vector<24x24xf32>
      %109 = arith.addf %108, %38 : vector<24x24xf32>
      %cst_48 = arith.constant dense<0xFF800000> : vector<24xf32>
      %110 = vector.multi_reduction <maximumf>, %109, %cst_48 [1] : vector<24x24xf32> to vector<24xf32>
      %111 = vector.shape_cast %110 : vector<24xf32> to vector<24x1xf32>
      %112 = vector.broadcast %111 : vector<24x1xf32> to vector<24x24xf32>
      %113 = arith.subf %109, %112 : vector<24x24xf32>
      %114 = math.exp %113 : vector<24x24xf32>
      %cst_49 = arith.constant dense<0.000000e+00> : vector<24xf32>
      %115 = vector.multi_reduction <add>, %114, %cst_49 [1] : vector<24x24xf32> to vector<24xf32>
      %116 = vector.shape_cast %115 : vector<24xf32> to vector<24x1xf32>
      %117 = tpu.reciprocal %116 {approx = true} : vector<24x1xf32> -> vector<24x1xf32>
      %118 = vector.broadcast %117 : vector<24x1xf32> to vector<24x24xf32>
      %119 = arith.mulf %114, %118 : vector<24x24xf32>
      %cst_50 = arith.constant dense<0.000000e+00> : vector<24x16xf32>
      %120 = tpu.matmul %119, %107, %cst_50 {dimension_numbers = #tpu.dot_dimension_numbers<[1], [0], [0], [1], [0, 0, 1, 1], [], []>} : vector<24x24xf32>, vector<24x16xf32>, vector<24x16xf32> -> vector<24x16xf32>
      %c360 = arith.constant 360 : index
      %c0_51 = arith.constant 0 : index
      %121 = vector.load %arg3[%c360, %c0_51] : memref<560x64xf32, #tpu.memory_space<vmem>>, vector<16x32xf32>
      %cst_52 = arith.constant dense<0.000000e+00> : vector<24x32xf32>
      %122 = tpu.matmul %120, %121, %cst_52 {dimension_numbers = #tpu.dot_dimension_numbers<[1], [0], [0], [1], [0, 0, 1, 1], [], []>} : vector<24x16xf32>, vector<16x32xf32>, vector<24x32xf32> -> vector<24x32xf32>
      %123 = arith.addf %92, %122 : vector<24x32xf32>
      %124 = arith.addf %32, %123 : vector<24x32xf32>
      %c376 = arith.constant 376 : index
      %c0_53 = arith.constant 0 : index
      %125 = vector.load %arg3[%c376, %c0_53] : memref<560x64xf32, #tpu.memory_space<vmem>>, vector<1x32xf32>
      %126 = vector.broadcast %125 : vector<1x32xf32> to vector<24x32xf32>
      %127 = arith.addf %124, %126 : vector<24x32xf32>
      %c384 = arith.constant 384 : index
      %c0_54 = arith.constant 0 : index
      %128 = vector.load %arg3[%c384, %c0_54] : memref<560x64xf32, #tpu.memory_space<vmem>>, vector<1x32xf32>
      %c392 = arith.constant 392 : index
      %c0_55 = arith.constant 0 : index
      %129 = vector.load %arg3[%c392, %c0_55] : memref<560x64xf32, #tpu.memory_space<vmem>>, vector<1x32xf32>
      %cst_56 = arith.constant dense<0.000000e+00> : vector<24xf32>
      %130 = vector.multi_reduction <add>, %127, %cst_56 [1] : vector<24x32xf32> to vector<24xf32>
      %131 = vector.shape_cast %130 : vector<24xf32> to vector<24x1xf32>
      %cst_57 = arith.constant 3.200000e+01 : f32
      %132 = vector.broadcast %cst_57 : f32 to vector<24x1xf32>
      %133 = arith.divf %131, %132 : vector<24x1xf32>
      %134 = vector.broadcast %133 : vector<24x1xf32> to vector<24x32xf32>
      %135 = arith.subf %127, %134 : vector<24x32xf32>
      %136 = arith.mulf %135, %135 : vector<24x32xf32>
      %cst_58 = arith.constant dense<0.000000e+00> : vector<24xf32>
      %137 = vector.multi_reduction <add>, %136, %cst_58 [1] : vector<24x32xf32> to vector<24xf32>
      %138 = vector.shape_cast %137 : vector<24xf32> to vector<24x1xf32>
      %cst_59 = arith.constant 3.200000e+01 : f32
      %139 = vector.broadcast %cst_59 : f32 to vector<24x1xf32>
      %140 = arith.divf %138, %139 : vector<24x1xf32>
      %cst_60 = arith.constant 9.99999974E-6 : f32
      %141 = vector.broadcast %cst_60 : f32 to vector<24x1xf32>
      %142 = arith.addf %140, %141 : vector<24x1xf32>
      %143 = math.rsqrt %142 : vector<24x1xf32>
      %144 = vector.broadcast %143 : vector<24x1xf32> to vector<24x32xf32>
      %145 = arith.mulf %135, %144 : vector<24x32xf32>
      %146 = vector.broadcast %128 : vector<1x32xf32> to vector<24x32xf32>
      %147 = arith.mulf %145, %146 : vector<24x32xf32>
      %148 = vector.broadcast %129 : vector<1x32xf32> to vector<24x32xf32>
      %149 = arith.addf %147, %148 : vector<24x32xf32>
      %c400 = arith.constant 400 : index
      %c0_61 = arith.constant 0 : index
      %150 = vector.load %arg3[%c400, %c0_61] : memref<560x64xf32, #tpu.memory_space<vmem>>, vector<32x64xf32>
      %cst_62 = arith.constant dense<0.000000e+00> : vector<24x64xf32>
      %151 = tpu.matmul %149, %150, %cst_62 {dimension_numbers = #tpu.dot_dimension_numbers<[1], [0], [0], [1], [0, 0, 1, 1], [], []>} : vector<24x32xf32>, vector<32x64xf32>, vector<24x64xf32> -> vector<24x64xf32>
      %c432 = arith.constant 432 : index
      %c0_63 = arith.constant 0 : index
      %152 = vector.load %arg3[%c432, %c0_63] : memref<560x64xf32, #tpu.memory_space<vmem>>, vector<1x64xf32>
      %153 = vector.broadcast %152 : vector<1x64xf32> to vector<24x64xf32>
      %154 = arith.addf %151, %153 : vector<24x64xf32>
      %cst_64 = arith.constant -1.702000e+00 : f32
      %155 = vector.broadcast %cst_64 : f32 to vector<24x64xf32>
      %156 = arith.mulf %155, %154 : vector<24x64xf32>
      %157 = math.exp %156 : vector<24x64xf32>
      %cst_65 = arith.constant 1.000000e+00 : f32
      %158 = vector.broadcast %cst_65 : f32 to vector<24x64xf32>
      %159 = arith.addf %158, %157 : vector<24x64xf32>
      %160 = tpu.reciprocal %159 {approx = true} : vector<24x64xf32> -> vector<24x64xf32>
      %161 = arith.mulf %154, %160 : vector<24x64xf32>
      %c440 = arith.constant 440 : index
      %c0_66 = arith.constant 0 : index
      %162 = vector.load %arg3[%c440, %c0_66] : memref<560x64xf32, #tpu.memory_space<vmem>>, vector<64x32xf32>
      %cst_67 = arith.constant dense<0.000000e+00> : vector<24x32xf32>
      %163 = tpu.matmul %161, %162, %cst_67 {dimension_numbers = #tpu.dot_dimension_numbers<[1], [0], [0], [1], [0, 0, 1, 1], [], []>} : vector<24x64xf32>, vector<64x32xf32>, vector<24x32xf32> -> vector<24x32xf32>
      %164 = arith.addf %127, %163 : vector<24x32xf32>
      %c504 = arith.constant 504 : index
      %c0_68 = arith.constant 0 : index
      %165 = vector.load %arg3[%c504, %c0_68] : memref<560x64xf32, #tpu.memory_space<vmem>>, vector<1x32xf32>
      %166 = vector.broadcast %165 : vector<1x32xf32> to vector<24x32xf32>
      %167 = arith.addf %164, %166 : vector<24x32xf32>
      %168 = vector.extract_strided_slice %167 {offsets = [0, 0], sizes = [1, 32], strides = [1, 1]} : vector<24x32xf32> to vector<1x32xf32>
      %c512 = arith.constant 512 : index
      %c0_69 = arith.constant 0 : index
      %169 = vector.load %arg3[%c512, %c0_69] : memref<560x64xf32, #tpu.memory_space<vmem>>, vector<1x32xf32>
      %c520 = arith.constant 520 : index
      %c0_70 = arith.constant 0 : index
      %170 = vector.load %arg3[%c520, %c0_70] : memref<560x64xf32, #tpu.memory_space<vmem>>, vector<1x32xf32>
      %cst_71 = arith.constant dense<0.000000e+00> : vector<1xf32>
      %171 = vector.multi_reduction <add>, %168, %cst_71 [1] : vector<1x32xf32> to vector<1xf32>
      %172 = vector.shape_cast %171 : vector<1xf32> to vector<1x1xf32>
      %cst_72 = arith.constant 3.200000e+01 : f32
      %173 = vector.broadcast %cst_72 : f32 to vector<1x1xf32>
      %174 = arith.divf %172, %173 : vector<1x1xf32>
      %175 = vector.broadcast %174 : vector<1x1xf32> to vector<1x32xf32>
      %176 = arith.subf %168, %175 : vector<1x32xf32>
      %177 = arith.mulf %176, %176 : vector<1x32xf32>
      %cst_73 = arith.constant dense<0.000000e+00> : vector<1xf32>
      %178 = vector.multi_reduction <add>, %177, %cst_73 [1] : vector<1x32xf32> to vector<1xf32>
      %179 = vector.shape_cast %178 : vector<1xf32> to vector<1x1xf32>
      %cst_74 = arith.constant 3.200000e+01 : f32
      %180 = vector.broadcast %cst_74 : f32 to vector<1x1xf32>
      %181 = arith.divf %179, %180 : vector<1x1xf32>
      %cst_75 = arith.constant 9.99999974E-6 : f32
      %182 = vector.broadcast %cst_75 : f32 to vector<1x1xf32>
      %183 = arith.addf %181, %182 : vector<1x1xf32>
      %184 = math.rsqrt %183 : vector<1x1xf32>
      %185 = vector.broadcast %184 : vector<1x1xf32> to vector<1x32xf32>
      %186 = arith.mulf %176, %185 : vector<1x32xf32>
      %187 = arith.mulf %186, %169 : vector<1x32xf32>
      %188 = arith.addf %187, %170 : vector<1x32xf32>
      %c528 = arith.constant 528 : index
      %c0_76 = arith.constant 0 : index
      %189 = vector.load %arg3[%c528, %c0_76] : memref<560x64xf32, #tpu.memory_space<vmem>>, vector<32x32xf32>
      %cst_77 = arith.constant dense<0.000000e+00> : vector<1x32xf32>
      %190 = tpu.matmul %188, %189, %cst_77 {dimension_numbers = #tpu.dot_dimension_numbers<[1], [0], [0], [1], [0, 0, 1, 1], [], []>} : vector<1x32xf32>, vector<32x32xf32>, vector<1x32xf32> -> vector<1x32xf32>
      %c0_78 = arith.constant 0 : index
      %c0_79 = arith.constant 0 : index
      %c0_80 = arith.constant 0 : index
      %191 = vector.load %arg5[%c0_78, %c0_79, %c0_80] : memref<1x1x32xf32, #tpu.memory_space<vmem>>, vector<1x1x32xf32>
      %192 = vector.shape_cast %191 : vector<1x1x32xf32> to vector<1x32xf32>
      %193 = vector.shape_cast %190 : vector<1x32xf32> to vector<1x1x32xf32>
      tpu.vector_store %arg5[%c0_78, %c0_79, %c0_80], %193 {strides = array<i32>} : memref<1x1x32xf32, #tpu.memory_space<vmem>>, vector<1x1x32xf32>,
    } else {
    }
    %c1_i32 = arith.constant 1 : i32
    %3 = arith.cmpi eq, %arg0, %c1_i32 : i32
    %4 = arith.extui %3 : i1 to i32
    %c0_i32_1 = arith.constant 0 : i32
    %5 = arith.cmpi ne, %4, %c0_i32_1 : i32
    scf.if %5 {
      %c0 = arith.constant 0 : index
      %c0_2 = arith.constant 0 : index
      %6 = vector.load %arg2[%c0, %c0_2] : memref<8x1xi32, #tpu.memory_space<vmem>>, vector<8x1xi32>
      %7 = tpu.iota {dimensions = array<i32: 1>} : vector<8x64xi32>
      %8 = vector.broadcast %6 : vector<8x1xi32> to vector<8x64xi32>
      %9 = arith.cmpi eq, %7, %8 : vector<8x64xi32>
      %10 = arith.extui %9 : vector<8x64xi1> to vector<8x64xi32>
      %11 = arith.sitofp %10 : vector<8x64xi32> to vector<8x64xf32>
      %c8 = arith.constant 8 : index
      %c0_3 = arith.constant 0 : index
      %12 = vector.load %arg4[%c8, %c0_3] : memref<544x64xf32, #tpu.memory_space<vmem>>, vector<64x32xf32>
      %cst = arith.constant dense<0.000000e+00> : vector<8x32xf32>
      %13 = tpu.matmul %11, %12, %cst {dimension_numbers = #tpu.dot_dimension_numbers<[1], [0], [0], [1], [0, 0, 1, 1], [], []>} : vector<8x64xf32>, vector<64x32xf32>, vector<8x32xf32> -> vector<8x32xf32>
      %c0_4 = arith.constant 0 : index
      %c0_5 = arith.constant 0 : index
      %14 = vector.load %arg4[%c0_4, %c0_5] : memref<544x64xf32, #tpu.memory_space<vmem>>, vector<8x32xf32>
      %15 = arith.addf %13, %14 : vector<8x32xf32>
      %16 = tpu.iota {dimensions = array<i32: 0>} : vector<8x8xi32>
      %17 = tpu.iota {dimensions = array<i32: 1>} : vector<8x8xi32>
      %18 = arith.cmpi sle, %17, %16 : vector<8x8xi32>
      %cst_6 = arith.constant 0.000000e+00 : f32
      %cst_7 = arith.constant -1.000000e+09 : f32
      %19 = vector.broadcast %cst_6 : f32 to vector<8x8xf32>
      %20 = vector.broadcast %cst_7 : f32 to vector<8x8xf32>
      %21 = arith.select %18, %19, %20 : vector<8x8xi1>, vector<8x8xf32>
      %c72 = arith.constant 72 : index
      %c0_8 = arith.constant 0 : index
      %22 = vector.load %arg4[%c72, %c0_8] : memref<544x64xf32, #tpu.memory_space<vmem>>, vector<1x32xf32>
      %c80 = arith.constant 80 : index
      %c0_9 = arith.constant 0 : index
      %23 = vector.load %arg4[%c80, %c0_9] : memref<544x64xf32, #tpu.memory_space<vmem>>, vector<1x32xf32>
      %cst_10 = arith.constant dense<0.000000e+00> : vector<8xf32>
      %24 = vector.multi_reduction <add>, %15, %cst_10 [1] : vector<8x32xf32> to vector<8xf32>
      %25 = vector.shape_cast %24 : vector<8xf32> to vector<8x1xf32>
      %cst_11 = arith.constant 3.200000e+01 : f32
      %26 = vector.broadcast %cst_11 : f32 to vector<8x1xf32>
      %27 = arith.divf %25, %26 : vector<8x1xf32>
      %28 = vector.broadcast %27 : vector<8x1xf32> to vector<8x32xf32>
      %29 = arith.subf %15, %28 : vector<8x32xf32>
      %30 = arith.mulf %29, %29 : vector<8x32xf32>
      %cst_12 = arith.constant dense<0.000000e+00> : vector<8xf32>
      %31 = vector.multi_reduction <add>, %30, %cst_12 [1] : vector<8x32xf32> to vector<8xf32>
      %32 = vector.shape_cast %31 : vector<8xf32> to vector<8x1xf32>
      %cst_13 = arith.constant 3.200000e+01 : f32
      %33 = vector.broadcast %cst_13 : f32 to vector<8x1xf32>
      %34 = arith.divf %32, %33 : vector<8x1xf32>
      %cst_14 = arith.constant 9.99999974E-6 : f32
      %35 = vector.broadcast %cst_14 : f32 to vector<8x1xf32>
      %36 = arith.addf %34, %35 : vector<8x1xf32>
      %37 = math.rsqrt %36 : vector<8x1xf32>
      %38 = vector.broadcast %37 : vector<8x1xf32> to vector<8x32xf32>
      %39 = arith.mulf %29, %38 : vector<8x32xf32>
      %40 = vector.broadcast %22 : vector<1x32xf32> to vector<8x32xf32>
      %41 = arith.mulf %39, %40 : vector<8x32xf32>
      %42 = vector.broadcast %23 : vector<1x32xf32> to vector<8x32xf32>
      %43 = arith.addf %41, %42 : vector<8x32xf32>
      %cst_15 = arith.constant 0.000000e+00 : f32
      %44 = vector.broadcast %cst_15 : f32 to vector<8x32xf32>
      %c88 = arith.constant 88 : index
      %c0_16 = arith.constant 0 : index
      %45 = vector.load %arg4[%c88, %c0_16] : memref<544x64xf32, #tpu.memory_space<vmem>>, vector<32x16xf32>
      %cst_17 = arith.constant dense<0.000000e+00> : vector<8x16xf32>
      %46 = tpu.matmul %43, %45, %cst_17 {dimension_numbers = #tpu.dot_dimension_numbers<[1], [0], [0], [1], [0, 0, 1, 1], [], []>} : vector<8x32xf32>, vector<32x16xf32>, vector<8x16xf32> -> vector<8x16xf32>
      %c184 = arith.constant 184 : index
      %c0_18 = arith.constant 0 : index
      %47 = vector.load %arg4[%c184, %c0_18] : memref<544x64xf32, #tpu.memory_space<vmem>>, vector<1x16xf32>
      %48 = vector.broadcast %47 : vector<1x16xf32> to vector<8x16xf32>
      %49 = arith.addf %46, %48 : vector<8x16xf32>
      %c120 = arith.constant 120 : index
      %c0_19 = arith.constant 0 : index
      %50 = vector.load %arg4[%c120, %c0_19] : memref<544x64xf32, #tpu.memory_space<vmem>>, vector<32x16xf32>
      %cst_20 = arith.constant dense<0.000000e+00> : vector<8x16xf32>
      %51 = tpu.matmul %43, %50, %cst_20 {dimension_numbers = #tpu.dot_dimension_numbers<[1], [0], [0], [1], [0, 0, 1, 1], [], []>} : vector<8x32xf32>, vector<32x16xf32>, vector<8x16xf32> -> vector<8x16xf32>
      %c192 = arith.constant 192 : index
      %c0_21 = arith.constant 0 : index
      %52 = vector.load %arg4[%c192, %c0_21] : memref<544x64xf32, #tpu.memory_space<vmem>>, vector<1x16xf32>
      %53 = vector.broadcast %52 : vector<1x16xf32> to vector<8x16xf32>
      %54 = arith.addf %51, %53 : vector<8x16xf32>
      %c152 = arith.constant 152 : index
      %c0_22 = arith.constant 0 : index
      %55 = vector.load %arg4[%c152, %c0_22] : memref<544x64xf32, #tpu.memory_space<vmem>>, vector<32x16xf32>
      %cst_23 = arith.constant dense<0.000000e+00> : vector<8x16xf32>
      %56 = tpu.matmul %43, %55, %cst_23 {dimension_numbers = #tpu.dot_dimension_numbers<[1], [0], [0], [1], [0, 0, 1, 1], [], []>} : vector<8x32xf32>, vector<32x16xf32>, vector<8x16xf32> -> vector<8x16xf32>
      %c200 = arith.constant 200 : index
      %c0_24 = arith.constant 0 : index
      %57 = vector.load %arg4[%c200, %c0_24] : memref<544x64xf32, #tpu.memory_space<vmem>>, vector<1x16xf32>
      %58 = vector.broadcast %57 : vector<1x16xf32> to vector<8x16xf32>
      %59 = arith.addf %56, %58 : vector<8x16xf32>
      %cst_25 = arith.constant dense<0.000000e+00> : vector<8x8xf32>
      %60 = tpu.matmul %49, %54, %cst_25 {dimension_numbers = #tpu.dot_dimension_numbers<[1], [1], [0], [0], [0, 0, 1, 0], [], []>} : vector<8x16xf32>, vector<8x16xf32>, vector<8x8xf32> -> vector<8x8xf32>
      %61 = arith.addf %60, %21 : vector<8x8xf32>
      %cst_26 = arith.constant dense<0xFF800000> : vector<8xf32>
      %62 = vector.multi_reduction <maximumf>, %61, %cst_26 [1] : vector<8x8xf32> to vector<8xf32>
      %63 = vector.shape_cast %62 : vector<8xf32> to vector<8x1xf32>
      %64 = vector.broadcast %63 : vector<8x1xf32> to vector<8x8xf32>
      %65 = arith.subf %61, %64 : vector<8x8xf32>
      %66 = math.exp %65 : vector<8x8xf32>
      %cst_27 = arith.constant dense<0.000000e+00> : vector<8xf32>
      %67 = vector.multi_reduction <add>, %66, %cst_27 [1] : vector<8x8xf32> to vector<8xf32>
      %68 = vector.shape_cast %67 : vector<8xf32> to vector<8x1xf32>
      %69 = tpu.reciprocal %68 {approx = true} : vector<8x1xf32> -> vector<8x1xf32>
      %70 = vector.broadcast %69 : vector<8x1xf32> to vector<8x8xf32>
      %71 = arith.mulf %66, %70 : vector<8x8xf32>
      %cst_28 = arith.constant dense<0.000000e+00> : vector<8x16xf32>
      %72 = tpu.matmul %71, %59, %cst_28 {dimension_numbers = #tpu.dot_dimension_numbers<[1], [0], [0], [1], [0, 0, 1, 1], [], []>} : vector<8x8xf32>, vector<8x16xf32>, vector<8x16xf32> -> vector<8x16xf32>
      %c208 = arith.constant 208 : index
      %c0_29 = arith.constant 0 : index
      %73 = vector.load %arg4[%c208, %c0_29] : memref<544x64xf32, #tpu.memory_space<vmem>>, vector<16x32xf32>
      %cst_30 = arith.constant dense<0.000000e+00> : vector<8x32xf32>
      %74 = tpu.matmul %72, %73, %cst_30 {dimension_numbers = #tpu.dot_dimension_numbers<[1], [0], [0], [1], [0, 0, 1, 1], [], []>} : vector<8x16xf32>, vector<16x32xf32>, vector<8x32xf32> -> vector<8x32xf32>
      %75 = arith.addf %44, %74 : vector<8x32xf32>
      %c224 = arith.constant 224 : index
      %c0_31 = arith.constant 0 : index
      %76 = vector.load %arg4[%c224, %c0_31] : memref<544x64xf32, #tpu.memory_space<vmem>>, vector<32x16xf32>
      %cst_32 = arith.constant dense<0.000000e+00> : vector<8x16xf32>
      %77 = tpu.matmul %43, %76, %cst_32 {dimension_numbers = #tpu.dot_dimension_numbers<[1], [0], [0], [1], [0, 0, 1, 1], [], []>} : vector<8x32xf32>, vector<32x16xf32>, vector<8x16xf32> -> vector<8x16xf32>
      %c320 = arith.constant 320 : index
      %c0_33 = arith.constant 0 : index
      %78 = vector.load %arg4[%c320, %c0_33] : memref<544x64xf32, #tpu.memory_space<vmem>>, vector<1x16xf32>
      %79 = vector.broadcast %78 : vector<1x16xf32> to vector<8x16xf32>
      %80 = arith.addf %77, %79 : vector<8x16xf32>
      %c256 = arith.constant 256 : index
      %c0_34 = arith.constant 0 : index
      %81 = vector.load %arg4[%c256, %c0_34] : memref<544x64xf32, #tpu.memory_space<vmem>>, vector<32x16xf32>
      %cst_35 = arith.constant dense<0.000000e+00> : vector<8x16xf32>
      %82 = tpu.matmul %43, %81, %cst_35 {dimension_numbers = #tpu.dot_dimension_numbers<[1], [0], [0], [1], [0, 0, 1, 1], [], []>} : vector<8x32xf32>, vector<32x16xf32>, vector<8x16xf32> -> vector<8x16xf32>
      %c328 = arith.constant 328 : index
      %c0_36 = arith.constant 0 : index
      %83 = vector.load %arg4[%c328, %c0_36] : memref<544x64xf32, #tpu.memory_space<vmem>>, vector<1x16xf32>
      %84 = vector.broadcast %83 : vector<1x16xf32> to vector<8x16xf32>
      %85 = arith.addf %82, %84 : vector<8x16xf32>
      %c288 = arith.constant 288 : index
      %c0_37 = arith.constant 0 : index
      %86 = vector.load %arg4[%c288, %c0_37] : memref<544x64xf32, #tpu.memory_space<vmem>>, vector<32x16xf32>
      %cst_38 = arith.constant dense<0.000000e+00> : vector<8x16xf32>
      %87 = tpu.matmul %43, %86, %cst_38 {dimension_numbers = #tpu.dot_dimension_numbers<[1], [0], [0], [1], [0, 0, 1, 1], [], []>} : vector<8x32xf32>, vector<32x16xf32>, vector<8x16xf32> -> vector<8x16xf32>
      %c336 = arith.constant 336 : index
      %c0_39 = arith.constant 0 : index
      %88 = vector.load %arg4[%c336, %c0_39] : memref<544x64xf32, #tpu.memory_space<vmem>>, vector<1x16xf32>
      %89 = vector.broadcast %88 : vector<1x16xf32> to vector<8x16xf32>
      %90 = arith.addf %87, %89 : vector<8x16xf32>
      %cst_40 = arith.constant dense<0.000000e+00> : vector<8x8xf32>
      %91 = tpu.matmul %80, %85, %cst_40 {dimension_numbers = #tpu.dot_dimension_numbers<[1], [1], [0], [0], [0, 0, 1, 0], [], []>} : vector<8x16xf32>, vector<8x16xf32>, vector<8x8xf32> -> vector<8x8xf32>
      %92 = arith.addf %91, %21 : vector<8x8xf32>
      %cst_41 = arith.constant dense<0xFF800000> : vector<8xf32>
      %93 = vector.multi_reduction <maximumf>, %92, %cst_41 [1] : vector<8x8xf32> to vector<8xf32>
      %94 = vector.shape_cast %93 : vector<8xf32> to vector<8x1xf32>
      %95 = vector.broadcast %94 : vector<8x1xf32> to vector<8x8xf32>
      %96 = arith.subf %92, %95 : vector<8x8xf32>
      %97 = math.exp %96 : vector<8x8xf32>
      %cst_42 = arith.constant dense<0.000000e+00> : vector<8xf32>
      %98 = vector.multi_reduction <add>, %97, %cst_42 [1] : vector<8x8xf32> to vector<8xf32>
      %99 = vector.shape_cast %98 : vector<8xf32> to vector<8x1xf32>
      %100 = tpu.reciprocal %99 {approx = true} : vector<8x1xf32> -> vector<8x1xf32>
      %101 = vector.broadcast %100 : vector<8x1xf32> to vector<8x8xf32>
      %102 = arith.mulf %97, %101 : vector<8x8xf32>
      %cst_43 = arith.constant dense<0.000000e+00> : vector<8x16xf32>
      %103 = tpu.matmul %102, %90, %cst_43 {dimension_numbers = #tpu.dot_dimension_numbers<[1], [0], [0], [1], [0, 0, 1, 1], [], []>} : vector<8x8xf32>, vector<8x16xf32>, vector<8x16xf32> -> vector<8x16xf32>
      %c344 = arith.constant 344 : index
      %c0_44 = arith.constant 0 : index
      %104 = vector.load %arg4[%c344, %c0_44] : memref<544x64xf32, #tpu.memory_space<vmem>>, vector<16x32xf32>
      %cst_45 = arith.constant dense<0.000000e+00> : vector<8x32xf32>
      %105 = tpu.matmul %103, %104, %cst_45 {dimension_numbers = #tpu.dot_dimension_numbers<[1], [0], [0], [1], [0, 0, 1, 1], [], []>} : vector<8x16xf32>, vector<16x32xf32>, vector<8x32xf32> -> vector<8x32xf32>
      %106 = arith.addf %75, %105 : vector<8x32xf32>
      %107 = arith.addf %15, %106 : vector<8x32xf32>
      %c360 = arith.constant 360 : index
      %c0_46 = arith.constant 0 : index
      %108 = vector.load %arg4[%c360, %c0_46] : memref<544x64xf32, #tpu.memory_space<vmem>>, vector<1x32xf32>
      %109 = vector.broadcast %108 : vector<1x32xf32> to vector<8x32xf32>
      %110 = arith.addf %107, %109 : vector<8x32xf32>
      %c368 = arith.constant 368 : index
      %c0_47 = arith.constant 0 : index
      %111 = vector.load %arg4[%c368, %c0_47] : memref<544x64xf32, #tpu.memory_space<vmem>>, vector<1x32xf32>
      %c376 = arith.constant 376 : index
      %c0_48 = arith.constant 0 : index
      %112 = vector.load %arg4[%c376, %c0_48] : memref<544x64xf32, #tpu.memory_space<vmem>>, vector<1x32xf32>
      %cst_49 = arith.constant dense<0.000000e+00> : vector<8xf32>
      %113 = vector.multi_reduction <add>, %110, %cst_49 [1] : vector<8x32xf32> to vector<8xf32>
      %114 = vector.shape_cast %113 : vector<8xf32> to vector<8x1xf32>
      %cst_50 = arith.constant 3.200000e+01 : f32
      %115 = vector.broadcast %cst_50 : f32 to vector<8x1xf32>
      %116 = arith.divf %114, %115 : vector<8x1xf32>
      %117 = vector.broadcast %116 : vector<8x1xf32> to vector<8x32xf32>
      %118 = arith.subf %110, %117 : vector<8x32xf32>
      %119 = arith.mulf %118, %118 : vector<8x32xf32>
      %cst_51 = arith.constant dense<0.000000e+00> : vector<8xf32>
      %120 = vector.multi_reduction <add>, %119, %cst_51 [1] : vector<8x32xf32> to vector<8xf32>
      %121 = vector.shape_cast %120 : vector<8xf32> to vector<8x1xf32>
      %cst_52 = arith.constant 3.200000e+01 : f32
      %122 = vector.broadcast %cst_52 : f32 to vector<8x1xf32>
      %123 = arith.divf %121, %122 : vector<8x1xf32>
      %cst_53 = arith.constant 9.99999974E-6 : f32
      %124 = vector.broadcast %cst_53 : f32 to vector<8x1xf32>
      %125 = arith.addf %123, %124 : vector<8x1xf32>
      %126 = math.rsqrt %125 : vector<8x1xf32>
      %127 = vector.broadcast %126 : vector<8x1xf32> to vector<8x32xf32>
      %128 = arith.mulf %118, %127 : vector<8x32xf32>
      %129 = vector.broadcast %111 : vector<1x32xf32> to vector<8x32xf32>
      %130 = arith.mulf %128, %129 : vector<8x32xf32>
      %131 = vector.broadcast %112 : vector<1x32xf32> to vector<8x32xf32>
      %132 = arith.addf %130, %131 : vector<8x32xf32>
      %c384 = arith.constant 384 : index
      %c0_54 = arith.constant 0 : index
      %133 = vector.load %arg4[%c384, %c0_54] : memref<544x64xf32, #tpu.memory_space<vmem>>, vector<32x64xf32>
      %cst_55 = arith.constant dense<0.000000e+00> : vector<8x64xf32>
      %134 = tpu.matmul %132, %133, %cst_55 {dimension_numbers = #tpu.dot_dimension_numbers<[1], [0], [0], [1], [0, 0, 1, 1], [], []>} : vector<8x32xf32>, vector<32x64xf32>, vector<8x64xf32> -> vector<8x64xf32>
      %c416 = arith.constant 416 : index
      %c0_56 = arith.constant 0 : index
      %135 = vector.load %arg4[%c416, %c0_56] : memref<544x64xf32, #tpu.memory_space<vmem>>, vector<1x64xf32>
      %136 = vector.broadcast %135 : vector<1x64xf32> to vector<8x64xf32>
      %137 = arith.addf %134, %136 : vector<8x64xf32>
      %cst_57 = arith.constant -1.702000e+00 : f32
      %138 = vector.broadcast %cst_57 : f32 to vector<8x64xf32>
      %139 = arith.mulf %138, %137 : vector<8x64xf32>
      %140 = math.exp %139 : vector<8x64xf32>
      %cst_58 = arith.constant 1.000000e+00 : f32
      %141 = vector.broadcast %cst_58 : f32 to vector<8x64xf32>
      %142 = arith.addf %141, %140 : vector<8x64xf32>
      %143 = tpu.reciprocal %142 {approx = true} : vector<8x64xf32> -> vector<8x64xf32>
      %144 = arith.mulf %137, %143 : vector<8x64xf32>
      %c424 = arith.constant 424 : index
      %c0_59 = arith.constant 0 : index
      %145 = vector.load %arg4[%c424, %c0_59] : memref<544x64xf32, #tpu.memory_space<vmem>>, vector<64x32xf32>
      %cst_60 = arith.constant dense<0.000000e+00> : vector<8x32xf32>
      %146 = tpu.matmul %144, %145, %cst_60 {dimension_numbers = #tpu.dot_dimension_numbers<[1], [0], [0], [1], [0, 0, 1, 1], [], []>} : vector<8x64xf32>, vector<64x32xf32>, vector<8x32xf32> -> vector<8x32xf32>
      %147 = arith.addf %110, %146 : vector<8x32xf32>
      %c488 = arith.constant 488 : index
      %c0_61 = arith.constant 0 : index
      %148 = vector.load %arg4[%c488, %c0_61] : memref<544x64xf32, #tpu.memory_space<vmem>>, vector<1x32xf32>
      %149 = vector.broadcast %148 : vector<1x32xf32> to vector<8x32xf32>
      %150 = arith.addf %147, %149 : vector<8x32xf32>
      %c496 = arith.constant 496 : index
      %c0_62 = arith.constant 0 : index
      %151 = vector.load %arg4[%c496, %c0_62] : memref<544x64xf32, #tpu.memory_space<vmem>>, vector<1x32xf32>
      %c504 = arith.constant 504 : index
      %c0_63 = arith.constant 0 : index
      %152 = vector.load %arg4[%c504, %c0_63] : memref<544x64xf32, #tpu.memory_space<vmem>>, vector<1x32xf32>
      %cst_64 = arith.constant dense<0.000000e+00> : vector<8xf32>
      %153 = vector.multi_reduction <add>, %150, %cst_64 [1] : vector<8x32xf32> to vector<8xf32>
      %154 = vector.shape_cast %153 : vector<8xf32> to vector<8x1xf32>
      %cst_65 = arith.constant 3.200000e+01 : f32
      %155 = vector.broadcast %cst_65 : f32 to vector<8x1xf32>
      %156 = arith.divf %154, %155 : vector<8x1xf32>
      %157 = vector.broadcast %156 : vector<8x1xf32> to vector<8x32xf32>
      %158 = arith.subf %150, %157 : vector<8x32xf32>
      %159 = arith.mulf %158, %158 : vector<8x32xf32>
      %cst_66 = arith.constant dense<0.000000e+00> : vector<8xf32>
      %160 = vector.multi_reduction <add>, %159, %cst_66 [1] : vector<8x32xf32> to vector<8xf32>
      %161 = vector.shape_cast %160 : vector<8xf32> to vector<8x1xf32>
      %cst_67 = arith.constant 3.200000e+01 : f32
      %162 = vector.broadcast %cst_67 : f32 to vector<8x1xf32>
      %163 = arith.divf %161, %162 : vector<8x1xf32>
      %cst_68 = arith.constant 9.99999974E-6 : f32
      %164 = vector.broadcast %cst_68 : f32 to vector<8x1xf32>
      %165 = arith.addf %163, %164 : vector<8x1xf32>
      %166 = math.rsqrt %165 : vector<8x1xf32>
      %167 = vector.broadcast %166 : vector<8x1xf32> to vector<8x32xf32>
      %168 = arith.mulf %158, %167 : vector<8x32xf32>
      %169 = vector.broadcast %151 : vector<1x32xf32> to vector<8x32xf32>
      %170 = arith.mulf %168, %169 : vector<8x32xf32>
      %171 = vector.broadcast %152 : vector<1x32xf32> to vector<8x32xf32>
      %172 = arith.addf %170, %171 : vector<8x32xf32>
      %173 = tpu.iota {dimensions = array<i32: 0>} : vector<8x1xi32>
      %174 = vector.shape_cast %6 : vector<8x1xi32> to vector<1x8x1xi32>
      %cst_69 = arith.constant dense<-2147483648> : vector<1xi32>
      %175 = vector.multi_reduction <maxsi>, %174, %cst_69 [1, 2] : vector<1x8x1xi32> to vector<1xi32>
      %176 = vector.shape_cast %175 : vector<1xi32> to vector<1x1x1xi32>
      %177 = vector.extract %176[0, 0, 0] : i32 from vector<1x1x1xi32>
      %178 = vector.broadcast %177 : i32 to vector<1x1xi32>
      %179 = vector.broadcast %178 : vector<1x1xi32> to vector<8x1xi32>
      %180 = arith.cmpi eq, %6, %179 : vector<8x1xi32>
      %c8_i32 = arith.constant 8 : i32
      %181 = vector.broadcast %c8_i32 : i32 to vector<8x1xi32>
      %182 = arith.select %180, %173, %181 : vector<8x1xi1>, vector<8x1xi32>
      %183 = vector.shape_cast %182 : vector<8x1xi32> to vector<1x8x1xi32>
      %cst_70 = arith.constant dense<2147483647> : vector<1xi32>
      %184 = vector.multi_reduction <minsi>, %183, %cst_70 [1, 2] : vector<1x8x1xi32> to vector<1xi32>
      %185 = vector.shape_cast %184 : vector<1xi32> to vector<1x1x1xi32>
      %186 = vector.extract %185[0, 0, 0] : i32 from vector<1x1x1xi32>
      %187 = vector.broadcast %186 : i32 to vector<1x1xi32>
      %188 = vector.broadcast %187 : vector<1x1xi32> to vector<8x1xi32>
      %189 = arith.cmpi eq, %173, %188 : vector<8x1xi32>
      %190 = arith.extui %189 : vector<8x1xi1> to vector<8x1xi32>
      %191 = arith.sitofp %190 : vector<8x1xi32> to vector<8x1xf32>
      %192 = vector.broadcast %191 : vector<8x1xf32> to vector<8x32xf32>
      %193 = arith.mulf %172, %192 : vector<8x32xf32>
      %cst_71 = arith.constant dense<0.000000e+00> : vector<32xf32>
      %194 = vector.multi_reduction <add>, %193, %cst_71 [0] : vector<8x32xf32> to vector<32xf32>
      %195 = vector.shape_cast %194 : vector<32xf32> to vector<1x32xf32>
      %c512 = arith.constant 512 : index
      %c0_72 = arith.constant 0 : index
      %196 = vector.load %arg4[%c512, %c0_72] : memref<544x64xf32, #tpu.memory_space<vmem>>, vector<32x32xf32>
      %cst_73 = arith.constant dense<0.000000e+00> : vector<1x32xf32>
      %197 = tpu.matmul %195, %196, %cst_73 {dimension_numbers = #tpu.dot_dimension_numbers<[1], [0], [0], [1], [0, 0, 1, 1], [], []>} : vector<1x32xf32>, vector<32x32xf32>, vector<1x32xf32> -> vector<1x32xf32>
      %c0_74 = arith.constant 0 : index
      %c0_75 = arith.constant 0 : index
      %c0_76 = arith.constant 0 : index
      %198 = vector.load %arg5[%c0_74, %c0_75, %c0_76] : memref<1x1x32xf32, #tpu.memory_space<vmem>>, vector<1x1x32xf32>
      %199 = vector.shape_cast %198 : vector<1x1x32xf32> to vector<1x32xf32>
      %200 = vector.shape_cast %197 : vector<1x32xf32> to vector<1x1x32xf32>
      tpu.vector_store %arg5[%c0_74, %c0_75, %c0_76], %200 {strides = array<i32>} : memref<1x1x32xf32, #tpu.memory_space<vmem>>, vector<1x1x32xf32>,
    } else {
    }
    return
  }
  func.func @transform_0(%arg0: i32) -> (i32, i32) {
    %c0_i32 = arith.constant 0 : i32
    %c0_i32_0 = arith.constant 0 : i32
    %c0_i32_1 = arith.constant 0 : i32
    return %c0_i32, %c0_i32_0 : i32, i32
  }
  func.func @transform_1(%arg0: i32) -> (i32, i32) {
    %c0_i32 = arith.constant 0 : i32
    %c0_i32_0 = arith.constant 0 : i32
    %c0_i32_1 = arith.constant 0 : i32
    return %c0_i32, %c0_i32_0 : i32, i32
  }
  func.func @transform_2(%arg0: i32) -> (i32, i32) {
    %c0_i32 = arith.constant 0 : i32
    %c0_i32_0 = arith.constant 0 : i32
    %c0_i32_1 = arith.constant 0 : i32
    return %c0_i32, %c0_i32_0 : i32, i32
  }
  func.func @transform_3(%arg0: i32) -> (i32, i32) {
    %c0_i32 = arith.constant 0 : i32
    %c0_i32_0 = arith.constant 0 : i32
    %c0_i32_1 = arith.constant 0 : i32
    return %c0_i32, %c0_i32_0 : i32, i32
  }
  func.func @transform_4(%arg0: i32) -> (i32, i32, i32) {
    %c0_i32 = arith.constant 0 : i32
    %c0_i32_0 = arith.constant 0 : i32
    %c0_i32_1 = arith.constant 0 : i32
    return %arg0, %c0_i32, %c0_i32_0 : i32, i32, i32
  }
}

</mosaic_0001>

<llo_original>
// kernel: forward.1
$region0: #{forward.1}
  #allocation0 [shape = 'u32[]', space=smem, size = 0x4, offset = 0x4, fixed_abs, tag = 'smem constant byte address 0x4 - core index']
  #allocation1 [shape = 'u32[144,128]{1,0:T(1,128)}', space=vmem, size = 0x12000, scoped, tag = 'internal scratch']
  %s0 = inlined_call_operand.vmem [shape: f32[24,48], index: 0, kind: input, shape index: {}]
  %s1 = inlined_call_operand.vmem [shape: s32[8,1], index: 1, kind: input, shape index: {}]
  %s2 = inlined_call_operand.vmem [shape: f32[560,64], index: 2, kind: input, shape index: {}]
  %s3 = inlined_call_operand.vmem [shape: f32[544,64], index: 3, kind: input, shape index: {}]
  %s4 = inlined_call_operand.vmem [shape: f32[2,1,32], index: 4, kind: output, shape index: {}]
  %s5 = sld [smem:[#allocation0]]
  $region57: #{forward.1} parent=0
    _
  %s7 = ssub.s32 1, %s5
  %s8 = scalar_select 0, %s7, %s5
  loop: start=0, step=1, limit=4
  $region2: #{forward.1} parent=0 // loop_pre_header
    _
  $region3: #{forward.1} parent=0 // loop_header
    %s10 = sphi 0, %s14
    %p11 = scmp.ge.s32.totalorder %s10, 4
    %s18 = sphi 0, %s18
    %s20 = sphi 0, %s18
    %s21 = sphi 0, %s20
    %s35 = sphi 0, %s21
    %s39 = sphi 0, %s39
    %s41 = sphi 0, %s39
    %s42 = sphi 0, %s41
    %s56 = sphi 0, %s42
    %s60 = sphi 0, %s60
    %s62 = sphi 0, %s60
    %s63 = sphi 0, %s62
    %s77 = sphi 0, %s63
    %s81 = sphi 0, %s81
    %s83 = sphi 0, %s81
    %s84 = sphi 0, %s83
    %s98 = sphi 0, %s84
    %s104 = sphi 0, %s106
    %s107 = sphi 0, %s104
    %s108 = sphi 0, %s107
    %s124 = sphi 0, %s108
  $region4: #{forward.1} parent=0 // loop_header_branch
    %13 = sbr.rel (%p11) target = $region8
  $region5: #{forward.1} parent=0 // loop_body
    %s15 = ssub.s32 %s10, 1
    %s16 = ssub.s32 %s10, 2
    %s17 = sadd.s32 %s10, 1
    %s19 = sadd.s32 %s18, 1
    %p22 = scmp.eq.s32.totalorder %s10, 1
    %p23 = scmp.ne.s32.totalorder %s18, %s20
    %p24 = scmp.eq.s32.totalorder %s10, 0
    %p25 = por %p23, %p24
    %p26 = scmp.ne.s32.totalorder %s18, %s20
    %p27 = scmp.eq.s32.totalorder %s15, 1
    %p28 = por %p26, %p27
    %p29 = scmp.ne.s32.totalorder %s20, %s21
    %p30 = scmp.eq.s32.totalorder %s15, 0
    %p31 = por %p29, %p30
    %p32 = scmp.ne.s32.totalorder %s20, %s21
    %p33 = scmp.eq.s32.totalorder %s16, 1
    %p34 = por %p32, %p33
    %p36 = scmp.ne.s32.totalorder %s21, %s35
    %p37 = scmp.eq.s32.totalorder %s16, 0
    %p38 = por %p36, %p37
    %s40 = sadd.s32 %s39, 1
    %p43 = scmp.eq.s32.totalorder %s10, 1
    %p44 = scmp.ne.s32.totalorder %s39, %s41
    %p45 = scmp.eq.s32.totalorder %s10, 0
    %p46 = por %p44, %p45
    %p47 = scmp.ne.s32.totalorder %s39, %s41
    %p48 = scmp.eq.s32.totalorder %s15, 1
    %p49 = por %p47, %p48
    %p50 = scmp.ne.s32.totalorder %s41, %s42
    %p51 = scmp.eq.s32.totalorder %s15, 0
    %p52 = por %p50, %p51
    %p53 = scmp.ne.s32.totalorder %s41, %s42
    %p54 = scmp.eq.s32.totalorder %s16, 1
    %p55 = por %p53, %p54
    %p57 = scmp.ne.s32.totalorder %s42, %s56
    %p58 = scmp.eq.s32.totalorder %s16, 0
    %p59 = por %p57, %p58
    %s61 = sadd.s32 %s60, 1
    %p64 = scmp.eq.s32.totalorder %s10, 1
    %p65 = scmp.ne.s32.totalorder %s60, %s62
    %p66 = scmp.eq.s32.totalorder %s10, 0
    %p67 = por %p65, %p66
    %p68 = scmp.ne.s32.totalorder %s60, %s62
    %p69 = scmp.eq.s32.totalorder %s15, 1
    %p70 = por %p68, %p69
    %p71 = scmp.ne.s32.totalorder %s62, %s63
    %p72 = scmp.eq.s32.totalorder %s15, 0
    %p73 = por %p71, %p72
    %p74 = scmp.ne.s32.totalorder %s62, %s63
    %p75 = scmp.eq.s32.totalorder %s16, 1
    %p76 = por %p74, %p75
    %p78 = scmp.ne.s32.totalorder %s63, %s77
    %p79 = scmp.eq.s32.totalorder %s16, 0
    %p80 = por %p78, %p79
    %s82 = sadd.s32 %s81, 1
    %p85 = scmp.eq.s32.totalorder %s10, 1
    %p86 = scmp.ne.s32.totalorder %s81, %s83
    %p87 = scmp.eq.s32.totalorder %s10, 0
    %p88 = por %p86, %p87
    %p89 = scmp.ne.s32.totalorder %s81, %s83
    %p90 = scmp.eq.s32.totalorder %s15, 1
    %p91 = por %p89, %p90
    %p92 = scmp.ne.s32.totalorder %s83, %s84
    %p93 = scmp.eq.s32.totalorder %s15, 0
    %p94 = por %p92, %p93
    %p95 = scmp.ne.s32.totalorder %s83, %s84
    %p96 = scmp.eq.s32.totalorder %s16, 1
    %p97 = por %p95, %p96
    %p99 = scmp.ne.s32.totalorder %s84, %s98
    %p100 = scmp.eq.s32.totalorder %s16, 0
    %p101 = por %p99, %p100
    %s102 = ssub.s32 %s10, %s17
    %p103 = scmp.eq.s32.totalorder %s102, 0
    %s105 = sadd.s32 %s104, 1
    %s106 = scalar_select %p103, %s104, %s105
    %p109 = pneg %p103
    %p110 = scmp.eq.s32.totalorder %s10, 1
    %p111 = por %p109, %p110
    %p112 = scmp.ne.s32.totalorder %s104, %s107
    %p113 = scmp.eq.s32.totalorder %s10, 0
    %p114 = por %p112, %p113
    %p115 = scmp.ne.s32.totalorder %s104, %s107
    %p116 = scmp.eq.s32.totalorder %s15, 1
    %p117 = por %p115, %p116
    %p118 = scmp.ne.s32.totalorder %s107, %s108
    %p119 = scmp.eq.s32.totalorder %s15, 0
    %p120 = por %p118, %p119
    %p121 = scmp.ne.s32.totalorder %s107, %s108
    %p122 = scmp.eq.s32.totalorder %s16, 1
    %p123 = por %p121, %p122
    %p125 = scmp.ne.s32.totalorder %s108, %s124
    %p126 = scmp.eq.s32.totalorder %s16, 0
    %p127 = por %p125, %p126
    %p128 = scmp.le.s32.totalorder 1, %s10
    %p129 = scmp.lt.s32.totalorder %s10, 3
    %p130 = pnand %p128, %p129
    %p131 = pneg %p130
    // Predicated region
    $region9: #{forward.1} parent=5 // pred_check
      _
    $region10: #{forward.1} parent=5 // pred_check_branch
      %133 = sbr.rel (%p130) target = $region12
    $region11: #{forward.1} parent=5 // pred_region
      %s134 = ssub.s32 %s10, 1
      // Predicated region
      $region13: #{forward.1} parent=11 // pred_check
        %p135 = pneg %p31
      $region14: #{forward.1} parent=11 // pred_check_branch
        %137 = sbr.rel (%p135) target = $region16
      $region15: #{forward.1} parent=11 // pred_region
        _
      $region16: #{forward.1} parent=11 // pred_fallthru
        _
      // Predicated region
      $region17: #{forward.1} parent=11 // pred_check
        %p138 = pneg %p52
      $region18: #{forward.1} parent=11 // pred_check_branch
        %140 = sbr.rel (%p138) target = $region20
      $region19: #{forward.1} parent=11 // pred_region
        _
      $region20: #{forward.1} parent=11 // pred_fallthru
        _
      // Predicated region
      $region21: #{forward.1} parent=11 // pred_check
        %p141 = pneg %p73
      $region22: #{forward.1} parent=11 // pred_check_branch
        %143 = sbr.rel (%p141) target = $region24
      $region23: #{forward.1} parent=11 // pred_region
        _
      $region24: #{forward.1} parent=11 // pred_fallthru
        _
      // Predicated region
      $region25: #{forward.1} parent=11 // pred_check
        %p144 = pneg %p94
      $region26: #{forward.1} parent=11 // pred_check_branch
        %146 = sbr.rel (%p144) target = $region28
      $region27: #{forward.1} parent=11 // pred_region
        _
      $region28: #{forward.1} parent=11 // pred_fallthru
        _
    $region12: #{forward.1} parent=5 // pred_fallthru
      _
    %p147 = scmp.lt.s32.totalorder %s10, 2
    // Predicated region
    $region29: #{forward.1} parent=5 // pred_check
      %p148 = pneg %p147
    $region30: #{forward.1} parent=5 // pred_check_branch
      %150 = sbr.rel (%p148) target = $region32
    $region31: #{forward.1} parent=5 // pred_region
      _
    $region32: #{forward.1} parent=5 // pred_fallthru
      _
    %p151 = scmp.le.s32.totalorder 1, %s10
    %p152 = scmp.lt.s32.totalorder %s10, 3
    %p153 = pnand %p151, %p152
    %p154 = pneg %p153
    // Predicated region
    $region33: #{forward.1} parent=5 // pred_check
      _
    $region34: #{forward.1} parent=5 // pred_check_branch
      %156 = sbr.rel (%p153) target = $region36
    $region35: #{forward.1} parent=5 // pred_region
      %s157 = ssub.s32 %s10, 1
      %p158 = pneg %p31
      %p159 = pneg %p28
      %p160 = pneg %p52
      %p161 = pneg %p49
      %p162 = pneg %p73
      %p163 = pneg %p70
      %p164 = pneg %p94
      %p165 = pneg %p91
      %p166 = pneg %p120
      %p167 = pneg %p117
      %p168 = scmp.lt.s32.totalorder %s15, 1
      %s169 = scalar_select %p168, %s15, 1
      %s170 = scalar_lea.vmem %s4, %s169
      %p171 = scmp.lt.s32.totalorder %s15, 1
      %s172 = scalar_select %p171, %s15, 1
      %s173 = scalar_lea.vmem %s4, %s172
      %p174 = scmp.eq.s32.totalorder %s15, 0
      // Predicated region
      $region37: #{forward.1} parent=35 // pred_check
        %p175 = pneg %p174
      $region38: #{forward.1} parent=35 // pred_check_branch
        %177 = sbr.rel (%p175) target = $region40
      $region39: #{forward.1} parent=35 // pred_region
        %v178 = vld [vmem:[%s0] sm:$0xff]
        %v179 = vld [vmem:[%s0 + $0x8] sm:$0xff]
        %v180 = vld [vmem:[%s0 + $0x10] sm:$0xff]
        %v181 = vld [vmem:[%s2 + $0x18] sm:$0xff]
        %v182 = vld [vmem:[%s2 + $0x20] sm:$0xff]
        %v183 = vld [vmem:[%s2 + $0x28] sm:$0xff]
        %v184 = vld [vmem:[%s2 + $0x30] sm:$0xff]
        %v185 = vld [vmem:[%s2 + $0x38] sm:$0xff]
        %v186 = vld [vmem:[%s2 + $0x40] sm:$0xff]
        %v187 = vld [vmem:[%s2] sm:$0xff]
        %v188 = vld [vmem:[%s2 + $0x8] sm:$0xff]
        %v189 = vld [vmem:[%s2 + $0x10] sm:$0xff]
        %vm190 = vcmask 392192
        %v192 = vsel %vm190, %v178, 0
        %v195 = vsel %vm190, %v179, 0
        %v198 = vsel %vm190, %v180, 0
        %200 = vmatprep.subr.mxu0 0.0
        %201 = vmatpush1.msra.mxu0 0.0
        %202 = vmatprep.subr.mxu0 0.0
        %203 = vmatpush1.msra.mxu0 0.0
        %204 = vmatprep.subr.mxu0 0.0
        %205 = vmatpush1.msra.mxu0 0.0
        %206 = vmatprep.subr.mxu0 0.0
        %207 = vmatpush1.msra.mxu0 0.0
        %208 = vmatprep.subr.mxu0 0.0
        %209 = vmatpush1.msra.mxu0 0.0
        %210 = vmatprep.subr.mxu0 0.0
        %211 = vmatpush1.msra.mxu0 0.0
        %212 = vmatprep.subr.mxu0 0.0
        %213 = vmatpush1.msra.mxu0 0.0
        %214 = vmatprep.subr.mxu0 0.0
        %215 = vmatpush1.msra.mxu0 0.0
        %216 = vmatprep.subr.mxu0 0.0
        %217 = vmatpush1.msra.mxu0 0.0
        %218 = vmatprep.subr.mxu0 0.0
        %219 = vmatpush1.msra.mxu0 0.0
        %220 = vmatprep.subr.mxu0 0.0
        %221 = vmatpush1.msra.mxu0 %v186
        %222 = vmatprep.subr.mxu0 0.0
        %223 = vmatpush1.msra.mxu0 %v185
        %224 = vmatprep.subr.mxu0 0.0
        %225 = vmatpush1.msra.mxu0 %v184
        %226 = vmatprep.subr.mxu0 0.0
        %227 = vmatpush1.msra.mxu0 %v183
        %228 = vmatprep.subr.mxu0 0.0
        %229 = vmatpush1.msra.mxu0 %v182
        %230 = vmatprep.subr.mxu0 0.0
        %231 = vmatpush1.msra.mxu0 %v181
        %232 = vmatprep.subr.mxu0 0.0
        %233 = vmatpush2.msra.mxu0 0.0
        %234 = vmatprep.subr.mxu0 0.0
        %235 = vmatpush2.msra.mxu0 0.0
        %236 = vmatprep.subr.mxu0 0.0
        %237 = vmatpush2.msra.mxu0 0.0
        %238 = vmatprep.subr.mxu0 0.0
        %239 = vmatpush2.msra.mxu0 0.0
        %240 = vmatprep.subr.mxu0 0.0
        %241 = vmatpush2.msra.mxu0 0.0
        %242 = vmatprep.subr.mxu0 0.0
        %243 = vmatpush2.msra.mxu0 0.0
        %244 = vmatprep.subr.mxu0 0.0
        %245 = vmatpush2.msra.mxu0 0.0
        %246 = vmatprep.subr.mxu0 0.0
        %247 = vmatpush2.msra.mxu0 0.0
        %248 = vmatprep.subr.mxu0 0.0
        %249 = vmatpush2.msra.mxu0 0.0
        %250 = vmatprep.subr.mxu0 0.0
        %251 = vmatpush2.msra.mxu0 0.0
        %252 = vmatprep.subr.mxu0 0.0
        %253 = vmatpush2.msra.mxu0 0.0
        %254 = vmatprep.subr.mxu0 0.0
        %255 = vmatpush2.msra.mxu0 0.0
        %256 = vmatprep.subr.mxu0 0.0
        %257 = vmatpush2.msra.mxu0 0.0
        %258 = vmatprep.subr.mxu0 0.0
        %259 = vmatpush2.msra.mxu0 0.0
        %260 = vmatprep.subr.mxu0 0.0
        %261 = vmatpush2.msra.mxu0 0.0
        %262 = vmatprep.subr.mxu0 0.0
        %263 = vmatpush2.msra.mxu0 0.0
        %264 = vmatprep.mubr.f32.mxu0 0.0
        %265 = vmatmul.mubr.f32.gmra.mxu0 %v192
        %v266 = vpop.f32.mrf.mxu0
        %v267 = vadd.f32 %v187, %v266
        %v268 = vpop.f32.mrf.mxu0
        %269 = vmatprep.mubr.f32.mxu0 0.0
        %270 = vmatmul.mubr.f32.gmra.mxu0 %v195
        %v271 = vpop.f32.mrf.mxu0
        %v272 = vadd.f32 %v188, %v271
        %v273 = vpop.f32.mrf.mxu0
        %274 = vmatprep.mubr.f32.mxu0 0.0
        %275 = vmatmul.mubr.f32.gmra.mxu0 %v198
        %v276 = vpop.f32.mrf.mxu0
        %v277 = vadd.f32 %v189, %v276
        %v278 = vpop.f32.mrf.mxu0
        %279 = vdwg.mxu0
        %v280 = vld [vmem:[%s2 + $0x48] sm:$0x1]
        %v281 = vld [vmem:[%s2 + $0x50] sm:$0x1]
        %vm282 = vcmask 261120
        %v283 = vsel %vm282, %v267, 0.0
        %284 = vadd.xlane.f32.xlu0 %v283
        %v285 = vpop.xlane.xlu0 %284
        %v286 = vsel %vm282, %v272, 0.0
        %287 = vadd.xlane.f32.xlu0 %v286
        %v288 = vpop.xlane.xlu0 %287
        %v289 = vsel %vm282, %v277, 0.0
        %290 = vadd.xlane.f32.xlu0 %v289
        %v291 = vpop.xlane.xlu0 %290
        %v292 = vrcp.pop 32.0
        %v293 = vmul.f32 %v285, %v292
        %v294 = vmul.f32 %v288, %v292
        %v295 = vmul.f32 %v291, %v292
        %v296 = vsub.f32 %v267, %v293
        %v297 = vsub.f32 %v272, %v294
        %v298 = vsub.f32 %v277, %v295
        %v299 = vmul.f32 %v296, %v296
        %v300 = vmul.f32 %v297, %v297
        %v301 = vmul.f32 %v298, %v298
        %v302 = vsel %vm282, %v299, 0.0
        %303 = vadd.xlane.f32.xlu0 %v302
        %v304 = vpop.xlane.xlu0 %303
        %v305 = vsel %vm282, %v300, 0.0
        %306 = vadd.xlane.f32.xlu0 %v305
        %v307 = vpop.xlane.xlu0 %306
        %v308 = vsel %vm282, %v301, 0.0
        %309 = vadd.xlane.f32.xlu0 %v308
        %v310 = vpop.xlane.xlu0 %309
        %v311 = vmul.f32 %v304, %v292
        %v312 = vmul.f32 %v307, %v292
        %v313 = vmul.f32 %v310, %v292
        %v314 = vadd.f32 %v311, 1e-05
        %v315 = vadd.f32 %v312, 1e-05
        %v316 = vadd.f32 %v313, 1e-05
        %v317 = vrsqrt.pop %v314
        %v318 = vrsqrt.pop %v315
        %v319 = vrsqrt.pop %v316
        %v320 = vmul.f32 %v296, %v317
        %v321 = vmul.f32 %v297, %v318
        %v322 = vmul.f32 %v298, %v319
        %v323 = vlaneseq
        %v324 = vshrl.u32 %v323, 7
        %v325 = vsub.s32 0, %v324
        %v326 = vrot.slane %v280, %v325
        %v327 = vmul.f32 %v320, %v326
        %v328 = vmul.f32 %v321, %v326
        %v329 = vmul.f32 %v322, %v326
        %v330 = vlaneseq
        %v331 = vshrl.u32 %v330, 7
        %v332 = vsub.s32 0, %v331
        %v333 = vrot.slane %v281, %v332
        %v334 = vadd.f32 %v327, %v333
        %v335 = vadd.f32 %v328, %v333
        %v336 = vadd.f32 %v329, %v333
        %v337 = vlaneseq
        %v338 = vand.u32 %v337, 127
        %vm339 = vcmp.lt.s32.totalorder %v338, 17
        %v340 = vsel %vm339, 0.0, -1e+09
        %v341 = vld [vmem:[%s2 + $0x58] sm:$0x1]
        %v342 = vld [vmem:[%s2 + $0x60] sm:$0x1]
        %v343 = vsel %vm282, %v334, 0.0
        %344 = vadd.xlane.f32.xlu0 %v343
        %v345 = vpop.xlane.xlu0 %344
        %v346 = vsel %vm282, %v335, 0.0
        %347 = vadd.xlane.f32.xlu0 %v346
        %v348 = vpop.xlane.xlu0 %347
        %v349 = vsel %vm282, %v336, 0.0
        %350 = vadd.xlane.f32.xlu0 %v349
        %v351 = vpop.xlane.xlu0 %350
        %v352 = vmul.f32 %v345, %v292
        %v353 = vmul.f32 %v348, %v292
        %v354 = vmul.f32 %v351, %v292
        %v355 = vsub.f32 %v334, %v352
        %v356 = vsub.f32 %v335, %v353
        %v357 = vsub.f32 %v336, %v354
        %v358 = vmul.f32 %v355, %v355
        %v359 = vmul.f32 %v356, %v356
        %v360 = vmul.f32 %v357, %v357
        %v361 = vsel %vm282, %v358, 0.0
        %362 = vadd.xlane.f32.xlu0 %v361
        %v363 = vpop.xlane.xlu0 %362
        %v364 = vsel %vm282, %v359, 0.0
        %365 = vadd.xlane.f32.xlu0 %v364
        %v366 = vpop.xlane.xlu0 %365
        %v367 = vsel %vm282, %v360, 0.0
        %368 = vadd.xlane.f32.xlu0 %v367
        %v369 = vpop.xlane.xlu0 %368
        %v370 = vmul.f32 %v363, %v292
        %v371 = vmul.f32 %v366, %v292
        %v372 = vmul.f32 %v369, %v292
        %v373 = vadd.f32 %v370, 1e-05
        %v374 = vadd.f32 %v371, 1e-05
        %v375 = vadd.f32 %v372, 1e-05
        %v376 = vrsqrt.pop %v373
        %v377 = vrsqrt.pop %v374
        %v378 = vrsqrt.pop %v375
        %v379 = vmul.f32 %v355, %v376
        %v380 = vmul.f32 %v356, %v377
        %v381 = vmul.f32 %v357, %v378
        %v382 = vlaneseq
        %v383 = vshrl.u32 %v382, 7
        %v384 = vsub.s32 0, %v383
        %v385 = vrot.slane %v341, %v384
        %v386 = vmul.f32 %v379, %v385
        %v387 = vmul.f32 %v380, %v385
        %v388 = vmul.f32 %v381, %v385
        %v389 = vlaneseq
        %v390 = vshrl.u32 %v389, 7
        %v391 = vsub.s32 0, %v390
        %v392 = vrot.slane %v342, %v391
        %v393 = vadd.f32 %v386, %v392
        %v394 = vadd.f32 %v387, %v392
        %v395 = vadd.f32 %v388, %v392
        %v396 = vld [vmem:[%s2 + $0x68] sm:$0xff]
        %v397 = vld [vmem:[%s2 + $0x70] sm:$0xff]
        %v398 = vld [vmem:[%s2 + $0x78] sm:$0xff]
        %v399 = vld [vmem:[%s2 + $0x80] sm:$0xff]
        %v400 = vld [vmem:[%s2 + $0xc8] sm:$0x1]
        %v401 = vlaneseq
        %v402 = vshrl.u32 %v401, 7
        %v403 = vsub.s32 0, %v402
        %v404 = vrot.slane %v400, %v403
        %v406 = vsel %vm282, %v393, 0
        %v409 = vsel %vm282, %v394, 0
        %v412 = vsel %vm282, %v395, 0
        %414 = vmatprep.subr.mxu0 0.0
        %415 = vmatpush1.msra.mxu0 0.0
        %416 = vmatprep.subr.mxu0 0.0
        %417 = vmatpush1.msra.mxu0 0.0
        %418 = vmatprep.subr.mxu0 0.0
        %419 = vmatpush1.msra.mxu0 0.0
        %420 = vmatprep.subr.mxu0 0.0
        %421 = vmatpush1.msra.mxu0 0.0
        %422 = vmatprep.subr.mxu0 0.0
        %423 = vmatpush1.msra.mxu0 0.0
        %424 = vmatprep.subr.mxu0 0.0
        %425 = vmatpush1.msra.mxu0 0.0
        %426 = vmatprep.subr.mxu0 0.0
        %427 = vmatpush1.msra.mxu0 0.0
        %428 = vmatprep.subr.mxu0 0.0
        %429 = vmatpush1.msra.mxu0 0.0
        %430 = vmatprep.subr.mxu0 0.0
        %431 = vmatpush1.msra.mxu0 0.0
        %432 = vmatprep.subr.mxu0 0.0
        %433 = vmatpush1.msra.mxu0 0.0
        %434 = vmatprep.subr.mxu0 0.0
        %435 = vmatpush1.msra.mxu0 0.0
        %436 = vmatprep.subr.mxu0 0.0
        %437 = vmatpush1.msra.mxu0 0.0
        %438 = vmatprep.subr.mxu0 0.0
        %439 = vmatpush1.msra.mxu0 %v399
        %440 = vmatprep.subr.mxu0 0.0
        %441 = vmatpush1.msra.mxu0 %v398
        %442 = vmatprep.subr.mxu0 0.0
        %443 = vmatpush1.msra.mxu0 %v397
        %444 = vmatprep.subr.mxu0 0.0
        %445 = vmatpush1.msra.mxu0 %v396
        %446 = vmatprep.subr.mxu0 0.0
        %447 = vmatpush2.msra.mxu0 0.0
        %448 = vmatprep.subr.mxu0 0.0
        %449 = vmatpush2.msra.mxu0 0.0
        %450 = vmatprep.subr.mxu0 0.0
        %451 = vmatpush2.msra.mxu0 0.0
        %452 = vmatprep.subr.mxu0 0.0
        %453 = vmatpush2.msra.mxu0 0.0
        %454 = vmatprep.subr.mxu0 0.0
        %455 = vmatpush2.msra.mxu0 0.0
        %456 = vmatprep.subr.mxu0 0.0
        %457 = vmatpush2.msra.mxu0 0.0
        %458 = vmatprep.subr.mxu0 0.0
        %459 = vmatpush2.msra.mxu0 0.0
        %460 = vmatprep.subr.mxu0 0.0
        %461 = vmatpush2.msra.mxu0 0.0
        %462 = vmatprep.subr.mxu0 0.0
        %463 = vmatpush2.msra.mxu0 0.0
        %464 = vmatprep.subr.mxu0 0.0
        %465 = vmatpush2.msra.mxu0 0.0
        %466 = vmatprep.subr.mxu0 0.0
        %467 = vmatpush2.msra.mxu0 0.0
        %468 = vmatprep.subr.mxu0 0.0
        %469 = vmatpush2.msra.mxu0 0.0
        %470 = vmatprep.subr.mxu0 0.0
        %471 = vmatpush2.msra.mxu0 0.0
        %472 = vmatprep.subr.mxu0 0.0
        %473 = vmatpush2.msra.mxu0 0.0
        %474 = vmatprep.subr.mxu0 0.0
        %475 = vmatpush2.msra.mxu0 0.0
        %476 = vmatprep.subr.mxu0 0.0
        %477 = vmatpush2.msra.mxu0 0.0
        %478 = vmatprep.mubr.f32.mxu0 0.0
        %479 = vmatmul.mubr.f32.gmra.mxu0 %v406
        %v480 = vpop.f32.mrf.mxu0
        %v481 = vadd.f32 %v404, %v480
        %v482 = vpop.f32.mrf.mxu0
        %483 = vmatprep.mubr.f32.mxu0 0.0
        %484 = vmatmul.mubr.f32.gmra.mxu0 %v409
        %v485 = vpop.f32.mrf.mxu0
        %v486 = vadd.f32 %v404, %v485
        %v487 = vpop.f32.mrf.mxu0
        %488 = vmatprep.mubr.f32.mxu0 0.0
        %489 = vmatmul.mubr.f32.gmra.mxu0 %v412
        %v490 = vpop.f32.mrf.mxu0
        %v491 = vadd.f32 %v404, %v490
        %v492 = vpop.f32.mrf.mxu0
        %493 = vdwg.mxu0
        %v494 = vld [vmem:[%s2 + $0x88] sm:$0xff]
        %v495 = vld [vmem:[%s2 + $0x90] sm:$0xff]
        %v496 = vld [vmem:[%s2 + $0x98] sm:$0xff]
        %v497 = vld [vmem:[%s2 + $0xa0] sm:$0xff]
        %v498 = vld [vmem:[%s2 + $0xd0] sm:$0x1]
        %v499 = vlaneseq
        %v500 = vshrl.u32 %v499, 7
        %v501 = vsub.s32 0, %v500
        %v502 = vrot.slane %v498, %v501
        %503 = vmatprep.subr.mxu0 0.0
        %504 = vmatpush1.msra.mxu0 0.0
        %505 = vmatprep.subr.mxu0 0.0
        %506 = vmatpush1.msra.mxu0 0.0
        %507 = vmatprep.subr.mxu0 0.0
        %508 = vmatpush1.msra.mxu0 0.0
        %509 = vmatprep.subr.mxu0 0.0
        %510 = vmatpush1.msra.mxu0 0.0
        %511 = vmatprep.subr.mxu0 0.0
        %512 = vmatpush1.msra.mxu0 0.0
        %513 = vmatprep.subr.mxu0 0.0
        %514 = vmatpush1.msra.mxu0 0.0
        %515 = vmatprep.subr.mxu0 0.0
        %516 = vmatpush1.msra.mxu0 0.0
        %517 = vmatprep.subr.mxu0 0.0
        %518 = vmatpush1.msra.mxu0 0.0
        %519 = vmatprep.subr.mxu0 0.0
        %520 = vmatpush1.msra.mxu0 0.0
        %521 = vmatprep.subr.mxu0 0.0
        %522 = vmatpush1.msra.mxu0 0.0
        %523 = vmatprep.subr.mxu0 0.0
        %524 = vmatpush1.msra.mxu0 0.0
        %525 = vmatprep.subr.mxu0 0.0
        %526 = vmatpush1.msra.mxu0 0.0
        %527 = vmatprep.subr.mxu0 0.0
        %528 = vmatpush1.msra.mxu0 %v497
        %529 = vmatprep.subr.mxu0 0.0
        %530 = vmatpush1.msra.mxu0 %v496
        %531 = vmatprep.subr.mxu0 0.0
        %532 = vmatpush1.msra.mxu0 %v495
        %533 = vmatprep.subr.mxu0 0.0
        %534 = vmatpush1.msra.mxu0 %v494
        %535 = vmatprep.subr.mxu0 0.0
        %536 = vmatpush2.msra.mxu0 0.0
        %537 = vmatprep.subr.mxu0 0.0
        %538 = vmatpush2.msra.mxu0 0.0
        %539 = vmatprep.subr.mxu0 0.0
        %540 = vmatpush2.msra.mxu0 0.0
        %541 = vmatprep.subr.mxu0 0.0
        %542 = vmatpush2.msra.mxu0 0.0
        %543 = vmatprep.subr.mxu0 0.0
        %544 = vmatpush2.msra.mxu0 0.0
        %545 = vmatprep.subr.mxu0 0.0
        %546 = vmatpush2.msra.mxu0 0.0
        %547 = vmatprep.subr.mxu0 0.0
        %548 = vmatpush2.msra.mxu0 0.0
        %549 = vmatprep.subr.mxu0 0.0
        %550 = vmatpush2.msra.mxu0 0.0
        %551 = vmatprep.subr.mxu0 0.0
        %552 = vmatpush2.msra.mxu0 0.0
        %553 = vmatprep.subr.mxu0 0.0
        %554 = vmatpush2.msra.mxu0 0.0
        %555 = vmatprep.subr.mxu0 0.0
        %556 = vmatpush2.msra.mxu0 0.0
        %557 = vmatprep.subr.mxu0 0.0
        %558 = vmatpush2.msra.mxu0 0.0
        %559 = vmatprep.subr.mxu0 0.0
        %560 = vmatpush2.msra.mxu0 0.0
        %561 = vmatprep.subr.mxu0 0.0
        %562 = vmatpush2.msra.mxu0 0.0
        %563 = vmatprep.subr.mxu0 0.0
        %564 = vmatpush2.msra.mxu0 0.0
        %565 = vmatprep.subr.mxu0 0.0
        %566 = vmatpush2.msra.mxu0 0.0
        %567 = vmatprep.mubr.f32.mxu0 0.0
        %568 = vmatmul.mubr.f32.gmra.mxu0 %v406
        %v569 = vpop.f32.mrf.mxu0
        %v570 = vadd.f32 %v502, %v569
        %v571 = vpop.f32.mrf.mxu0
        %572 = vmatprep.mubr.f32.mxu0 0.0
        %573 = vmatmul.mubr.f32.gmra.mxu0 %v409
        %v574 = vpop.f32.mrf.mxu0
        %v575 = vadd.f32 %v502, %v574
        %v576 = vpop.f32.mrf.mxu0
        %577 = vmatprep.mubr.f32.mxu0 0.0
        %578 = vmatmul.mubr.f32.gmra.mxu0 %v412
        %v579 = vpop.f32.mrf.mxu0
        %v580 = vadd.f32 %v502, %v579
        %v581 = vpop.f32.mrf.mxu0
        %582 = vdwg.mxu0
        %v583 = vld [vmem:[%s2 + $0xa8] sm:$0xff]
        %v584 = vld [vmem:[%s2 + $0xb0] sm:$0xff]
        %v585 = vld [vmem:[%s2 + $0xb8] sm:$0xff]
        %v586 = vld [vmem:[%s2 + $0xc0] sm:$0xff]
        %v587 = vld [vmem:[%s2 + $0xd8] sm:$0x1]
        %v588 = vlaneseq
        %v589 = vshrl.u32 %v588, 7
        %v590 = vsub.s32 0, %v589
        %v591 = vrot.slane %v587, %v590
        %592 = vmatprep.subr.mxu0 0.0
        %593 = vmatpush1.msra.mxu0 0.0
        %594 = vmatprep.subr.mxu0 0.0
        %595 = vmatpush1.msra.mxu0 0.0
        %596 = vmatprep.subr.mxu0 0.0
        %597 = vmatpush1.msra.mxu0 0.0
        %598 = vmatprep.subr.mxu0 0.0
        %599 = vmatpush1.msra.mxu0 0.0
        %600 = vmatprep.subr.mxu0 0.0
        %601 = vmatpush1.msra.mxu0 0.0
        %602 = vmatprep.subr.mxu0 0.0
        %603 = vmatpush1.msra.mxu0 0.0
        %604 = vmatprep.subr.mxu0 0.0
        %605 = vmatpush1.msra.mxu0 0.0
        %606 = vmatprep.subr.mxu0 0.0
        %607 = vmatpush1.msra.mxu0 0.0
        %608 = vmatprep.subr.mxu0 0.0
        %609 = vmatpush1.msra.mxu0 0.0
        %610 = vmatprep.subr.mxu0 0.0
        %611 = vmatpush1.msra.mxu0 0.0
        %612 = vmatprep.subr.mxu0 0.0
        %613 = vmatpush1.msra.mxu0 0.0
        %614 = vmatprep.subr.mxu0 0.0
        %615 = vmatpush1.msra.mxu0 0.0
        %616 = vmatprep.subr.mxu0 0.0
        %617 = vmatpush1.msra.mxu0 %v586
        %618 = vmatprep.subr.mxu0 0.0
        %619 = vmatpush1.msra.mxu0 %v585
        %620 = vmatprep.subr.mxu0 0.0
        %621 = vmatpush1.msra.mxu0 %v584
        %622 = vmatprep.subr.mxu0 0.0
        %623 = vmatpush1.msra.mxu0 %v583
        %624 = vmatprep.subr.mxu0 0.0
        %625 = vmatpush2.msra.mxu0 0.0
        %626 = vmatprep.subr.mxu0 0.0
        %627 = vmatpush2.msra.mxu0 0.0
        %628 = vmatprep.subr.mxu0 0.0
        %629 = vmatpush2.msra.mxu0 0.0
        %630 = vmatprep.subr.mxu0 0.0
        %631 = vmatpush2.msra.mxu0 0.0
        %632 = vmatprep.subr.mxu0 0.0
        %633 = vmatpush2.msra.mxu0 0.0
        %634 = vmatprep.subr.mxu0 0.0
        %635 = vmatpush2.msra.mxu0 0.0
        %636 = vmatprep.subr.mxu0 0.0
        %637 = vmatpush2.msra.mxu0 0.0
        %638 = vmatprep.subr.mxu0 0.0
        %639 = vmatpush2.msra.mxu0 0.0
        %640 = vmatprep.subr.mxu0 0.0
        %641 = vmatpush2.msra.mxu0 0.0
        %642 = vmatprep.subr.mxu0 0.0
        %643 = vmatpush2.msra.mxu0 0.0
        %644 = vmatprep.subr.mxu0 0.0
        %645 = vmatpush2.msra.mxu0 0.0
        %646 = vmatprep.subr.mxu0 0.0
        %647 = vmatpush2.msra.mxu0 0.0
        %648 = vmatprep.subr.mxu0 0.0
        %649 = vmatpush2.msra.mxu0 0.0
        %650 = vmatprep.subr.mxu0 0.0
        %651 = vmatpush2.msra.mxu0 0.0
        %652 = vmatprep.subr.mxu0 0.0
        %653 = vmatpush2.msra.mxu0 0.0
        %654 = vmatprep.subr.mxu0 0.0
        %655 = vmatpush2.msra.mxu0 0.0
        %656 = vmatprep.mubr.f32.mxu0 0.0
        %657 = vmatmul.mubr.f32.gmra.mxu0 %v406
        %v658 = vpop.f32.mrf.mxu0
        %v659 = vadd.f32 %v591, %v658
        %v660 = vpop.f32.mrf.mxu0
        %661 = vmatprep.mubr.f32.mxu0 0.0
        %662 = vmatmul.mubr.f32.gmra.mxu0 %v409
        %v663 = vpop.f32.mrf.mxu0
        %v664 = vadd.f32 %v591, %v663
        %v665 = vpop.f32.mrf.mxu0
        %666 = vmatprep.mubr.f32.mxu0 0.0
        %667 = vmatmul.mubr.f32.gmra.mxu0 %v412
        %v668 = vpop.f32.mrf.mxu0
        %v669 = vadd.f32 %v591, %v668
        %v670 = vpop.f32.mrf.mxu0
        %671 = vdwg.mxu0
        %vm672 = vcmask 130048
        %v674 = vsel %vm672, %v481, 0
        %v677 = vsel %vm672, %v486, 0
        %v680 = vsel %vm672, %v491, 0
        %v683 = vsel %vm672, %v570, 0
        %v686 = vsel %vm672, %v575, 0
        %v689 = vsel %vm672, %v580, 0
        %691 = vmatprep.subr.mxu0 0.0
        %692 = vmatpush1.xpose.msra.mxu0 0.0
        %693 = vmatprep.subr.mxu0 0.0
        %694 = vmatpush1.xpose.msra.mxu0 0.0
        %695 = vmatprep.subr.mxu0 0.0
        %696 = vmatpush1.xpose.msra.mxu0 0.0
        %697 = vmatprep.subr.mxu0 0.0
        %698 = vmatpush1.xpose.msra.mxu0 0.0
        %699 = vmatprep.subr.mxu0 0.0
        %700 = vmatpush1.xpose.msra.mxu0 0.0
        %701 = vmatprep.subr.mxu0 0.0
        %702 = vmatpush1.xpose.msra.mxu0 0.0
        %703 = vmatprep.subr.mxu0 0.0
        %704 = vmatpush1.xpose.msra.mxu0 0.0
        %705 = vmatprep.subr.mxu0 0.0
        %706 = vmatpush1.xpose.msra.mxu0 0.0
        %707 = vmatprep.subr.mxu0 0.0
        %708 = vmatpush1.xpose.msra.mxu0 0.0
        %709 = vmatprep.subr.mxu0 0.0
        %710 = vmatpush1.xpose.msra.mxu0 0.0
        %711 = vmatprep.subr.mxu0 0.0
        %712 = vmatpush1.xpose.msra.mxu0 0.0
        %713 = vmatprep.subr.mxu0 0.0
        %714 = vmatpush1.xpose.msra.mxu0 0.0
        %715 = vmatprep.subr.mxu0 0.0
        %716 = vmatpush1.xpose.msra.mxu0 0.0
        %717 = vmatprep.subr.mxu0 0.0
        %718 = vmatpush1.xpose.msra.mxu0 %v689
        %719 = vmatprep.subr.mxu0 0.0
        %720 = vmatpush1.xpose.msra.mxu0 %v686
        %721 = vmatprep.subr.mxu0 0.0
        %722 = vmatpush1.xpose.msra.mxu0 %v683
        %723 = vmatprep.subr.mxu0 0.0
        %724 = vmatpush2.xpose.msra.mxu0 0.0
        %725 = vmatprep.subr.mxu0 0.0
        %726 = vmatpush2.xpose.msra.mxu0 0.0
        %727 = vmatprep.subr.mxu0 0.0
        %728 = vmatpush2.xpose.msra.mxu0 0.0
        %729 = vmatprep.subr.mxu0 0.0
        %730 = vmatpush2.xpose.msra.mxu0 0.0
        %731 = vmatprep.subr.mxu0 0.0
        %732 = vmatpush2.xpose.msra.mxu0 0.0
        %733 = vmatprep.subr.mxu0 0.0
        %734 = vmatpush2.xpose.msra.mxu0 0.0
        %735 = vmatprep.subr.mxu0 0.0
        %736 = vmatpush2.xpose.msra.mxu0 0.0
        %737 = vmatprep.subr.mxu0 0.0
        %738 = vmatpush2.xpose.msra.mxu0 0.0
        %739 = vmatprep.subr.mxu0 0.0
        %740 = vmatpush2.xpose.msra.mxu0 0.0
        %741 = vmatprep.subr.mxu0 0.0
        %742 = vmatpush2.xpose.msra.mxu0 0.0
        %743 = vmatprep.subr.mxu0 0.0
        %744 = vmatpush2.xpose.msra.mxu0 0.0
        %745 = vmatprep.subr.mxu0 0.0
        %746 = vmatpush2.xpose.msra.mxu0 0.0
        %747 = vmatprep.subr.mxu0 0.0
        %748 = vmatpush2.xpose.msra.mxu0 0.0
        %749 = vmatprep.subr.mxu0 0.0
        %750 = vmatpush2.xpose.msra.mxu0 0.0
        %751 = vmatprep.subr.mxu0 0.0
        %752 = vmatpush2.xpose.msra.mxu0 0.0
        %753 = vmatprep.subr.mxu0 0.0
        %754 = vmatpush2.xpose.msra.mxu0 0.0
        %755 = vmatprep.mubr.f32.mxu0 0.0
        %756 = vmatmul.mubr.f32.gmra.mxu0 %v674
        %v757 = vpop.f32.mrf.mxu0
        %v758 = vadd.f32 %v340, %v757
        %v759 = vpop.f32.mrf.mxu0
        %760 = vmatprep.mubr.f32.mxu0 0.0
        %761 = vmatmul.mubr.f32.gmra.mxu0 %v677
        %v762 = vpop.f32.mrf.mxu0
        %v763 = vadd.f32 %v340, %v762
        %v764 = vpop.f32.mrf.mxu0
        %765 = vmatprep.mubr.f32.mxu0 0.0
        %766 = vmatmul.mubr.f32.gmra.mxu0 %v680
        %v767 = vpop.f32.mrf.mxu0
        %v768 = vadd.f32 %v340, %v767
        %v769 = vpop.f32.mrf.mxu0
        %770 = vdwg.mxu0
        %vm771 = vcmask 195584
        %v772 = vsel %vm771, %v758, -inf
        %773 = vmax.xlane.f32.xlu0 %v772
        %v774 = vpop.xlane.xlu0 %773
        %v775 = vsel %vm771, %v763, -inf
        %776 = vmax.xlane.f32.xlu0 %v775
        %v777 = vpop.xlane.xlu0 %776
        %v778 = vsel %vm771, %v768, -inf
        %779 = vmax.xlane.f32.xlu0 %v778
        %v780 = vpop.xlane.xlu0 %779
        %v781 = vsub.f32 %v758, %v774
        %v782 = vsub.f32 %v763, %v777
        %v783 = vsub.f32 %v768, %v780
        %v784 = vmul.f32 %v781, 1.442695
        %v785 = vpow.pop %v784
        %v786 = vmul.f32 %v782, 1.442695
        %v787 = vpow.pop %v786
        %v788 = vmul.f32 %v783, 1.442695
        %v789 = vpow.pop %v788
        %v790 = vsel %vm771, %v785, 0.0
        %791 = vadd.xlane.f32.xlu0 %v790
        %v792 = vpop.xlane.xlu0 %791
        %v793 = vsel %vm771, %v787, 0.0
        %794 = vadd.xlane.f32.xlu0 %v793
        %v795 = vpop.xlane.xlu0 %794
        %v796 = vsel %vm771, %v789, 0.0
        %797 = vadd.xlane.f32.xlu0 %v796
        %v798 = vpop.xlane.xlu0 %797
        %v799 = vrcp.pop %v792
        %v800 = vrcp.pop %v795
        %v801 = vrcp.pop %v798
        %v802 = vmul.f32 %v785, %v799
        %v803 = vmul.f32 %v787, %v800
        %v804 = vmul.f32 %v789, %v801
        %v806 = vsel %vm771, %v802, 0
        %v809 = vsel %vm771, %v803, 0
        %v812 = vsel %vm771, %v804, 0
        %814 = vmatprep.subr.mxu0 0.0
        %815 = vmatpush1.msra.mxu0 0.0
        %816 = vmatprep.subr.mxu0 0.0
        %817 = vmatpush1.msra.mxu0 0.0
        %818 = vmatprep.subr.mxu0 0.0
        %819 = vmatpush1.msra.mxu0 0.0
        %820 = vmatprep.subr.mxu0 0.0
        %821 = vmatpush1.msra.mxu0 0.0
        %822 = vmatprep.subr.mxu0 0.0
        %823 = vmatpush1.msra.mxu0 0.0
        %824 = vmatprep.subr.mxu0 0.0
        %825 = vmatpush1.msra.mxu0 0.0
        %826 = vmatprep.subr.mxu0 0.0
        %827 = vmatpush1.msra.mxu0 0.0
        %828 = vmatprep.subr.mxu0 0.0
        %829 = vmatpush1.msra.mxu0 0.0
        %830 = vmatprep.subr.mxu0 0.0
        %831 = vmatpush1.msra.mxu0 0.0
        %832 = vmatprep.subr.mxu0 0.0
        %833 = vmatpush1.msra.mxu0 0.0
        %834 = vmatprep.subr.mxu0 0.0
        %835 = vmatpush1.msra.mxu0 0.0
        %836 = vmatprep.subr.mxu0 0.0
        %837 = vmatpush1.msra.mxu0 0.0
        %838 = vmatprep.subr.mxu0 0.0
        %839 = vmatpush1.msra.mxu0 0.0
        %840 = vmatprep.subr.mxu0 0.0
        %841 = vmatpush1.msra.mxu0 %v669
        %842 = vmatprep.subr.mxu0 0.0
        %843 = vmatpush1.msra.mxu0 %v664
        %844 = vmatprep.subr.mxu0 0.0
        %845 = vmatpush1.msra.mxu0 %v659
        %846 = vmatprep.subr.mxu0 0.0
        %847 = vmatpush2.msra.mxu0 0.0
        %848 = vmatprep.subr.mxu0 0.0
        %849 = vmatpush2.msra.mxu0 0.0
        %850 = vmatprep.subr.mxu0 0.0
        %851 = vmatpush2.msra.mxu0 0.0
        %852 = vmatprep.subr.mxu0 0.0
        %853 = vmatpush2.msra.mxu0 0.0
        %854 = vmatprep.subr.mxu0 0.0
        %855 = vmatpush2.msra.mxu0 0.0
        %856 = vmatprep.subr.mxu0 0.0
        %857 = vmatpush2.msra.mxu0 0.0
        %858 = vmatprep.subr.mxu0 0.0
        %859 = vmatpush2.msra.mxu0 0.0
        %860 = vmatprep.subr.mxu0 0.0
        %861 = vmatpush2.msra.mxu0 0.0
        %862 = vmatprep.subr.mxu0 0.0
        %863 = vmatpush2.msra.mxu0 0.0
        %864 = vmatprep.subr.mxu0 0.0
        %865 = vmatpush2.msra.mxu0 0.0
        %866 = vmatprep.subr.mxu0 0.0
        %867 = vmatpush2.msra.mxu0 0.0
        %868 = vmatprep.subr.mxu0 0.0
        %869 = vmatpush2.msra.mxu0 0.0
        %870 = vmatprep.subr.mxu0 0.0
        %871 = vmatpush2.msra.mxu0 0.0
        %872 = vmatprep.subr.mxu0 0.0
        %873 = vmatpush2.msra.mxu0 0.0
        %874 = vmatprep.subr.mxu0 0.0
        %875 = vmatpush2.msra.mxu0 0.0
        %876 = vmatprep.subr.mxu0 0.0
        %877 = vmatpush2.msra.mxu0 0.0
        %878 = vmatprep.mubr.f32.mxu0 0.0
        %879 = vmatmul.mubr.f32.gmra.mxu0 %v806
        %v880 = vpop.f32.mrf.mxu0
        %v881 = vadd.f32 0.0, %v880
        %v882 = vpop.f32.mrf.mxu0
        %883 = vmatprep.mubr.f32.mxu0 0.0
        %884 = vmatmul.mubr.f32.gmra.mxu0 %v809
        %v885 = vpop.f32.mrf.mxu0
        %v886 = vadd.f32 0.0, %v885
        %v887 = vpop.f32.mrf.mxu0
        %888 = vmatprep.mubr.f32.mxu0 0.0
        %889 = vmatmul.mubr.f32.gmra.mxu0 %v812
        %v890 = vpop.f32.mrf.mxu0
        %v891 = vadd.f32 0.0, %v890
        %v892 = vpop.f32.mrf.mxu0
        %893 = vdwg.mxu0
        %v894 = vld [vmem:[%s2 + $0xe0] sm:$0xff]
        %v895 = vld [vmem:[%s2 + $0xe8] sm:$0xff]
        %v896 = vld [vmem:[%s2 + $0xf0] sm:$0xff]
        %v897 = vld [vmem:[%s2 + $0xf8] sm:$0xff]
        %v898 = vld [vmem:[%s2 + $0x100] sm:$0xff]
        %v899 = vld [vmem:[%s2 + $0x108] sm:$0xff]
        %v900 = vld [vmem:[%s2 + $0x150] sm:$0x1]
        %v901 = vlaneseq
        %v902 = vshrl.u32 %v901, 7
        %v903 = vsub.s32 0, %v902
        %v904 = vrot.slane %v900, %v903
        %905 = vmatprep.subr.mxu0 0.0
        %906 = vmatpush1.msra.mxu0 0.0
        %907 = vmatprep.subr.mxu0 0.0
        %908 = vmatpush1.msra.mxu0 0.0
        %909 = vmatprep.subr.mxu0 0.0
        %910 = vmatpush1.msra.mxu0 0.0
        %911 = vmatprep.subr.mxu0 0.0
        %912 = vmatpush1.msra.mxu0 0.0
        %913 = vmatprep.subr.mxu0 0.0
        %914 = vmatpush1.msra.mxu0 0.0
        %915 = vmatprep.subr.mxu0 0.0
        %916 = vmatpush1.msra.mxu0 0.0
        %917 = vmatprep.subr.mxu0 0.0
        %918 = vmatpush1.msra.mxu0 0.0
        %919 = vmatprep.subr.mxu0 0.0
        %920 = vmatpush1.msra.mxu0 0.0
        %921 = vmatprep.subr.mxu0 0.0
        %922 = vmatpush1.msra.mxu0 0.0
        %923 = vmatprep.subr.mxu0 0.0
        %924 = vmatpush1.msra.mxu0 0.0
        %925 = vmatprep.subr.mxu0 0.0
        %926 = vmatpush1.msra.mxu0 0.0
        %927 = vmatprep.subr.mxu0 0.0
        %928 = vmatpush1.msra.mxu0 0.0
        %929 = vmatprep.subr.mxu0 0.0
        %930 = vmatpush1.msra.mxu0 %v899
        %931 = vmatprep.subr.mxu0 0.0
        %932 = vmatpush1.msra.mxu0 %v898
        %933 = vmatprep.subr.mxu0 0.0
        %934 = vmatpush1.msra.mxu0 %v897
        %935 = vmatprep.subr.mxu0 0.0
        %936 = vmatpush1.msra.mxu0 %v896
        %937 = vmatprep.subr.mxu0 0.0
        %938 = vmatpush2.msra.mxu0 0.0
        %939 = vmatprep.subr.mxu0 0.0
        %940 = vmatpush2.msra.mxu0 0.0
        %941 = vmatprep.subr.mxu0 0.0
        %942 = vmatpush2.msra.mxu0 0.0
        %943 = vmatprep.subr.mxu0 0.0
        %944 = vmatpush2.msra.mxu0 0.0
        %945 = vmatprep.subr.mxu0 0.0
        %946 = vmatpush2.msra.mxu0 0.0
        %947 = vmatprep.subr.mxu0 0.0
        %948 = vmatpush2.msra.mxu0 0.0
        %949 = vmatprep.subr.mxu0 0.0
        %950 = vmatpush2.msra.mxu0 0.0
        %951 = vmatprep.subr.mxu0 0.0
        %952 = vmatpush2.msra.mxu0 0.0
        %953 = vmatprep.subr.mxu0 0.0
        %954 = vmatpush2.msra.mxu0 0.0
        %955 = vmatprep.subr.mxu0 0.0
        %956 = vmatpush2.msra.mxu0 0.0
        %957 = vmatprep.subr.mxu0 0.0
        %958 = vmatpush2.msra.mxu0 0.0
        %959 = vmatprep.subr.mxu0 0.0
        %960 = vmatpush2.msra.mxu0 0.0
        %961 = vmatprep.subr.mxu0 0.0
        %962 = vmatpush2.msra.mxu0 0.0
        %963 = vmatprep.subr.mxu0 0.0
        %964 = vmatpush2.msra.mxu0 0.0
        %965 = vmatprep.subr.mxu0 0.0
        %966 = vmatpush2.msra.mxu0 0.0
        %967 = vmatprep.subr.mxu0 0.0
        %968 = vmatpush2.msra.mxu0 0.0
        %969 = vmatprep.mubr.f32.mxu0 0.0
        %970 = vmatmul.mubr.f32.gmra.mxu0 %v406
        %v971 = vpop.f32.mrf.mxu0
        %v972 = vadd.f32 %v904, %v971
        %v973 = vpop.f32.mrf.mxu0
        %974 = vmatprep.mubr.f32.mxu0 0.0
        %975 = vmatmul.mubr.f32.gmra.mxu0 %v409
        %v976 = vpop.f32.mrf.mxu0
        %v977 = vadd.f32 %v904, %v976
        %v978 = vpop.f32.mrf.mxu0
        %979 = vmatprep.mubr.f32.mxu0 0.0
        %980 = vmatmul.mubr.f32.gmra.mxu0 %v412
        %v981 = vpop.f32.mrf.mxu0
        %v982 = vadd.f32 %v904, %v981
        %v983 = vpop.f32.mrf.mxu0
        %984 = vdwg.mxu0
        %v985 = vld [vmem:[%s2 + $0x110] sm:$0xff]
        %v986 = vld [vmem:[%s2 + $0x118] sm:$0xff]
        %v987 = vld [vmem:[%s2 + $0x120] sm:$0xff]
        %v988 = vld [vmem:[%s2 + $0x128] sm:$0xff]
        %v989 = vld [vmem:[%s2 + $0x158] sm:$0x1]
        %v990 = vlaneseq
        %v991 = vshrl.u32 %v990, 7
        %v992 = vsub.s32 0, %v991
        %v993 = vrot.slane %v989, %v992
        %994 = vmatprep.subr.mxu0 0.0
        %995 = vmatpush1.msra.mxu0 0.0
        %996 = vmatprep.subr.mxu0 0.0
        %997 = vmatpush1.msra.mxu0 0.0
        %998 = vmatprep.subr.mxu0 0.0
        %999 = vmatpush1.msra.mxu0 0.0
        %1000 = vmatprep.subr.mxu0 0.0
        %1001 = vmatpush1.msra.mxu0 0.0
        %1002 = vmatprep.subr.mxu0 0.0
        %1003 = vmatpush1.msra.mxu0 0.0
        %1004 = vmatprep.subr.mxu0 0.0
        %1005 = vmatpush1.msra.mxu0 0.0
        %1006 = vmatprep.subr.mxu0 0.0
        %1007 = vmatpush1.msra.mxu0 0.0
        %1008 = vmatprep.subr.mxu0 0.0
        %1009 = vmatpush1.msra.mxu0 0.0
        %1010 = vmatprep.subr.mxu0 0.0
        %1011 = vmatpush1.msra.mxu0 0.0
        %1012 = vmatprep.subr.mxu0 0.0
        %1013 = vmatpush1.msra.mxu0 0.0
        %1014 = vmatprep.subr.mxu0 0.0
        %1015 = vmatpush1.msra.mxu0 0.0
        %1016 = vmatprep.subr.mxu0 0.0
        %1017 = vmatpush1.msra.mxu0 0.0
        %1018 = vmatprep.subr.mxu0 0.0
        %1019 = vmatpush1.msra.mxu0 %v988
        %1020 = vmatprep.subr.mxu0 0.0
        %1021 = vmatpush1.msra.mxu0 %v987
        %1022 = vmatprep.subr.mxu0 0.0
        %1023 = vmatpush1.msra.mxu0 %v986
        %1024 = vmatprep.subr.mxu0 0.0
        %1025 = vmatpush1.msra.mxu0 %v985
        %1026 = vmatprep.subr.mxu0 0.0
        %1027 = vmatpush2.msra.mxu0 0.0
        %1028 = vmatprep.subr.mxu0 0.0
        %1029 = vmatpush2.msra.mxu0 0.0
        %1030 = vmatprep.subr.mxu0 0.0
        %1031 = vmatpush2.msra.mxu0 0.0
        %1032 = vmatprep.subr.mxu0 0.0
        %1033 = vmatpush2.msra.mxu0 0.0
        %1034 = vmatprep.subr.mxu0 0.0
        %1035 = vmatpush2.msra.mxu0 0.0
        %1036 = vmatprep.subr.mxu0 0.0
        %1037 = vmatpush2.msra.mxu0 0.0
        %1038 = vmatprep.subr.mxu0 0.0
        %1039 = vmatpush2.msra.mxu0 0.0
        %1040 = vmatprep.subr.mxu0 0.0
        %1041 = vmatpush2.msra.mxu0 0.0
        %1042 = vmatprep.subr.mxu0 0.0
        %1043 = vmatpush2.msra.mxu0 0.0
        %1044 = vmatprep.subr.mxu0 0.0
        %1045 = vmatpush2.msra.mxu0 0.0
        %1046 = vmatprep.subr.mxu0 0.0
        %1047 = vmatpush2.msra.mxu0 0.0
        %1048 = vmatprep.subr.mxu0 0.0
        %1049 = vmatpush2.msra.mxu0 0.0
        %1050 = vmatprep.subr.mxu0 0.0
        %1051 = vmatpush2.msra.mxu0 0.0
        %1052 = vmatprep.subr.mxu0 0.0
        %1053 = vmatpush2.msra.mxu0 0.0
        %1054 = vmatprep.subr.mxu0 0.0
        %1055 = vmatpush2.msra.mxu0 0.0
        %1056 = vmatprep.subr.mxu0 0.0
        %1057 = vmatpush2.msra.mxu0 0.0
        %1058 = vmatprep.mubr.f32.mxu0 0.0
        %1059 = vmatmul.mubr.f32.gmra.mxu0 %v406
        %v1060 = vpop.f32.mrf.mxu0
        %v1061 = vadd.f32 %v993, %v1060
        %v1062 = vpop.f32.mrf.mxu0
        %1063 = vmatprep.mubr.f32.mxu0 0.0
        %1064 = vmatmul.mubr.f32.gmra.mxu0 %v409
        %v1065 = vpop.f32.mrf.mxu0
        %v1066 = vadd.f32 %v993, %v1065
        %v1067 = vpop.f32.mrf.mxu0
        %1068 = vmatprep.mubr.f32.mxu0 0.0
        %1069 = vmatmul.mubr.f32.gmra.mxu0 %v412
        %v1070 = vpop.f32.mrf.mxu0
        %v1071 = vadd.f32 %v993, %v1070
        %v1072 = vpop.f32.mrf.mxu0
        %1073 = vdwg.mxu0
        %v1074 = vld [vmem:[%s2 + $0x130] sm:$0xff]
        %v1075 = vld [vmem:[%s2 + $0x138] sm:$0xff]
        %v1076 = vld [vmem:[%s2 + $0x140] sm:$0xff]
        %v1077 = vld [vmem:[%s2 + $0x148] sm:$0xff]
        %v1078 = vld [vmem:[%s2 + $0x160] sm:$0x1]
        %v1079 = vlaneseq
        %v1080 = vshrl.u32 %v1079, 7
        %v1081 = vsub.s32 0, %v1080
        %v1082 = vrot.slane %v1078, %v1081
        %1083 = vmatprep.subr.mxu0 0.0
        %1084 = vmatpush1.msra.mxu0 0.0
        %1085 = vmatprep.subr.mxu0 0.0
        %1086 = vmatpush1.msra.mxu0 0.0
        %1087 = vmatprep.subr.mxu0 0.0
        %1088 = vmatpush1.msra.mxu0 0.0
        %1089 = vmatprep.subr.mxu0 0.0
        %1090 = vmatpush1.msra.mxu0 0.0
        %1091 = vmatprep.subr.mxu0 0.0
        %1092 = vmatpush1.msra.mxu0 0.0
        %1093 = vmatprep.subr.mxu0 0.0
        %1094 = vmatpush1.msra.mxu0 0.0
        %1095 = vmatprep.subr.mxu0 0.0
        %1096 = vmatpush1.msra.mxu0 0.0
        %1097 = vmatprep.subr.mxu0 0.0
        %1098 = vmatpush1.msra.mxu0 0.0
        %1099 = vmatprep.subr.mxu0 0.0
        %1100 = vmatpush1.msra.mxu0 0.0
        %1101 = vmatprep.subr.mxu0 0.0
        %1102 = vmatpush1.msra.mxu0 0.0
        %1103 = vmatprep.subr.mxu0 0.0
        %1104 = vmatpush1.msra.mxu0 0.0
        %1105 = vmatprep.subr.mxu0 0.0
        %1106 = vmatpush1.msra.mxu0 0.0
        %1107 = vmatprep.subr.mxu0 0.0
        %1108 = vmatpush1.msra.mxu0 %v1077
        %1109 = vmatprep.subr.mxu0 0.0
        %1110 = vmatpush1.msra.mxu0 %v1076
        %1111 = vmatprep.subr.mxu0 0.0
        %1112 = vmatpush1.msra.mxu0 %v1075
        %1113 = vmatprep.subr.mxu0 0.0
        %1114 = vmatpush1.msra.mxu0 %v1074
        %1115 = vmatprep.subr.mxu0 0.0
        %1116 = vmatpush2.msra.mxu0 0.0
        %1117 = vmatprep.subr.mxu0 0.0
        %1118 = vmatpush2.msra.mxu0 0.0
        %1119 = vmatprep.subr.mxu0 0.0
        %1120 = vmatpush2.msra.mxu0 0.0
        %1121 = vmatprep.subr.mxu0 0.0
        %1122 = vmatpush2.msra.mxu0 0.0
        %1123 = vmatprep.subr.mxu0 0.0
        %1124 = vmatpush2.msra.mxu0 0.0
        %1125 = vmatprep.subr.mxu0 0.0
        %1126 = vmatpush2.msra.mxu0 0.0
        %1127 = vmatprep.subr.mxu0 0.0
        %1128 = vmatpush2.msra.mxu0 0.0
        %1129 = vmatprep.subr.mxu0 0.0
        %1130 = vmatpush2.msra.mxu0 0.0
        %1131 = vmatprep.subr.mxu0 0.0
        %1132 = vmatpush2.msra.mxu0 0.0
        %1133 = vmatprep.subr.mxu0 0.0
        %1134 = vmatpush2.msra.mxu0 0.0
        %1135 = vmatprep.subr.mxu0 0.0
        %1136 = vmatpush2.msra.mxu0 0.0
        %1137 = vmatprep.subr.mxu0 0.0
        %1138 = vmatpush2.msra.mxu0 0.0
        %1139 = vmatprep.subr.mxu0 0.0
        %1140 = vmatpush2.msra.mxu0 0.0
        %1141 = vmatprep.subr.mxu0 0.0
        %1142 = vmatpush2.msra.mxu0 0.0
        %1143 = vmatprep.subr.mxu0 0.0
        %1144 = vmatpush2.msra.mxu0 0.0
        %1145 = vmatprep.subr.mxu0 0.0
        %1146 = vmatpush2.msra.mxu0 0.0
        %1147 = vmatprep.mubr.f32.mxu0 0.0
        %1148 = vmatmul.mubr.f32.gmra.mxu0 %v406
        %v1149 = vpop.f32.mrf.mxu0
        %v1150 = vadd.f32 %v1082, %v1149
        %v1151 = vpop.f32.mrf.mxu0
        %1152 = vmatprep.mubr.f32.mxu0 0.0
        %1153 = vmatmul.mubr.f32.gmra.mxu0 %v409
        %v1154 = vpop.f32.mrf.mxu0
        %v1155 = vadd.f32 %v1082, %v1154
        %v1156 = vpop.f32.mrf.mxu0
        %1157 = vmatprep.mubr.f32.mxu0 0.0
        %1158 = vmatmul.mubr.f32.gmra.mxu0 %v412
        %v1159 = vpop.f32.mrf.mxu0
        %v1160 = vadd.f32 %v1082, %v1159
        %v1161 = vpop.f32.mrf.mxu0
        %1162 = vdwg.mxu0
        %v1164 = vsel %vm672, %v972, 0
        %v1167 = vsel %vm672, %v977, 0
        %v1170 = vsel %vm672, %v982, 0
        %v1173 = vsel %vm672, %v1061, 0
        %v1176 = vsel %vm672, %v1066, 0
        %v1179 = vsel %vm672, %v1071, 0
        %1181 = vmatprep.subr.mxu0 0.0
        %1182 = vmatpush1.xpose.msra.mxu0 0.0
        %1183 = vmatprep.subr.mxu0 0.0
        %1184 = vmatpush1.xpose.msra.mxu0 0.0
        %1185 = vmatprep.subr.mxu0 0.0
        %1186 = vmatpush1.xpose.msra.mxu0 0.0
        %1187 = vmatprep.subr.mxu0 0.0
        %1188 = vmatpush1.xpose.msra.mxu0 0.0
        %1189 = vmatprep.subr.mxu0 0.0
        %1190 = vmatpush1.xpose.msra.mxu0 0.0
        %1191 = vmatprep.subr.mxu0 0.0
        %1192 = vmatpush1.xpose.msra.mxu0 0.0
        %1193 = vmatprep.subr.mxu0 0.0
        %1194 = vmatpush1.xpose.msra.mxu0 0.0
        %1195 = vmatprep.subr.mxu0 0.0
        %1196 = vmatpush1.xpose.msra.mxu0 0.0
        %1197 = vmatprep.subr.mxu0 0.0
        %1198 = vmatpush1.xpose.msra.mxu0 0.0
        %1199 = vmatprep.subr.mxu0 0.0
        %1200 = vmatpush1.xpose.msra.mxu0 0.0
        %1201 = vmatprep.subr.mxu0 0.0
        %1202 = vmatpush1.xpose.msra.mxu0 0.0
        %1203 = vmatprep.subr.mxu0 0.0
        %1204 = vmatpush1.xpose.msra.mxu0 0.0
        %1205 = vmatprep.subr.mxu0 0.0
        %1206 = vmatpush1.xpose.msra.mxu0 0.0
        %1207 = vmatprep.subr.mxu0 0.0
        %1208 = vmatpush1.xpose.msra.mxu0 %v1179
        %1209 = vmatprep.subr.mxu0 0.0
        %1210 = vmatpush1.xpose.msra.mxu0 %v1176
        %1211 = vmatprep.subr.mxu0 0.0
        %1212 = vmatpush1.xpose.msra.mxu0 %v1173
        %1213 = vmatprep.subr.mxu0 0.0
        %1214 = vmatpush2.xpose.msra.mxu0 0.0
        %1215 = vmatprep.subr.mxu0 0.0
        %1216 = vmatpush2.xpose.msra.mxu0 0.0
        %1217 = vmatprep.subr.mxu0 0.0
        %1218 = vmatpush2.xpose.msra.mxu0 0.0
        %1219 = vmatprep.subr.mxu0 0.0
        %1220 = vmatpush2.xpose.msra.mxu0 0.0
        %1221 = vmatprep.subr.mxu0 0.0
        %1222 = vmatpush2.xpose.msra.mxu0 0.0
        %1223 = vmatprep.subr.mxu0 0.0
        %1224 = vmatpush2.xpose.msra.mxu0 0.0
        %1225 = vmatprep.subr.mxu0 0.0
        %1226 = vmatpush2.xpose.msra.mxu0 0.0
        %1227 = vmatprep.subr.mxu0 0.0
        %1228 = vmatpush2.xpose.msra.mxu0 0.0
        %1229 = vmatprep.subr.mxu0 0.0
        %1230 = vmatpush2.xpose.msra.mxu0 0.0
        %1231 = vmatprep.subr.mxu0 0.0
        %1232 = vmatpush2.xpose.msra.mxu0 0.0
        %1233 = vmatprep.subr.mxu0 0.0
        %1234 = vmatpush2.xpose.msra.mxu0 0.0
        %1235 = vmatprep.subr.mxu0 0.0
        %1236 = vmatpush2.xpose.msra.mxu0 0.0
        %1237 = vmatprep.subr.mxu0 0.0
        %1238 = vmatpush2.xpose.msra.mxu0 0.0
        %1239 = vmatprep.subr.mxu0 0.0
        %1240 = vmatpush2.xpose.msra.mxu0 0.0
        %1241 = vmatprep.subr.mxu0 0.0
        %1242 = vmatpush2.xpose.msra.mxu0 0.0
        %1243 = vmatprep.subr.mxu0 0.0
        %1244 = vmatpush2.xpose.msra.mxu0 0.0
        %1245 = vmatprep.mubr.f32.mxu0 0.0
        %1246 = vmatmul.mubr.f32.gmra.mxu0 %v1164
        %v1247 = vpop.f32.mrf.mxu0
        %v1248 = vadd.f32 %v340, %v1247
        %v1249 = vpop.f32.mrf.mxu0
        %1250 = vmatprep.mubr.f32.mxu0 0.0
        %1251 = vmatmul.mubr.f32.gmra.mxu0 %v1167
        %v1252 = vpop.f32.mrf.mxu0
        %v1253 = vadd.f32 %v340, %v1252
        %v1254 = vpop.f32.mrf.mxu0
        %1255 = vmatprep.mubr.f32.mxu0 0.0
        %1256 = vmatmul.mubr.f32.gmra.mxu0 %v1170
        %v1257 = vpop.f32.mrf.mxu0
        %v1258 = vadd.f32 %v340, %v1257
        %v1259 = vpop.f32.mrf.mxu0
        %1260 = vdwg.mxu0
        %v1261 = vsel %vm771, %v1248, -inf
        %1262 = vmax.xlane.f32.xlu0 %v1261
        %v1263 = vpop.xlane.xlu0 %1262
        %v1264 = vsel %vm771, %v1253, -inf
        %1265 = vmax.xlane.f32.xlu0 %v1264
        %v1266 = vpop.xlane.xlu0 %1265
        %v1267 = vsel %vm771, %v1258, -inf
        %1268 = vmax.xlane.f32.xlu0 %v1267
        %v1269 = vpop.xlane.xlu0 %1268
        %v1270 = vsub.f32 %v1248, %v1263
        %v1271 = vsub.f32 %v1253, %v1266
        %v1272 = vsub.f32 %v1258, %v1269
        %v1273 = vmul.f32 %v1270, 1.442695
        %v1274 = vpow.pop %v1273
        %v1275 = vmul.f32 %v1271, 1.442695
        %v1276 = vpow.pop %v1275
        %v1277 = vmul.f32 %v1272, 1.442695
        %v1278 = vpow.pop %v1277
        %v1279 = vsel %vm771, %v1274, 0.0
        %1280 = vadd.xlane.f32.xlu0 %v1279
        %v1281 = vpop.xlane.xlu0 %1280
        %v1282 = vsel %vm771, %v1276, 0.0
        %1283 = vadd.xlane.f32.xlu0 %v1282
        %v1284 = vpop.xlane.xlu0 %1283
        %v1285 = vsel %vm771, %v1278, 0.0
        %1286 = vadd.xlane.f32.xlu0 %v1285
        %v1287 = vpop.xlane.xlu0 %1286
        %v1288 = vrcp.pop %v1281
        %v1289 = vrcp.pop %v1284
        %v1290 = vrcp.pop %v1287
        %v1291 = vmul.f32 %v1274, %v1288
        %v1292 = vmul.f32 %v1276, %v1289
        %v1293 = vmul.f32 %v1278, %v1290
        %v1295 = vsel %vm771, %v1291, 0
        %v1298 = vsel %vm771, %v1292, 0
        %v1301 = vsel %vm771, %v1293, 0
        %1303 = vmatprep.subr.mxu0 0.0
        %1304 = vmatpush1.msra.mxu0 0.0
        %1305 = vmatprep.subr.mxu0 0.0
        %1306 = vmatpush1.msra.mxu0 0.0
        %1307 = vmatprep.subr.mxu0 0.0
        %1308 = vmatpush1.msra.mxu0 0.0
        %1309 = vmatprep.subr.mxu0 0.0
        %1310 = vmatpush1.msra.mxu0 0.0
        %1311 = vmatprep.subr.mxu0 0.0
        %1312 = vmatpush1.msra.mxu0 0.0
        %1313 = vmatprep.subr.mxu0 0.0
        %1314 = vmatpush1.msra.mxu0 0.0
        %1315 = vmatprep.subr.mxu0 0.0
        %1316 = vmatpush1.msra.mxu0 0.0
        %1317 = vmatprep.subr.mxu0 0.0
        %1318 = vmatpush1.msra.mxu0 0.0
        %1319 = vmatprep.subr.mxu0 0.0
        %1320 = vmatpush1.msra.mxu0 0.0
        %1321 = vmatprep.subr.mxu0 0.0
        %1322 = vmatpush1.msra.mxu0 0.0
        %1323 = vmatprep.subr.mxu0 0.0
        %1324 = vmatpush1.msra.mxu0 0.0
        %1325 = vmatprep.subr.mxu0 0.0
        %1326 = vmatpush1.msra.mxu0 0.0
        %1327 = vmatprep.subr.mxu0 0.0
        %1328 = vmatpush1.msra.mxu0 0.0
        %1329 = vmatprep.subr.mxu0 0.0
        %1330 = vmatpush1.msra.mxu0 %v1160
        %1331 = vmatprep.subr.mxu0 0.0
        %1332 = vmatpush1.msra.mxu0 %v1155
        %1333 = vmatprep.subr.mxu0 0.0
        %1334 = vmatpush1.msra.mxu0 %v1150
        %1335 = vmatprep.subr.mxu0 0.0
        %1336 = vmatpush2.msra.mxu0 0.0
        %1337 = vmatprep.subr.mxu0 0.0
        %1338 = vmatpush2.msra.mxu0 0.0
        %1339 = vmatprep.subr.mxu0 0.0
        %1340 = vmatpush2.msra.mxu0 0.0
        %1341 = vmatprep.subr.mxu0 0.0
        %1342 = vmatpush2.msra.mxu0 0.0
        %1343 = vmatprep.subr.mxu0 0.0
        %1344 = vmatpush2.msra.mxu0 0.0
        %1345 = vmatprep.subr.mxu0 0.0
        %1346 = vmatpush2.msra.mxu0 0.0
        %1347 = vmatprep.subr.mxu0 0.0
        %1348 = vmatpush2.msra.mxu0 0.0
        %1349 = vmatprep.subr.mxu0 0.0
        %1350 = vmatpush2.msra.mxu0 0.0
        %1351 = vmatprep.subr.mxu0 0.0
        %1352 = vmatpush2.msra.mxu0 0.0
        %1353 = vmatprep.subr.mxu0 0.0
        %1354 = vmatpush2.msra.mxu0 0.0
        %1355 = vmatprep.subr.mxu0 0.0
        %1356 = vmatpush2.msra.mxu0 0.0
        %1357 = vmatprep.subr.mxu0 0.0
        %1358 = vmatpush2.msra.mxu0 0.0
        %1359 = vmatprep.subr.mxu0 0.0
        %1360 = vmatpush2.msra.mxu0 0.0
        %1361 = vmatprep.subr.mxu0 0.0
        %1362 = vmatpush2.msra.mxu0 0.0
        %1363 = vmatprep.subr.mxu0 0.0
        %1364 = vmatpush2.msra.mxu0 0.0
        %1365 = vmatprep.subr.mxu0 0.0
        %1366 = vmatpush2.msra.mxu0 0.0
        %1367 = vmatprep.mubr.f32.mxu0 0.0
        %1368 = vmatmul.mubr.f32.gmra.mxu0 %v1295
        %v1369 = vpop.f32.mrf.mxu0
        %v1370 = vadd.f32 0.0, %v1369
        %v1371 = vpop.f32.mrf.mxu0
        %1372 = vmatprep.mubr.f32.mxu0 0.0
        %1373 = vmatmul.mubr.f32.gmra.mxu0 %v1298
        %v1374 = vpop.f32.mrf.mxu0
        %v1375 = vadd.f32 0.0, %v1374
        %v1376 = vpop.f32.mrf.mxu0
        %1377 = vmatprep.mubr.f32.mxu0 0.0
        %1378 = vmatmul.mubr.f32.gmra.mxu0 %v1301
        %v1379 = vpop.f32.mrf.mxu0
        %v1380 = vadd.f32 0.0, %v1379
        %v1381 = vpop.f32.mrf.mxu0
        %1382 = vdwg.mxu0
        %v1383 = vld [vmem:[%s2 + $0x168] sm:$0xff]
        %v1384 = vld [vmem:[%s2 + $0x170] sm:$0xff]
        %v1386 = vsel %vm672, %v1370, 0
        %v1389 = vsel %vm672, %v1375, 0
        %v1392 = vsel %vm672, %v1380, 0
        %1394 = vmatprep.subr.mxu0 0.0
        %1395 = vmatpush1.msra.mxu0 0.0
        %1396 = vmatprep.subr.mxu0 0.0
        %1397 = vmatpush1.msra.mxu0 0.0
        %1398 = vmatprep.subr.mxu0 0.0
        %1399 = vmatpush1.msra.mxu0 0.0
        %1400 = vmatprep.subr.mxu0 0.0
        %1401 = vmatpush1.msra.mxu0 0.0
        %1402 = vmatprep.subr.mxu0 0.0
        %1403 = vmatpush1.msra.mxu0 0.0
        %1404 = vmatprep.subr.mxu0 0.0
        %1405 = vmatpush1.msra.mxu0 0.0
        %1406 = vmatprep.subr.mxu0 0.0
        %1407 = vmatpush1.msra.mxu0 0.0
        %1408 = vmatprep.subr.mxu0 0.0
        %1409 = vmatpush1.msra.mxu0 0.0
        %1410 = vmatprep.subr.mxu0 0.0
        %1411 = vmatpush1.msra.mxu0 0.0
        %1412 = vmatprep.subr.mxu0 0.0
        %1413 = vmatpush1.msra.mxu0 0.0
        %1414 = vmatprep.subr.mxu0 0.0
        %1415 = vmatpush1.msra.mxu0 0.0
        %1416 = vmatprep.subr.mxu0 0.0
        %1417 = vmatpush1.msra.mxu0 0.0
        %1418 = vmatprep.subr.mxu0 0.0
        %1419 = vmatpush1.msra.mxu0 0.0
        %1420 = vmatprep.subr.mxu0 0.0
        %1421 = vmatpush1.msra.mxu0 0.0
        %1422 = vmatprep.subr.mxu0 0.0
        %1423 = vmatpush1.msra.mxu0 %v1384
        %1424 = vmatprep.subr.mxu0 0.0
        %1425 = vmatpush1.msra.mxu0 %v1383
        %1426 = vmatprep.subr.mxu0 0.0
        %1427 = vmatpush2.msra.mxu0 0.0
        %1428 = vmatprep.subr.mxu0 0.0
        %1429 = vmatpush2.msra.mxu0 0.0
        %1430 = vmatprep.subr.mxu0 0.0
        %1431 = vmatpush2.msra.mxu0 0.0
        %1432 = vmatprep.subr.mxu0 0.0
        %1433 = vmatpush2.msra.mxu0 0.0
        %1434 = vmatprep.subr.mxu0 0.0
        %1435 = vmatpush2.msra.mxu0 0.0
        %1436 = vmatprep.subr.mxu0 0.0
        %1437 = vmatpush2.msra.mxu0 0.0
        %1438 = vmatprep.subr.mxu0 0.0
        %1439 = vmatpush2.msra.mxu0 0.0
        %1440 = vmatprep.subr.mxu0 0.0
        %1441 = vmatpush2.msra.mxu0 0.0
        %1442 = vmatprep.subr.mxu0 0.0
        %1443 = vmatpush2.msra.mxu0 0.0
        %1444 = vmatprep.subr.mxu0 0.0
        %1445 = vmatpush2.msra.mxu0 0.0
        %1446 = vmatprep.subr.mxu0 0.0
        %1447 = vmatpush2.msra.mxu0 0.0
        %1448 = vmatprep.subr.mxu0 0.0
        %1449 = vmatpush2.msra.mxu0 0.0
        %1450 = vmatprep.subr.mxu0 0.0
        %1451 = vmatpush2.msra.mxu0 0.0
        %1452 = vmatprep.subr.mxu0 0.0
        %1453 = vmatpush2.msra.mxu0 0.0
        %1454 = vmatprep.subr.mxu0 0.0
        %1455 = vmatpush2.msra.mxu0 0.0
        %1456 = vmatprep.subr.mxu0 0.0
        %1457 = vmatpush2.msra.mxu0 0.0
        %1458 = vmatprep.mubr.f32.mxu0 0.0
        %1459 = vmatmul.mubr.f32.gmra.mxu0 %v1386
        %v1460 = vpop.f32.mrf.mxu0
        %v1461 = vadd.f32 0.0, %v1460
        %v1462 = vpop.f32.mrf.mxu0
        %1463 = vmatprep.mubr.f32.mxu0 0.0
        %1464 = vmatmul.mubr.f32.gmra.mxu0 %v1389
        %v1465 = vpop.f32.mrf.mxu0
        %v1466 = vadd.f32 0.0, %v1465
        %v1467 = vpop.f32.mrf.mxu0
        %1468 = vmatprep.mubr.f32.mxu0 0.0
        %1469 = vmatmul.mubr.f32.gmra.mxu0 %v1392
        %v1470 = vpop.f32.mrf.mxu0
        %v1471 = vadd.f32 0.0, %v1470
        %v1472 = vpop.f32.mrf.mxu0
        %1473 = vdwg.mxu0
        %v1475 = vsel %vm672, %v881, 0
        %v1478 = vsel %vm672, %v886, 0
        %v1481 = vsel %vm672, %v891, 0
        %1483 = vmatprep.subr.mxu0 0.0
        %1484 = vmatpush1.msra.mxu0 0.0
        %1485 = vmatprep.subr.mxu0 0.0
        %1486 = vmatpush1.msra.mxu0 0.0
        %1487 = vmatprep.subr.mxu0 0.0
        %1488 = vmatpush1.msra.mxu0 0.0
        %1489 = vmatprep.subr.mxu0 0.0
        %1490 = vmatpush1.msra.mxu0 0.0
        %1491 = vmatprep.subr.mxu0 0.0
        %1492 = vmatpush1.msra.mxu0 0.0
        %1493 = vmatprep.subr.mxu0 0.0
        %1494 = vmatpush1.msra.mxu0 0.0
        %1495 = vmatprep.subr.mxu0 0.0
        %1496 = vmatpush1.msra.mxu0 0.0
        %1497 = vmatprep.subr.mxu0 0.0
        %1498 = vmatpush1.msra.mxu0 0.0
        %1499 = vmatprep.subr.mxu0 0.0
        %1500 = vmatpush1.msra.mxu0 0.0
        %1501 = vmatprep.subr.mxu0 0.0
        %1502 = vmatpush1.msra.mxu0 0.0
        %1503 = vmatprep.subr.mxu0 0.0
        %1504 = vmatpush1.msra.mxu0 0.0
        %1505 = vmatprep.subr.mxu0 0.0
        %1506 = vmatpush1.msra.mxu0 0.0
        %1507 = vmatprep.subr.mxu0 0.0
        %1508 = vmatpush1.msra.mxu0 0.0
        %1509 = vmatprep.subr.mxu0 0.0
        %1510 = vmatpush1.msra.mxu0 0.0
        %1511 = vmatprep.subr.mxu0 0.0
        %1512 = vmatpush1.msra.mxu0 %v895
        %1513 = vmatprep.subr.mxu0 0.0
        %1514 = vmatpush1.msra.mxu0 %v894
        %1515 = vmatprep.subr.mxu0 0.0
        %1516 = vmatpush2.msra.mxu0 0.0
        %1517 = vmatprep.subr.mxu0 0.0
        %1518 = vmatpush2.msra.mxu0 0.0
        %1519 = vmatprep.subr.mxu0 0.0
        %1520 = vmatpush2.msra.mxu0 0.0
        %1521 = vmatprep.subr.mxu0 0.0
        %1522 = vmatpush2.msra.mxu0 0.0
        %1523 = vmatprep.subr.mxu0 0.0
        %1524 = vmatpush2.msra.mxu0 0.0
        %1525 = vmatprep.subr.mxu0 0.0
        %1526 = vmatpush2.msra.mxu0 0.0
        %1527 = vmatprep.subr.mxu0 0.0
        %1528 = vmatpush2.msra.mxu0 0.0
        %1529 = vmatprep.subr.mxu0 0.0
        %1530 = vmatpush2.msra.mxu0 0.0
        %1531 = vmatprep.subr.mxu0 0.0
        %1532 = vmatpush2.msra.mxu0 0.0
        %1533 = vmatprep.subr.mxu0 0.0
        %1534 = vmatpush2.msra.mxu0 0.0
        %1535 = vmatprep.subr.mxu0 0.0
        %1536 = vmatpush2.msra.mxu0 0.0
        %1537 = vmatprep.subr.mxu0 0.0
        %1538 = vmatpush2.msra.mxu0 0.0
        %1539 = vmatprep.subr.mxu0 0.0
        %1540 = vmatpush2.msra.mxu0 0.0
        %1541 = vmatprep.subr.mxu0 0.0
        %1542 = vmatpush2.msra.mxu0 0.0
        %1543 = vmatprep.subr.mxu0 0.0
        %1544 = vmatpush2.msra.mxu0 0.0
        %1545 = vmatprep.subr.mxu0 0.0
        %1546 = vmatpush2.msra.mxu0 0.0
        %1547 = vmatprep.mubr.f32.mxu0 0.0
        %1548 = vmatmul.mubr.f32.gmra.mxu0 %v1475
        %v1549 = vpop.f32.mrf.mxu0
        %v1550 = vadd.f32 %v1461, %v1549
        %v1551 = vpop.f32.mrf.mxu0
        %1552 = vmatprep.mubr.f32.mxu0 0.0
        %1553 = vmatmul.mubr.f32.gmra.mxu0 %v1478
        %v1554 = vpop.f32.mrf.mxu0
        %v1555 = vadd.f32 %v1466, %v1554
        %v1556 = vpop.f32.mrf.mxu0
        %1557 = vmatprep.mubr.f32.mxu0 0.0
        %1558 = vmatmul.mubr.f32.gmra.mxu0 %v1481
        %v1559 = vpop.f32.mrf.mxu0
        %v1560 = vadd.f32 %v1471, %v1559
        %v1561 = vpop.f32.mrf.mxu0
        %1562 = vdwg.mxu0
        %v1563 = vadd.f32 %v334, %v1550
        %v1564 = vadd.f32 %v335, %v1555
        %v1565 = vadd.f32 %v336, %v1560
        %v1566 = vld [vmem:[%s2 + $0x178] sm:$0x1]
        %v1567 = vlaneseq
        %v1568 = vshrl.u32 %v1567, 7
        %v1569 = vsub.s32 0, %v1568
        %v1570 = vrot.slane %v1566, %v1569
        %v1571 = vadd.f32 %v1563, %v1570
        %v1572 = vadd.f32 %v1564, %v1570
        %v1573 = vadd.f32 %v1565, %v1570
        %v1574 = vld [vmem:[%s2 + $0x180] sm:$0x1]
        %v1575 = vld [vmem:[%s2 + $0x188] sm:$0x1]
        %v1576 = vsel %vm282, %v1571, 0.0
        %1577 = vadd.xlane.f32.xlu0 %v1576
        %v1578 = vpop.xlane.xlu0 %1577
        %v1579 = vsel %vm282, %v1572, 0.0
        %1580 = vadd.xlane.f32.xlu0 %v1579
        %v1581 = vpop.xlane.xlu0 %1580
        %v1582 = vsel %vm282, %v1573, 0.0
        %1583 = vadd.xlane.f32.xlu0 %v1582
        %v1584 = vpop.xlane.xlu0 %1583
        %v1585 = vmul.f32 %v1578, %v292
        %v1586 = vmul.f32 %v1581, %v292
        %v1587 = vmul.f32 %v1584, %v292
        %v1588 = vsub.f32 %v1571, %v1585
        %v1589 = vsub.f32 %v1572, %v1586
        %v1590 = vsub.f32 %v1573, %v1587
        %v1591 = vmul.f32 %v1588, %v1588
        %v1592 = vmul.f32 %v1589, %v1589
        %v1593 = vmul.f32 %v1590, %v1590
        %v1594 = vsel %vm282, %v1591, 0.0
        %1595 = vadd.xlane.f32.xlu0 %v1594
        %v1596 = vpop.xlane.xlu0 %1595
        %v1597 = vsel %vm282, %v1592, 0.0
        %1598 = vadd.xlane.f32.xlu0 %v1597
        %v1599 = vpop.xlane.xlu0 %1598
        %v1600 = vsel %vm282, %v1593, 0.0
        %1601 = vadd.xlane.f32.xlu0 %v1600
        %v1602 = vpop.xlane.xlu0 %1601
        %v1603 = vmul.f32 %v1596, %v292
        %v1604 = vmul.f32 %v1599, %v292
        %v1605 = vmul.f32 %v1602, %v292
        %v1606 = vadd.f32 %v1603, 1e-05
        %v1607 = vadd.f32 %v1604, 1e-05
        %v1608 = vadd.f32 %v1605, 1e-05
        %v1609 = vrsqrt.pop %v1606
        %v1610 = vrsqrt.pop %v1607
        %v1611 = vrsqrt.pop %v1608
        %v1612 = vmul.f32 %v1588, %v1609
        %v1613 = vmul.f32 %v1589, %v1610
        %v1614 = vmul.f32 %v1590, %v1611
        %v1615 = vlaneseq
        %v1616 = vshrl.u32 %v1615, 7
        %v1617 = vsub.s32 0, %v1616
        %v1618 = vrot.slane %v1574, %v1617
        %v1619 = vmul.f32 %v1612, %v1618
        %v1620 = vmul.f32 %v1613, %v1618
        %v1621 = vmul.f32 %v1614, %v1618
        %v1622 = vlaneseq
        %v1623 = vshrl.u32 %v1622, 7
        %v1624 = vsub.s32 0, %v1623
        %v1625 = vrot.slane %v1575, %v1624
        %v1626 = vadd.f32 %v1619, %v1625
        %v1627 = vadd.f32 %v1620, %v1625
        %v1628 = vadd.f32 %v1621, %v1625
        %v1629 = vld [vmem:[%s2 + $0x190] sm:$0xff]
        %v1630 = vld [vmem:[%s2 + $0x198] sm:$0xff]
        %v1631 = vld [vmem:[%s2 + $0x1a0] sm:$0xff]
        %v1632 = vld [vmem:[%s2 + $0x1a8] sm:$0xff]
        %v1633 = vld [vmem:[%s2 + $0x1b0] sm:$0x1]
        %v1634 = vlaneseq
        %v1635 = vshrl.u32 %v1634, 7
        %v1636 = vsub.s32 0, %v1635
        %v1637 = vrot.slane %v1633, %v1636
        %v1639 = vsel %vm282, %v1626, 0
        %v1642 = vsel %vm282, %v1627, 0
        %v1645 = vsel %vm282, %v1628, 0
        %1647 = vmatprep.subr.mxu0 0.0
        %1648 = vmatpush1.msra.mxu0 0.0
        %1649 = vmatprep.subr.mxu0 0.0
        %1650 = vmatpush1.msra.mxu0 0.0
        %1651 = vmatprep.subr.mxu0 0.0
        %1652 = vmatpush1.msra.mxu0 0.0
        %1653 = vmatprep.subr.mxu0 0.0
        %1654 = vmatpush1.msra.mxu0 0.0
        %1655 = vmatprep.subr.mxu0 0.0
        %1656 = vmatpush1.msra.mxu0 0.0
        %1657 = vmatprep.subr.mxu0 0.0
        %1658 = vmatpush1.msra.mxu0 0.0
        %1659 = vmatprep.subr.mxu0 0.0
        %1660 = vmatpush1.msra.mxu0 0.0
        %1661 = vmatprep.subr.mxu0 0.0
        %1662 = vmatpush1.msra.mxu0 0.0
        %1663 = vmatprep.subr.mxu0 0.0
        %1664 = vmatpush1.msra.mxu0 0.0
        %1665 = vmatprep.subr.mxu0 0.0
        %1666 = vmatpush1.msra.mxu0 0.0
        %1667 = vmatprep.subr.mxu0 0.0
        %1668 = vmatpush1.msra.mxu0 0.0
        %1669 = vmatprep.subr.mxu0 0.0
        %1670 = vmatpush1.msra.mxu0 0.0
        %1671 = vmatprep.subr.mxu0 0.0
        %1672 = vmatpush1.msra.mxu0 %v1632
        %1673 = vmatprep.subr.mxu0 0.0
        %1674 = vmatpush1.msra.mxu0 %v1631
        %1675 = vmatprep.subr.mxu0 0.0
        %1676 = vmatpush1.msra.mxu0 %v1630
        %1677 = vmatprep.subr.mxu0 0.0
        %1678 = vmatpush1.msra.mxu0 %v1629
        %1679 = vmatprep.subr.mxu0 0.0
        %1680 = vmatpush2.msra.mxu0 0.0
        %1681 = vmatprep.subr.mxu0 0.0
        %1682 = vmatpush2.msra.mxu0 0.0
        %1683 = vmatprep.subr.mxu0 0.0
        %1684 = vmatpush2.msra.mxu0 0.0
        %1685 = vmatprep.subr.mxu0 0.0
        %1686 = vmatpush2.msra.mxu0 0.0
        %1687 = vmatprep.subr.mxu0 0.0
        %1688 = vmatpush2.msra.mxu0 0.0
        %1689 = vmatprep.subr.mxu0 0.0
        %1690 = vmatpush2.msra.mxu0 0.0
        %1691 = vmatprep.subr.mxu0 0.0
        %1692 = vmatpush2.msra.mxu0 0.0
        %1693 = vmatprep.subr.mxu0 0.0
        %1694 = vmatpush2.msra.mxu0 0.0
        %1695 = vmatprep.subr.mxu0 0.0
        %1696 = vmatpush2.msra.mxu0 0.0
        %1697 = vmatprep.subr.mxu0 0.0
        %1698 = vmatpush2.msra.mxu0 0.0
        %1699 = vmatprep.subr.mxu0 0.0
        %1700 = vmatpush2.msra.mxu0 0.0
        %1701 = vmatprep.subr.mxu0 0.0
        %1702 = vmatpush2.msra.mxu0 0.0
        %1703 = vmatprep.subr.mxu0 0.0
        %1704 = vmatpush2.msra.mxu0 0.0
        %1705 = vmatprep.subr.mxu0 0.0
        %1706 = vmatpush2.msra.mxu0 0.0
        %1707 = vmatprep.subr.mxu0 0.0
        %1708 = vmatpush2.msra.mxu0 0.0
        %1709 = vmatprep.subr.mxu0 0.0
        %1710 = vmatpush2.msra.mxu0 0.0
        %1711 = vmatprep.mubr.f32.mxu0 0.0
        %1712 = vmatmul.mubr.f32.gmra.mxu0 %v1639
        %v1713 = vpop.f32.mrf.mxu0
        %v1714 = vadd.f32 %v1637, %v1713
        %v1715 = vpop.f32.mrf.mxu0
        %1716 = vmatprep.mubr.f32.mxu0 0.0
        %1717 = vmatmul.mubr.f32.gmra.mxu0 %v1642
        %v1718 = vpop.f32.mrf.mxu0
        %v1719 = vadd.f32 %v1637, %v1718
        %v1720 = vpop.f32.mrf.mxu0
        %1721 = vmatprep.mubr.f32.mxu0 0.0
        %1722 = vmatmul.mubr.f32.gmra.mxu0 %v1645
        %v1723 = vpop.f32.mrf.mxu0
        %v1724 = vadd.f32 %v1637, %v1723
        %v1725 = vpop.f32.mrf.mxu0
        %1726 = vdwg.mxu0
        %v1727 = vmul.f32 %v1714, -1.702
        %v1728 = vmul.f32 %v1719, -1.702
        %v1729 = vmul.f32 %v1724, -1.702
        %v1730 = vmul.f32 %v1727, 1.442695
        %v1731 = vpow.pop %v1730
        %v1732 = vmul.f32 %v1728, 1.442695
        %v1733 = vpow.pop %v1732
        %v1734 = vmul.f32 %v1729, 1.442695
        %v1735 = vpow.pop %v1734
        %v1736 = vadd.f32 %v1731, 1.0
        %v1737 = vadd.f32 %v1733, 1.0
        %v1738 = vadd.f32 %v1735, 1.0
        %v1739 = vrcp.pop %v1736
        %v1740 = vrcp.pop %v1737
        %v1741 = vrcp.pop %v1738
        %v1742 = vmul.f32 %v1714, %v1739
        %v1743 = vmul.f32 %v1719, %v1740
        %v1744 = vmul.f32 %v1724, %v1741
        %v1745 = vld [vmem:[%s2 + $0x1b8] sm:$0xff]
        %v1746 = vld [vmem:[%s2 + $0x1c0] sm:$0xff]
        %v1747 = vld [vmem:[%s2 + $0x1c8] sm:$0xff]
        %v1748 = vld [vmem:[%s2 + $0x1d0] sm:$0xff]
        %v1749 = vld [vmem:[%s2 + $0x1d8] sm:$0xff]
        %v1750 = vld [vmem:[%s2 + $0x1e0] sm:$0xff]
        %v1751 = vld [vmem:[%s2 + $0x1e8] sm:$0xff]
        %v1752 = vld [vmem:[%s2 + $0x1f0] sm:$0xff]
        %vm1753 = vcmask 523264
        %v1755 = vsel %vm1753, %v1742, 0
        %v1758 = vsel %vm1753, %v1743, 0
        %v1761 = vsel %vm1753, %v1744, 0
        %1763 = vmatprep.subr.mxu0 0.0
        %1764 = vmatpush1.msra.mxu0 0.0
        %1765 = vmatprep.subr.mxu0 0.0
        %1766 = vmatpush1.msra.mxu0 0.0
        %1767 = vmatprep.subr.mxu0 0.0
        %1768 = vmatpush1.msra.mxu0 0.0
        %1769 = vmatprep.subr.mxu0 0.0
        %1770 = vmatpush1.msra.mxu0 0.0
        %1771 = vmatprep.subr.mxu0 0.0
        %1772 = vmatpush1.msra.mxu0 0.0
        %1773 = vmatprep.subr.mxu0 0.0
        %1774 = vmatpush1.msra.mxu0 0.0
        %1775 = vmatprep.subr.mxu0 0.0
        %1776 = vmatpush1.msra.mxu0 0.0
        %1777 = vmatprep.subr.mxu0 0.0
        %1778 = vmatpush1.msra.mxu0 0.0
        %1779 = vmatprep.subr.mxu0 0.0
        %1780 = vmatpush1.msra.mxu0 %v1752
        %1781 = vmatprep.subr.mxu0 0.0
        %1782 = vmatpush1.msra.mxu0 %v1751
        %1783 = vmatprep.subr.mxu0 0.0
        %1784 = vmatpush1.msra.mxu0 %v1750
        %1785 = vmatprep.subr.mxu0 0.0
        %1786 = vmatpush1.msra.mxu0 %v1749
        %1787 = vmatprep.subr.mxu0 0.0
        %1788 = vmatpush1.msra.mxu0 %v1748
        %1789 = vmatprep.subr.mxu0 0.0
        %1790 = vmatpush1.msra.mxu0 %v1747
        %1791 = vmatprep.subr.mxu0 0.0
        %1792 = vmatpush1.msra.mxu0 %v1746
        %1793 = vmatprep.subr.mxu0 0.0
        %1794 = vmatpush1.msra.mxu0 %v1745
        %1795 = vmatprep.subr.mxu0 0.0
        %1796 = vmatpush2.msra.mxu0 0.0
        %1797 = vmatprep.subr.mxu0 0.0
        %1798 = vmatpush2.msra.mxu0 0.0
        %1799 = vmatprep.subr.mxu0 0.0
        %1800 = vmatpush2.msra.mxu0 0.0
        %1801 = vmatprep.subr.mxu0 0.0
        %1802 = vmatpush2.msra.mxu0 0.0
        %1803 = vmatprep.subr.mxu0 0.0
        %1804 = vmatpush2.msra.mxu0 0.0
        %1805 = vmatprep.subr.mxu0 0.0
        %1806 = vmatpush2.msra.mxu0 0.0
        %1807 = vmatprep.subr.mxu0 0.0
        %1808 = vmatpush2.msra.mxu0 0.0
        %1809 = vmatprep.subr.mxu0 0.0
        %1810 = vmatpush2.msra.mxu0 0.0
        %1811 = vmatprep.subr.mxu0 0.0
        %1812 = vmatpush2.msra.mxu0 0.0
        %1813 = vmatprep.subr.mxu0 0.0
        %1814 = vmatpush2.msra.mxu0 0.0
        %1815 = vmatprep.subr.mxu0 0.0
        %1816 = vmatpush2.msra.mxu0 0.0
        %1817 = vmatprep.subr.mxu0 0.0
        %1818 = vmatpush2.msra.mxu0 0.0
        %1819 = vmatprep.subr.mxu0 0.0
        %1820 = vmatpush2.msra.mxu0 0.0
        %1821 = vmatprep.subr.mxu0 0.0
        %1822 = vmatpush2.msra.mxu0 0.0
        %1823 = vmatprep.subr.mxu0 0.0
        %1824 = vmatpush2.msra.mxu0 0.0
        %1825 = vmatprep.subr.mxu0 0.0
        %1826 = vmatpush2.msra.mxu0 0.0
        %1827 = vmatprep.mubr.f32.mxu0 0.0
        %1828 = vmatmul.mubr.f32.gmra.mxu0 %v1755
        %v1829 = vpop.f32.mrf.mxu0
        %v1830 = vadd.f32 0.0, %v1829
        %v1831 = vpop.f32.mrf.mxu0
        %1832 = vmatprep.mubr.f32.mxu0 0.0
        %1833 = vmatmul.mubr.f32.gmra.mxu0 %v1758
        %v1834 = vpop.f32.mrf.mxu0
        %v1835 = vpop.f32.mrf.mxu0
        %1836 = vmatprep.mubr.f32.mxu0 0.0
        %1837 = vmatmul.mubr.f32.gmra.mxu0 %v1761
        %v1838 = vpop.f32.mrf.mxu0
        %v1839 = vpop.f32.mrf.mxu0
        %1840 = vdwg.mxu0
        %v1841 = vadd.f32 %v1571, %v1830
        %v1842 = vld [vmem:[%s2 + $0x1f8] sm:$0x1]
        %v1843 = vlaneseq
        %v1844 = vshrl.u32 %v1843, 7
        %v1845 = vsub.s32 0, %v1844
        %v1846 = vrot.slane %v1842, %v1845
        %v1847 = vadd.f32 %v1841, %v1846
        %v1848 = vld [vmem:[%s2 + $0x200] sm:$0x1]
        %v1849 = vld [vmem:[%s2 + $0x208] sm:$0x1]
        %vm1850 = vcmask 253952
        %v1851 = vsel %vm1850, %v1847, 0.0
        %1852 = vadd.xlane.f32.xlu0 %v1851
        %v1853 = vpop.xlane.xlu0 %1852
        %v1854 = vmul.f32 %v1853, %v292
        %v1855 = vsub.f32 %v1847, %v1854
        %v1856 = vmul.f32 %v1855, %v1855
        %v1857 = vsel %vm1850, %v1856, 0.0
        %1858 = vadd.xlane.f32.xlu0 %v1857
        %v1859 = vpop.xlane.xlu0 %1858
        %v1860 = vmul.f32 %v1859, %v292
        %v1861 = vadd.f32 %v1860, 1e-05
        %v1862 = vrsqrt.pop %v1861
        %v1863 = vmul.f32 %v1855, %v1862
        %v1864 = vmul.f32 %v1863, %v1848
        %v1865 = vadd.f32 %v1864, %v1849
        %v1866 = vld [vmem:[%s2 + $0x210] sm:$0xff]
        %v1867 = vld [vmem:[%s2 + $0x218] sm:$0xff]
        %v1868 = vld [vmem:[%s2 + $0x220] sm:$0xff]
        %v1869 = vld [vmem:[%s2 + $0x228] sm:$0xff]
        %v1871 = vsel %vm282, %v1865, 0
        %1873 = vmatprep.subr.mxu0 0.0
        %1874 = vmatpush1.msra.mxu0 0.0
        %1875 = vmatprep.subr.mxu0 0.0
        %1876 = vmatpush1.msra.mxu0 0.0
        %1877 = vmatprep.subr.mxu0 0.0
        %1878 = vmatpush1.msra.mxu0 0.0
        %1879 = vmatprep.subr.mxu0 0.0
        %1880 = vmatpush1.msra.mxu0 0.0
        %1881 = vmatprep.subr.mxu0 0.0
        %1882 = vmatpush1.msra.mxu0 0.0
        %1883 = vmatprep.subr.mxu0 0.0
        %1884 = vmatpush1.msra.mxu0 0.0
        %1885 = vmatprep.subr.mxu0 0.0
        %1886 = vmatpush1.msra.mxu0 0.0
        %1887 = vmatprep.subr.mxu0 0.0
        %1888 = vmatpush1.msra.mxu0 0.0
        %1889 = vmatprep.subr.mxu0 0.0
        %1890 = vmatpush1.msra.mxu0 0.0
        %1891 = vmatprep.subr.mxu0 0.0
        %1892 = vmatpush1.msra.mxu0 0.0
        %1893 = vmatprep.subr.mxu0 0.0
        %1894 = vmatpush1.msra.mxu0 0.0
        %1895 = vmatprep.subr.mxu0 0.0
        %1896 = vmatpush1.msra.mxu0 0.0
        %1897 = vmatprep.subr.mxu0 0.0
        %1898 = vmatpush1.msra.mxu0 %v1869
        %1899 = vmatprep.subr.mxu0 0.0
        %1900 = vmatpush1.msra.mxu0 %v1868
        %1901 = vmatprep.subr.mxu0 0.0
        %1902 = vmatpush1.msra.mxu0 %v1867
        %1903 = vmatprep.subr.mxu0 0.0
        %1904 = vmatpush1.msra.mxu0 %v1866
        %1905 = vmatprep.subr.mxu0 0.0
        %1906 = vmatpush2.msra.mxu0 0.0
        %1907 = vmatprep.subr.mxu0 0.0
        %1908 = vmatpush2.msra.mxu0 0.0
        %1909 = vmatprep.subr.mxu0 0.0
        %1910 = vmatpush2.msra.mxu0 0.0
        %1911 = vmatprep.subr.mxu0 0.0
        %1912 = vmatpush2.msra.mxu0 0.0
        %1913 = vmatprep.subr.mxu0 0.0
        %1914 = vmatpush2.msra.mxu0 0.0
        %1915 = vmatprep.subr.mxu0 0.0
        %1916 = vmatpush2.msra.mxu0 0.0
        %1917 = vmatprep.subr.mxu0 0.0
        %1918 = vmatpush2.msra.mxu0 0.0
        %1919 = vmatprep.subr.mxu0 0.0
        %1920 = vmatpush2.msra.mxu0 0.0
        %1921 = vmatprep.subr.mxu0 0.0
        %1922 = vmatpush2.msra.mxu0 0.0
        %1923 = vmatprep.subr.mxu0 0.0
        %1924 = vmatpush2.msra.mxu0 0.0
        %1925 = vmatprep.subr.mxu0 0.0
        %1926 = vmatpush2.msra.mxu0 0.0
        %1927 = vmatprep.subr.mxu0 0.0
        %1928 = vmatpush2.msra.mxu0 0.0
        %1929 = vmatprep.subr.mxu0 0.0
        %1930 = vmatpush2.msra.mxu0 0.0
        %1931 = vmatprep.subr.mxu0 0.0
        %1932 = vmatpush2.msra.mxu0 0.0
        %1933 = vmatprep.subr.mxu0 0.0
        %1934 = vmatpush2.msra.mxu0 0.0
        %1935 = vmatprep.subr.mxu0 0.0
        %1936 = vmatpush2.msra.mxu0 0.0
        %1937 = vmatprep.mubr.f32.mxu0 0.0
        %1938 = vmatmul.mubr.f32.gmra.mxu0 %v1871
        %v1939 = vpop.f32.mrf.mxu0
        %v1940 = vadd.f32 0.0, %v1939
        %v1941 = vpop.f32.mrf.mxu0
        %1942 = vdwg.mxu0
        %1943 = vst.msk [vmem:[%s173] sm:$0x1] %vm1850, %v1940
      $region40: #{forward.1} parent=35 // pred_fallthru
        _
      %p1944 = scmp.eq.s32.totalorder %s15, 1
      // Predicated region
      $region41: #{forward.1} parent=35 // pred_check
        %p1945 = pneg %p1944
      $region42: #{forward.1} parent=35 // pred_check_branch
        %1947 = sbr.rel (%p1945) target = $region44
      $region43: #{forward.1} parent=35 // pred_region
        %v1948 = vld [vmem:[%s1] sm:$0xff]
        %v1949 = vlaneseq
        %v1950 = vand.u32 %v1949, 127
        %1951 = vset.pattern.permute.xlu0 0
        %1952 = vperm.xlu0 %1951, %v1948
        %v1953 = vpop.permute.xlu0 %1952
        %vm1954 = vcmp.eq.s32.totalorder %v1950, %v1953
        %v1955 = vsel %vm1954, 1, 0
        %v1956 = vcvt.s32.f32 %v1955
        %v1957 = vld [vmem:[%s3 + $0x8] sm:$0xff]
        %v1958 = vld [vmem:[%s3 + $0x10] sm:$0xff]
        %v1959 = vld [vmem:[%s3 + $0x18] sm:$0xff]
        %v1960 = vld [vmem:[%s3 + $0x20] sm:$0xff]
        %v1961 = vld [vmem:[%s3 + $0x28] sm:$0xff]
        %v1962 = vld [vmem:[%s3 + $0x30] sm:$0xff]
        %v1963 = vld [vmem:[%s3 + $0x38] sm:$0xff]
        %v1964 = vld [vmem:[%s3 + $0x40] sm:$0xff]
        %v1965 = vld [vmem:[%s3] sm:$0xff]
        %vm1966 = vcmask 523264
        %v1968 = vsel %vm1966, %v1956, 0
        %1970 = vmatprep.subr.mxu0 0.0
        %1971 = vmatpush1.msra.mxu0 0.0
        %1972 = vmatprep.subr.mxu0 0.0
        %1973 = vmatpush1.msra.mxu0 0.0
        %1974 = vmatprep.subr.mxu0 0.0
        %1975 = vmatpush1.msra.mxu0 0.0
        %1976 = vmatprep.subr.mxu0 0.0
        %1977 = vmatpush1.msra.mxu0 0.0
        %1978 = vmatprep.subr.mxu0 0.0
        %1979 = vmatpush1.msra.mxu0 0.0
        %1980 = vmatprep.subr.mxu0 0.0
        %1981 = vmatpush1.msra.mxu0 0.0
        %1982 = vmatprep.subr.mxu0 0.0
        %1983 = vmatpush1.msra.mxu0 0.0
        %1984 = vmatprep.subr.mxu0 0.0
        %1985 = vmatpush1.msra.mxu0 0.0
        %1986 = vmatprep.subr.mxu0 0.0
        %1987 = vmatpush1.msra.mxu0 %v1964
        %1988 = vmatprep.subr.mxu0 0.0
        %1989 = vmatpush1.msra.mxu0 %v1963
        %1990 = vmatprep.subr.mxu0 0.0
        %1991 = vmatpush1.msra.mxu0 %v1962
        %1992 = vmatprep.subr.mxu0 0.0
        %1993 = vmatpush1.msra.mxu0 %v1961
        %1994 = vmatprep.subr.mxu0 0.0
        %1995 = vmatpush1.msra.mxu0 %v1960
        %1996 = vmatprep.subr.mxu0 0.0
        %1997 = vmatpush1.msra.mxu0 %v1959
        %1998 = vmatprep.subr.mxu0 0.0
        %1999 = vmatpush1.msra.mxu0 %v1958
        %2000 = vmatprep.subr.mxu0 0.0
        %2001 = vmatpush1.msra.mxu0 %v1957
        %2002 = vmatprep.subr.mxu0 0.0
        %2003 = vmatpush2.msra.mxu0 0.0
        %2004 = vmatprep.subr.mxu0 0.0
        %2005 = vmatpush2.msra.mxu0 0.0
        %2006 = vmatprep.subr.mxu0 0.0
        %2007 = vmatpush2.msra.mxu0 0.0
        %2008 = vmatprep.subr.mxu0 0.0
        %2009 = vmatpush2.msra.mxu0 0.0
        %2010 = vmatprep.subr.mxu0 0.0
        %2011 = vmatpush2.msra.mxu0 0.0
        %2012 = vmatprep.subr.mxu0 0.0
        %2013 = vmatpush2.msra.mxu0 0.0
        %2014 = vmatprep.subr.mxu0 0.0
        %2015 = vmatpush2.msra.mxu0 0.0
        %2016 = vmatprep.subr.mxu0 0.0
        %2017 = vmatpush2.msra.mxu0 0.0
        %2018 = vmatprep.subr.mxu0 0.0
        %2019 = vmatpush2.msra.mxu0 0.0
        %2020 = vmatprep.subr.mxu0 0.0
        %2021 = vmatpush2.msra.mxu0 0.0
        %2022 = vmatprep.subr.mxu0 0.0
        %2023 = vmatpush2.msra.mxu0 0.0
        %2024 = vmatprep.subr.mxu0 0.0
        %2025 = vmatpush2.msra.mxu0 0.0
        %2026 = vmatprep.subr.mxu0 0.0
        %2027 = vmatpush2.msra.mxu0 0.0
        %2028 = vmatprep.subr.mxu0 0.0
        %2029 = vmatpush2.msra.mxu0 0.0
        %2030 = vmatprep.subr.mxu0 0.0
        %2031 = vmatpush2.msra.mxu0 0.0
        %2032 = vmatprep.subr.mxu0 0.0
        %2033 = vmatpush2.msra.mxu0 0.0
        %2034 = vmatprep.mubr.f32.mxu0 0.0
        %2035 = vmatmul.mubr.f32.gmra.mxu0 %v1968
        %v2036 = vpop.f32.mrf.mxu0
        %v2037 = vadd.f32 %v1965, %v2036
        %v2038 = vpop.f32.mrf.mxu0
        %2039 = vdwg.mxu0
        %v2040 = vlaneseq
        %v2041 = vshrl.u32 %v2040, 7
        %vm2042 = vcmp.le.s32.totalorder %v1950, %v2041
        %v2043 = vsel %vm2042, 0.0, -1e+09
        %v2044 = vld [vmem:[%s3 + $0x48] sm:$0x1]
        %v2045 = vld [vmem:[%s3 + $0x50] sm:$0x1]
        %vm2046 = vcmask 261120
        %v2047 = vsel %vm2046, %v2037, 0.0
        %2048 = vadd.xlane.f32.xlu0 %v2047
        %v2049 = vpop.xlane.xlu0 %2048
        %v2050 = vrcp.pop 32.0
        %v2051 = vmul.f32 %v2049, %v2050
        %v2052 = vsub.f32 %v2037, %v2051
        %v2053 = vmul.f32 %v2052, %v2052
        %v2054 = vsel %vm2046, %v2053, 0.0
        %2055 = vadd.xlane.f32.xlu0 %v2054
        %v2056 = vpop.xlane.xlu0 %2055
        %v2057 = vmul.f32 %v2056, %v2050
        %v2058 = vadd.f32 %v2057, 1e-05
        %v2059 = vrsqrt.pop %v2058
        %v2060 = vmul.f32 %v2052, %v2059
        %v2061 = vlaneseq
        %v2062 = vshrl.u32 %v2061, 7
        %v2063 = vsub.s32 0, %v2062
        %v2064 = vrot.slane %v2044, %v2063
        %v2065 = vmul.f32 %v2060, %v2064
        %v2066 = vlaneseq
        %v2067 = vshrl.u32 %v2066, 7
        %v2068 = vsub.s32 0, %v2067
        %v2069 = vrot.slane %v2045, %v2068
        %v2070 = vadd.f32 %v2065, %v2069
        %v2071 = vld [vmem:[%s3 + $0x58] sm:$0xff]
        %v2072 = vld [vmem:[%s3 + $0x60] sm:$0xff]
        %v2073 = vld [vmem:[%s3 + $0x68] sm:$0xff]
        %v2074 = vld [vmem:[%s3 + $0x70] sm:$0xff]
        %v2075 = vld [vmem:[%s3 + $0xb8] sm:$0x1]
        %v2076 = vlaneseq
        %v2077 = vshrl.u32 %v2076, 7
        %v2078 = vsub.s32 0, %v2077
        %v2079 = vrot.slane %v2075, %v2078
        %v2081 = vsel %vm2046, %v2070, 0
        %2083 = vmatprep.subr.mxu0 0.0
        %2084 = vmatpush1.msra.mxu0 0.0
        %2085 = vmatprep.subr.mxu0 0.0
        %2086 = vmatpush1.msra.mxu0 0.0
        %2087 = vmatprep.subr.mxu0 0.0
        %2088 = vmatpush1.msra.mxu0 0.0
        %2089 = vmatprep.subr.mxu0 0.0
        %2090 = vmatpush1.msra.mxu0 0.0
        %2091 = vmatprep.subr.mxu0 0.0
        %2092 = vmatpush1.msra.mxu0 0.0
        %2093 = vmatprep.subr.mxu0 0.0
        %2094 = vmatpush1.msra.mxu0 0.0
        %2095 = vmatprep.subr.mxu0 0.0
        %2096 = vmatpush1.msra.mxu0 0.0
        %2097 = vmatprep.subr.mxu0 0.0
        %2098 = vmatpush1.msra.mxu0 0.0
        %2099 = vmatprep.subr.mxu0 0.0
        %2100 = vmatpush1.msra.mxu0 0.0
        %2101 = vmatprep.subr.mxu0 0.0
        %2102 = vmatpush1.msra.mxu0 0.0
        %2103 = vmatprep.subr.mxu0 0.0
        %2104 = vmatpush1.msra.mxu0 0.0
        %2105 = vmatprep.subr.mxu0 0.0
        %2106 = vmatpush1.msra.mxu0 0.0
        %2107 = vmatprep.subr.mxu0 0.0
        %2108 = vmatpush1.msra.mxu0 %v2074
        %2109 = vmatprep.subr.mxu0 0.0
        %2110 = vmatpush1.msra.mxu0 %v2073
        %2111 = vmatprep.subr.mxu0 0.0
        %2112 = vmatpush1.msra.mxu0 %v2072
        %2113 = vmatprep.subr.mxu0 0.0
        %2114 = vmatpush1.msra.mxu0 %v2071
        %2115 = vmatprep.subr.mxu0 0.0
        %2116 = vmatpush2.msra.mxu0 0.0
        %2117 = vmatprep.subr.mxu0 0.0
        %2118 = vmatpush2.msra.mxu0 0.0
        %2119 = vmatprep.subr.mxu0 0.0
        %2120 = vmatpush2.msra.mxu0 0.0
        %2121 = vmatprep.subr.mxu0 0.0
        %2122 = vmatpush2.msra.mxu0 0.0
        %2123 = vmatprep.subr.mxu0 0.0
        %2124 = vmatpush2.msra.mxu0 0.0
        %2125 = vmatprep.subr.mxu0 0.0
        %2126 = vmatpush2.msra.mxu0 0.0
        %2127 = vmatprep.subr.mxu0 0.0
        %2128 = vmatpush2.msra.mxu0 0.0
        %2129 = vmatprep.subr.mxu0 0.0
        %2130 = vmatpush2.msra.mxu0 0.0
        %2131 = vmatprep.subr.mxu0 0.0
        %2132 = vmatpush2.msra.mxu0 0.0
        %2133 = vmatprep.subr.mxu0 0.0
        %2134 = vmatpush2.msra.mxu0 0.0
        %2135 = vmatprep.subr.mxu0 0.0
        %2136 = vmatpush2.msra.mxu0 0.0
        %2137 = vmatprep.subr.mxu0 0.0
        %2138 = vmatpush2.msra.mxu0 0.0
        %2139 = vmatprep.subr.mxu0 0.0
        %2140 = vmatpush2.msra.mxu0 0.0
        %2141 = vmatprep.subr.mxu0 0.0
        %2142 = vmatpush2.msra.mxu0 0.0
        %2143 = vmatprep.subr.mxu0 0.0
        %2144 = vmatpush2.msra.mxu0 0.0
        %2145 = vmatprep.subr.mxu0 0.0
        %2146 = vmatpush2.msra.mxu0 0.0
        %2147 = vmatprep.mubr.f32.mxu0 0.0
        %2148 = vmatmul.mubr.f32.gmra.mxu0 %v2081
        %v2149 = vpop.f32.mrf.mxu0
        %v2150 = vadd.f32 %v2079, %v2149
        %v2151 = vpop.f32.mrf.mxu0
        %2152 = vdwg.mxu0
        %v2153 = vld [vmem:[%s3 + $0x78] sm:$0xff]
        %v2154 = vld [vmem:[%s3 + $0x80] sm:$0xff]
        %v2155 = vld [vmem:[%s3 + $0x88] sm:$0xff]
        %v2156 = vld [vmem:[%s3 + $0x90] sm:$0xff]
        %v2157 = vld [vmem:[%s3 + $0xc0] sm:$0x1]
        %v2158 = vlaneseq
        %v2159 = vshrl.u32 %v2158, 7
        %v2160 = vsub.s32 0, %v2159
        %v2161 = vrot.slane %v2157, %v2160
        %2162 = vmatprep.subr.mxu0 0.0
        %2163 = vmatpush1.msra.mxu0 0.0
        %2164 = vmatprep.subr.mxu0 0.0
        %2165 = vmatpush1.msra.mxu0 0.0
        %2166 = vmatprep.subr.mxu0 0.0
        %2167 = vmatpush1.msra.mxu0 0.0
        %2168 = vmatprep.subr.mxu0 0.0
        %2169 = vmatpush1.msra.mxu0 0.0
        %2170 = vmatprep.subr.mxu0 0.0
        %2171 = vmatpush1.msra.mxu0 0.0
        %2172 = vmatprep.subr.mxu0 0.0
        %2173 = vmatpush1.msra.mxu0 0.0
        %2174 = vmatprep.subr.mxu0 0.0
        %2175 = vmatpush1.msra.mxu0 0.0
        %2176 = vmatprep.subr.mxu0 0.0
        %2177 = vmatpush1.msra.mxu0 0.0
        %2178 = vmatprep.subr.mxu0 0.0
        %2179 = vmatpush1.msra.mxu0 0.0
        %2180 = vmatprep.subr.mxu0 0.0
        %2181 = vmatpush1.msra.mxu0 0.0
        %2182 = vmatprep.subr.mxu0 0.0
        %2183 = vmatpush1.msra.mxu0 0.0
        %2184 = vmatprep.subr.mxu0 0.0
        %2185 = vmatpush1.msra.mxu0 0.0
        %2186 = vmatprep.subr.mxu0 0.0
        %2187 = vmatpush1.msra.mxu0 %v2156
        %2188 = vmatprep.subr.mxu0 0.0
        %2189 = vmatpush1.msra.mxu0 %v2155
        %2190 = vmatprep.subr.mxu0 0.0
        %2191 = vmatpush1.msra.mxu0 %v2154
        %2192 = vmatprep.subr.mxu0 0.0
        %2193 = vmatpush1.msra.mxu0 %v2153
        %2194 = vmatprep.subr.mxu0 0.0
        %2195 = vmatpush2.msra.mxu0 0.0
        %2196 = vmatprep.subr.mxu0 0.0
        %2197 = vmatpush2.msra.mxu0 0.0
        %2198 = vmatprep.subr.mxu0 0.0
        %2199 = vmatpush2.msra.mxu0 0.0
        %2200 = vmatprep.subr.mxu0 0.0
        %2201 = vmatpush2.msra.mxu0 0.0
        %2202 = vmatprep.subr.mxu0 0.0
        %2203 = vmatpush2.msra.mxu0 0.0
        %2204 = vmatprep.subr.mxu0 0.0
        %2205 = vmatpush2.msra.mxu0 0.0
        %2206 = vmatprep.subr.mxu0 0.0
        %2207 = vmatpush2.msra.mxu0 0.0
        %2208 = vmatprep.subr.mxu0 0.0
        %2209 = vmatpush2.msra.mxu0 0.0
        %2210 = vmatprep.subr.mxu0 0.0
        %2211 = vmatpush2.msra.mxu0 0.0
        %2212 = vmatprep.subr.mxu0 0.0
        %2213 = vmatpush2.msra.mxu0 0.0
        %2214 = vmatprep.subr.mxu0 0.0
        %2215 = vmatpush2.msra.mxu0 0.0
        %2216 = vmatprep.subr.mxu0 0.0
        %2217 = vmatpush2.msra.mxu0 0.0
        %2218 = vmatprep.subr.mxu0 0.0
        %2219 = vmatpush2.msra.mxu0 0.0
        %2220 = vmatprep.subr.mxu0 0.0
        %2221 = vmatpush2.msra.mxu0 0.0
        %2222 = vmatprep.subr.mxu0 0.0
        %2223 = vmatpush2.msra.mxu0 0.0
        %2224 = vmatprep.subr.mxu0 0.0
        %2225 = vmatpush2.msra.mxu0 0.0
        %2226 = vmatprep.mubr.f32.mxu0 0.0
        %2227 = vmatmul.mubr.f32.gmra.mxu0 %v2081
        %v2228 = vpop.f32.mrf.mxu0
        %v2229 = vadd.f32 %v2161, %v2228
        %v2230 = vpop.f32.mrf.mxu0
        %2231 = vdwg.mxu0
        %v2232 = vld [vmem:[%s3 + $0x98] sm:$0xff]
        %v2233 = vld [vmem:[%s3 + $0xa0] sm:$0xff]
        %v2234 = vld [vmem:[%s3 + $0xa8] sm:$0xff]
        %v2235 = vld [vmem:[%s3 + $0xb0] sm:$0xff]
        %v2236 = vld [vmem:[%s3 + $0xc8] sm:$0x1]
        %v2237 = vlaneseq
        %v2238 = vshrl.u32 %v2237, 7
        %v2239 = vsub.s32 0, %v2238
        %v2240 = vrot.slane %v2236, %v2239
        %2241 = vmatprep.subr.mxu0 0.0
        %2242 = vmatpush1.msra.mxu0 0.0
        %2243 = vmatprep.subr.mxu0 0.0
        %2244 = vmatpush1.msra.mxu0 0.0
        %2245 = vmatprep.subr.mxu0 0.0
        %2246 = vmatpush1.msra.mxu0 0.0
        %2247 = vmatprep.subr.mxu0 0.0
        %2248 = vmatpush1.msra.mxu0 0.0
        %2249 = vmatprep.subr.mxu0 0.0
        %2250 = vmatpush1.msra.mxu0 0.0
        %2251 = vmatprep.subr.mxu0 0.0
        %2252 = vmatpush1.msra.mxu0 0.0
        %2253 = vmatprep.subr.mxu0 0.0
        %2254 = vmatpush1.msra.mxu0 0.0
        %2255 = vmatprep.subr.mxu0 0.0
        %2256 = vmatpush1.msra.mxu0 0.0
        %2257 = vmatprep.subr.mxu0 0.0
        %2258 = vmatpush1.msra.mxu0 0.0
        %2259 = vmatprep.subr.mxu0 0.0
        %2260 = vmatpush1.msra.mxu0 0.0
        %2261 = vmatprep.subr.mxu0 0.0
        %2262 = vmatpush1.msra.mxu0 0.0
        %2263 = vmatprep.subr.mxu0 0.0
        %2264 = vmatpush1.msra.mxu0 0.0
        %2265 = vmatprep.subr.mxu0 0.0
        %2266 = vmatpush1.msra.mxu0 %v2235
        %2267 = vmatprep.subr.mxu0 0.0
        %2268 = vmatpush1.msra.mxu0 %v2234
        %2269 = vmatprep.subr.mxu0 0.0
        %2270 = vmatpush1.msra.mxu0 %v2233
        %2271 = vmatprep.subr.mxu0 0.0
        %2272 = vmatpush1.msra.mxu0 %v2232
        %2273 = vmatprep.subr.mxu0 0.0
        %2274 = vmatpush2.msra.mxu0 0.0
        %2275 = vmatprep.subr.mxu0 0.0
        %2276 = vmatpush2.msra.mxu0 0.0
        %2277 = vmatprep.subr.mxu0 0.0
        %2278 = vmatpush2.msra.mxu0 0.0
        %2279 = vmatprep.subr.mxu0 0.0
        %2280 = vmatpush2.msra.mxu0 0.0
        %2281 = vmatprep.subr.mxu0 0.0
        %2282 = vmatpush2.msra.mxu0 0.0
        %2283 = vmatprep.subr.mxu0 0.0
        %2284 = vmatpush2.msra.mxu0 0.0
        %2285 = vmatprep.subr.mxu0 0.0
        %2286 = vmatpush2.msra.mxu0 0.0
        %2287 = vmatprep.subr.mxu0 0.0
        %2288 = vmatpush2.msra.mxu0 0.0
        %2289 = vmatprep.subr.mxu0 0.0
        %2290 = vmatpush2.msra.mxu0 0.0
        %2291 = vmatprep.subr.mxu0 0.0
        %2292 = vmatpush2.msra.mxu0 0.0
        %2293 = vmatprep.subr.mxu0 0.0
        %2294 = vmatpush2.msra.mxu0 0.0
        %2295 = vmatprep.subr.mxu0 0.0
        %2296 = vmatpush2.msra.mxu0 0.0
        %2297 = vmatprep.subr.mxu0 0.0
        %2298 = vmatpush2.msra.mxu0 0.0
        %2299 = vmatprep.subr.mxu0 0.0
        %2300 = vmatpush2.msra.mxu0 0.0
        %2301 = vmatprep.subr.mxu0 0.0
        %2302 = vmatpush2.msra.mxu0 0.0
        %2303 = vmatprep.subr.mxu0 0.0
        %2304 = vmatpush2.msra.mxu0 0.0
        %2305 = vmatprep.mubr.f32.mxu0 0.0
        %2306 = vmatmul.mubr.f32.gmra.mxu0 %v2081
        %v2307 = vpop.f32.mrf.mxu0
        %v2308 = vadd.f32 %v2240, %v2307
        %v2309 = vpop.f32.mrf.mxu0
        %2310 = vdwg.mxu0
        %vm2311 = vcmask 130048
        %v2313 = vsel %vm2311, %v2150, 0
        %v2316 = vsel %vm2311, %v2229, 0
        %2318 = vmatprep.subr.mxu0 0.0
        %2319 = vmatpush1.xpose.msra.mxu0 0.0
        %2320 = vmatprep.subr.mxu0 0.0
        %2321 = vmatpush1.xpose.msra.mxu0 0.0
        %2322 = vmatprep.subr.mxu0 0.0
        %2323 = vmatpush1.xpose.msra.mxu0 0.0
        %2324 = vmatprep.subr.mxu0 0.0
        %2325 = vmatpush1.xpose.msra.mxu0 0.0
        %2326 = vmatprep.subr.mxu0 0.0
        %2327 = vmatpush1.xpose.msra.mxu0 0.0
        %2328 = vmatprep.subr.mxu0 0.0
        %2329 = vmatpush1.xpose.msra.mxu0 0.0
        %2330 = vmatprep.subr.mxu0 0.0
        %2331 = vmatpush1.xpose.msra.mxu0 0.0
        %2332 = vmatprep.subr.mxu0 0.0
        %2333 = vmatpush1.xpose.msra.mxu0 0.0
        %2334 = vmatprep.subr.mxu0 0.0
        %2335 = vmatpush1.xpose.msra.mxu0 0.0
        %2336 = vmatprep.subr.mxu0 0.0
        %2337 = vmatpush1.xpose.msra.mxu0 0.0
        %2338 = vmatprep.subr.mxu0 0.0
        %2339 = vmatpush1.xpose.msra.mxu0 0.0
        %2340 = vmatprep.subr.mxu0 0.0
        %2341 = vmatpush1.xpose.msra.mxu0 0.0
        %2342 = vmatprep.subr.mxu0 0.0
        %2343 = vmatpush1.xpose.msra.mxu0 0.0
        %2344 = vmatprep.subr.mxu0 0.0
        %2345 = vmatpush1.xpose.msra.mxu0 0.0
        %2346 = vmatprep.subr.mxu0 0.0
        %2347 = vmatpush1.xpose.msra.mxu0 0.0
        %2348 = vmatprep.subr.mxu0 0.0
        %2349 = vmatpush1.xpose.msra.mxu0 %v2316
        %2350 = vmatprep.subr.mxu0 0.0
        %2351 = vmatpush2.xpose.msra.mxu0 0.0
        %2352 = vmatprep.subr.mxu0 0.0
        %2353 = vmatpush2.xpose.msra.mxu0 0.0
        %2354 = vmatprep.subr.mxu0 0.0
        %2355 = vmatpush2.xpose.msra.mxu0 0.0
        %2356 = vmatprep.subr.mxu0 0.0
        %2357 = vmatpush2.xpose.msra.mxu0 0.0
        %2358 = vmatprep.subr.mxu0 0.0
        %2359 = vmatpush2.xpose.msra.mxu0 0.0
        %2360 = vmatprep.subr.mxu0 0.0
        %2361 = vmatpush2.xpose.msra.mxu0 0.0
        %2362 = vmatprep.subr.mxu0 0.0
        %2363 = vmatpush2.xpose.msra.mxu0 0.0
        %2364 = vmatprep.subr.mxu0 0.0
        %2365 = vmatpush2.xpose.msra.mxu0 0.0
        %2366 = vmatprep.subr.mxu0 0.0
        %2367 = vmatpush2.xpose.msra.mxu0 0.0
        %2368 = vmatprep.subr.mxu0 0.0
        %2369 = vmatpush2.xpose.msra.mxu0 0.0
        %2370 = vmatprep.subr.mxu0 0.0
        %2371 = vmatpush2.xpose.msra.mxu0 0.0
        %2372 = vmatprep.subr.mxu0 0.0
        %2373 = vmatpush2.xpose.msra.mxu0 0.0
        %2374 = vmatprep.subr.mxu0 0.0
        %2375 = vmatpush2.xpose.msra.mxu0 0.0
        %2376 = vmatprep.subr.mxu0 0.0
        %2377 = vmatpush2.xpose.msra.mxu0 0.0
        %2378 = vmatprep.subr.mxu0 0.0
        %2379 = vmatpush2.xpose.msra.mxu0 0.0
        %2380 = vmatprep.subr.mxu0 0.0
        %2381 = vmatpush2.xpose.msra.mxu0 0.0
        %2382 = vmatprep.mubr.f32.mxu0 0.0
        %2383 = vmatmul.mubr.f32.gmra.mxu0 %v2313
        %v2384 = vpop.f32.mrf.mxu0
        %v2385 = vadd.f32 %v2043, %v2384
        %v2386 = vpop.f32.mrf.mxu0
        %2387 = vdwg.mxu0
        %vm2388 = vcmask 64512
        %v2389 = vsel %vm2388, %v2385, -inf
        %2390 = vmax.xlane.f32.xlu0 %v2389
        %v2391 = vpop.xlane.xlu0 %2390
        %v2392 = vsub.f32 %v2385, %v2391
        %v2393 = vmul.f32 %v2392, 1.442695
        %v2394 = vpow.pop %v2393
        %v2395 = vsel %vm2388, %v2394, 0.0
        %2396 = vadd.xlane.f32.xlu0 %v2395
        %v2397 = vpop.xlane.xlu0 %2396
        %v2398 = vrcp.pop %v2397
        %v2399 = vmul.f32 %v2394, %v2398
        %v2401 = vsel %vm2388, %v2399, 0
        %2403 = vmatprep.subr.mxu0 0.0
        %2404 = vmatpush1.msra.mxu0 0.0
        %2405 = vmatprep.subr.mxu0 0.0
        %2406 = vmatpush1.msra.mxu0 0.0
        %2407 = vmatprep.subr.mxu0 0.0
        %2408 = vmatpush1.msra.mxu0 0.0
        %2409 = vmatprep.subr.mxu0 0.0
        %2410 = vmatpush1.msra.mxu0 0.0
        %2411 = vmatprep.subr.mxu0 0.0
        %2412 = vmatpush1.msra.mxu0 0.0
        %2413 = vmatprep.subr.mxu0 0.0
        %2414 = vmatpush1.msra.mxu0 0.0
        %2415 = vmatprep.subr.mxu0 0.0
        %2416 = vmatpush1.msra.mxu0 0.0
        %2417 = vmatprep.subr.mxu0 0.0
        %2418 = vmatpush1.msra.mxu0 0.0
        %2419 = vmatprep.subr.mxu0 0.0
        %2420 = vmatpush1.msra.mxu0 0.0
        %2421 = vmatprep.subr.mxu0 0.0
        %2422 = vmatpush1.msra.mxu0 0.0
        %2423 = vmatprep.subr.mxu0 0.0
        %2424 = vmatpush1.msra.mxu0 0.0
        %2425 = vmatprep.subr.mxu0 0.0
        %2426 = vmatpush1.msra.mxu0 0.0
        %2427 = vmatprep.subr.mxu0 0.0
        %2428 = vmatpush1.msra.mxu0 0.0
        %2429 = vmatprep.subr.mxu0 0.0
        %2430 = vmatpush1.msra.mxu0 0.0
        %2431 = vmatprep.subr.mxu0 0.0
        %2432 = vmatpush1.msra.mxu0 0.0
        %2433 = vmatprep.subr.mxu0 0.0
        %2434 = vmatpush1.msra.mxu0 %v2308
        %2435 = vmatprep.subr.mxu0 0.0
        %2436 = vmatpush2.msra.mxu0 0.0
        %2437 = vmatprep.subr.mxu0 0.0
        %2438 = vmatpush2.msra.mxu0 0.0
        %2439 = vmatprep.subr.mxu0 0.0
        %2440 = vmatpush2.msra.mxu0 0.0
        %2441 = vmatprep.subr.mxu0 0.0
        %2442 = vmatpush2.msra.mxu0 0.0
        %2443 = vmatprep.subr.mxu0 0.0
        %2444 = vmatpush2.msra.mxu0 0.0
        %2445 = vmatprep.subr.mxu0 0.0
        %2446 = vmatpush2.msra.mxu0 0.0
        %2447 = vmatprep.subr.mxu0 0.0
        %2448 = vmatpush2.msra.mxu0 0.0
        %2449 = vmatprep.subr.mxu0 0.0
        %2450 = vmatpush2.msra.mxu0 0.0
        %2451 = vmatprep.subr.mxu0 0.0
        %2452 = vmatpush2.msra.mxu0 0.0
        %2453 = vmatprep.subr.mxu0 0.0
        %2454 = vmatpush2.msra.mxu0 0.0
        %2455 = vmatprep.subr.mxu0 0.0
        %2456 = vmatpush2.msra.mxu0 0.0
        %2457 = vmatprep.subr.mxu0 0.0
        %2458 = vmatpush2.msra.mxu0 0.0
        %2459 = vmatprep.subr.mxu0 0.0
        %2460 = vmatpush2.msra.mxu0 0.0
        %2461 = vmatprep.subr.mxu0 0.0
        %2462 = vmatpush2.msra.mxu0 0.0
        %2463 = vmatprep.subr.mxu0 0.0
        %2464 = vmatpush2.msra.mxu0 0.0
        %2465 = vmatprep.subr.mxu0 0.0
        %2466 = vmatpush2.msra.mxu0 0.0
        %2467 = vmatprep.mubr.f32.mxu0 0.0
        %2468 = vmatmul.mubr.f32.gmra.mxu0 %v2401
        %v2469 = vpop.f32.mrf.mxu0
        %v2470 = vadd.f32 0.0, %v2469
        %v2471 = vpop.f32.mrf.mxu0
        %2472 = vdwg.mxu0
        %v2473 = vld [vmem:[%s3 + $0xd0] sm:$0xff]
        %v2474 = vld [vmem:[%s3 + $0xd8] sm:$0xff]
        %v2475 = vld [vmem:[%s3 + $0xe0] sm:$0xff]
        %v2476 = vld [vmem:[%s3 + $0xe8] sm:$0xff]
        %v2477 = vld [vmem:[%s3 + $0xf0] sm:$0xff]
        %v2478 = vld [vmem:[%s3 + $0xf8] sm:$0xff]
        %v2479 = vld [vmem:[%s3 + $0x140] sm:$0x1]
        %v2480 = vlaneseq
        %v2481 = vshrl.u32 %v2480, 7
        %v2482 = vsub.s32 0, %v2481
        %v2483 = vrot.slane %v2479, %v2482
        %2484 = vmatprep.subr.mxu0 0.0
        %2485 = vmatpush1.msra.mxu0 0.0
        %2486 = vmatprep.subr.mxu0 0.0
        %2487 = vmatpush1.msra.mxu0 0.0
        %2488 = vmatprep.subr.mxu0 0.0
        %2489 = vmatpush1.msra.mxu0 0.0
        %2490 = vmatprep.subr.mxu0 0.0
        %2491 = vmatpush1.msra.mxu0 0.0
        %2492 = vmatprep.subr.mxu0 0.0
        %2493 = vmatpush1.msra.mxu0 0.0
        %2494 = vmatprep.subr.mxu0 0.0
        %2495 = vmatpush1.msra.mxu0 0.0
        %2496 = vmatprep.subr.mxu0 0.0
        %2497 = vmatpush1.msra.mxu0 0.0
        %2498 = vmatprep.subr.mxu0 0.0
        %2499 = vmatpush1.msra.mxu0 0.0
        %2500 = vmatprep.subr.mxu0 0.0
        %2501 = vmatpush1.msra.mxu0 0.0
        %2502 = vmatprep.subr.mxu0 0.0
        %2503 = vmatpush1.msra.mxu0 0.0
        %2504 = vmatprep.subr.mxu0 0.0
        %2505 = vmatpush1.msra.mxu0 0.0
        %2506 = vmatprep.subr.mxu0 0.0
        %2507 = vmatpush1.msra.mxu0 0.0
        %2508 = vmatprep.subr.mxu0 0.0
        %2509 = vmatpush1.msra.mxu0 %v2478
        %2510 = vmatprep.subr.mxu0 0.0
        %2511 = vmatpush1.msra.mxu0 %v2477
        %2512 = vmatprep.subr.mxu0 0.0
        %2513 = vmatpush1.msra.mxu0 %v2476
        %2514 = vmatprep.subr.mxu0 0.0
        %2515 = vmatpush1.msra.mxu0 %v2475
        %2516 = vmatprep.subr.mxu0 0.0
        %2517 = vmatpush2.msra.mxu0 0.0
        %2518 = vmatprep.subr.mxu0 0.0
        %2519 = vmatpush2.msra.mxu0 0.0
        %2520 = vmatprep.subr.mxu0 0.0
        %2521 = vmatpush2.msra.mxu0 0.0
        %2522 = vmatprep.subr.mxu0 0.0
        %2523 = vmatpush2.msra.mxu0 0.0
        %2524 = vmatprep.subr.mxu0 0.0
        %2525 = vmatpush2.msra.mxu0 0.0
        %2526 = vmatprep.subr.mxu0 0.0
        %2527 = vmatpush2.msra.mxu0 0.0
        %2528 = vmatprep.subr.mxu0 0.0
        %2529 = vmatpush2.msra.mxu0 0.0
        %2530 = vmatprep.subr.mxu0 0.0
        %2531 = vmatpush2.msra.mxu0 0.0
        %2532 = vmatprep.subr.mxu0 0.0
        %2533 = vmatpush2.msra.mxu0 0.0
        %2534 = vmatprep.subr.mxu0 0.0
        %2535 = vmatpush2.msra.mxu0 0.0
        %2536 = vmatprep.subr.mxu0 0.0
        %2537 = vmatpush2.msra.mxu0 0.0
        %2538 = vmatprep.subr.mxu0 0.0
        %2539 = vmatpush2.msra.mxu0 0.0
        %2540 = vmatprep.subr.mxu0 0.0
        %2541 = vmatpush2.msra.mxu0 0.0
        %2542 = vmatprep.subr.mxu0 0.0
        %2543 = vmatpush2.msra.mxu0 0.0
        %2544 = vmatprep.subr.mxu0 0.0
        %2545 = vmatpush2.msra.mxu0 0.0
        %2546 = vmatprep.subr.mxu0 0.0
        %2547 = vmatpush2.msra.mxu0 0.0
        %2548 = vmatprep.mubr.f32.mxu0 0.0
        %2549 = vmatmul.mubr.f32.gmra.mxu0 %v2081
        %v2550 = vpop.f32.mrf.mxu0
        %v2551 = vadd.f32 %v2483, %v2550
        %v2552 = vpop.f32.mrf.mxu0
        %2553 = vdwg.mxu0
        %v2554 = vld [vmem:[%s3 + $0x100] sm:$0xff]
        %v2555 = vld [vmem:[%s3 + $0x108] sm:$0xff]
        %v2556 = vld [vmem:[%s3 + $0x110] sm:$0xff]
        %v2557 = vld [vmem:[%s3 + $0x118] sm:$0xff]
        %v2558 = vld [vmem:[%s3 + $0x148] sm:$0x1]
        %v2559 = vlaneseq
        %v2560 = vshrl.u32 %v2559, 7
        %v2561 = vsub.s32 0, %v2560
        %v2562 = vrot.slane %v2558, %v2561
        %2563 = vmatprep.subr.mxu0 0.0
        %2564 = vmatpush1.msra.mxu0 0.0
        %2565 = vmatprep.subr.mxu0 0.0
        %2566 = vmatpush1.msra.mxu0 0.0
        %2567 = vmatprep.subr.mxu0 0.0
        %2568 = vmatpush1.msra.mxu0 0.0
        %2569 = vmatprep.subr.mxu0 0.0
        %2570 = vmatpush1.msra.mxu0 0.0
        %2571 = vmatprep.subr.mxu0 0.0
        %2572 = vmatpush1.msra.mxu0 0.0
        %2573 = vmatprep.subr.mxu0 0.0
        %2574 = vmatpush1.msra.mxu0 0.0
        %2575 = vmatprep.subr.mxu0 0.0
        %2576 = vmatpush1.msra.mxu0 0.0
        %2577 = vmatprep.subr.mxu0 0.0
        %2578 = vmatpush1.msra.mxu0 0.0
        %2579 = vmatprep.subr.mxu0 0.0
        %2580 = vmatpush1.msra.mxu0 0.0
        %2581 = vmatprep.subr.mxu0 0.0
        %2582 = vmatpush1.msra.mxu0 0.0
        %2583 = vmatprep.subr.mxu0 0.0
        %2584 = vmatpush1.msra.mxu0 0.0
        %2585 = vmatprep.subr.mxu0 0.0
        %2586 = vmatpush1.msra.mxu0 0.0
        %2587 = vmatprep.subr.mxu0 0.0
        %2588 = vmatpush1.msra.mxu0 %v2557
        %2589 = vmatprep.subr.mxu0 0.0
        %2590 = vmatpush1.msra.mxu0 %v2556
        %2591 = vmatprep.subr.mxu0 0.0
        %2592 = vmatpush1.msra.mxu0 %v2555
        %2593 = vmatprep.subr.mxu0 0.0
        %2594 = vmatpush1.msra.mxu0 %v2554
        %2595 = vmatprep.subr.mxu0 0.0
        %2596 = vmatpush2.msra.mxu0 0.0
        %2597 = vmatprep.subr.mxu0 0.0
        %2598 = vmatpush2.msra.mxu0 0.0
        %2599 = vmatprep.subr.mxu0 0.0
        %2600 = vmatpush2.msra.mxu0 0.0
        %2601 = vmatprep.subr.mxu0 0.0
        %2602 = vmatpush2.msra.mxu0 0.0
        %2603 = vmatprep.subr.mxu0 0.0
        %2604 = vmatpush2.msra.mxu0 0.0
        %2605 = vmatprep.subr.mxu0 0.0
        %2606 = vmatpush2.msra.mxu0 0.0
        %2607 = vmatprep.subr.mxu0 0.0
        %2608 = vmatpush2.msra.mxu0 0.0
        %2609 = vmatprep.subr.mxu0 0.0
        %2610 = vmatpush2.msra.mxu0 0.0
        %2611 = vmatprep.subr.mxu0 0.0
        %2612 = vmatpush2.msra.mxu0 0.0
        %2613 = vmatprep.subr.mxu0 0.0
        %2614 = vmatpush2.msra.mxu0 0.0
        %2615 = vmatprep.subr.mxu0 0.0
        %2616 = vmatpush2.msra.mxu0 0.0
        %2617 = vmatprep.subr.mxu0 0.0
        %2618 = vmatpush2.msra.mxu0 0.0
        %2619 = vmatprep.subr.mxu0 0.0
        %2620 = vmatpush2.msra.mxu0 0.0
        %2621 = vmatprep.subr.mxu0 0.0
        %2622 = vmatpush2.msra.mxu0 0.0
        %2623 = vmatprep.subr.mxu0 0.0
        %2624 = vmatpush2.msra.mxu0 0.0
        %2625 = vmatprep.subr.mxu0 0.0
        %2626 = vmatpush2.msra.mxu0 0.0
        %2627 = vmatprep.mubr.f32.mxu0 0.0
        %2628 = vmatmul.mubr.f32.gmra.mxu0 %v2081
        %v2629 = vpop.f32.mrf.mxu0
        %v2630 = vadd.f32 %v2562, %v2629
        %v2631 = vpop.f32.mrf.mxu0
        %2632 = vdwg.mxu0
        %v2633 = vld [vmem:[%s3 + $0x120] sm:$0xff]
        %v2634 = vld [vmem:[%s3 + $0x128] sm:$0xff]
        %v2635 = vld [vmem:[%s3 + $0x130] sm:$0xff]
        %v2636 = vld [vmem:[%s3 + $0x138] sm:$0xff]
        %v2637 = vld [vmem:[%s3 + $0x150] sm:$0x1]
        %v2638 = vlaneseq
        %v2639 = vshrl.u32 %v2638, 7
        %v2640 = vsub.s32 0, %v2639
        %v2641 = vrot.slane %v2637, %v2640
        %2642 = vmatprep.subr.mxu0 0.0
        %2643 = vmatpush1.msra.mxu0 0.0
        %2644 = vmatprep.subr.mxu0 0.0
        %2645 = vmatpush1.msra.mxu0 0.0
        %2646 = vmatprep.subr.mxu0 0.0
        %2647 = vmatpush1.msra.mxu0 0.0
        %2648 = vmatprep.subr.mxu0 0.0
        %2649 = vmatpush1.msra.mxu0 0.0
        %2650 = vmatprep.subr.mxu0 0.0
        %2651 = vmatpush1.msra.mxu0 0.0
        %2652 = vmatprep.subr.mxu0 0.0
        %2653 = vmatpush1.msra.mxu0 0.0
        %2654 = vmatprep.subr.mxu0 0.0
        %2655 = vmatpush1.msra.mxu0 0.0
        %2656 = vmatprep.subr.mxu0 0.0
        %2657 = vmatpush1.msra.mxu0 0.0
        %2658 = vmatprep.subr.mxu0 0.0
        %2659 = vmatpush1.msra.mxu0 0.0
        %2660 = vmatprep.subr.mxu0 0.0
        %2661 = vmatpush1.msra.mxu0 0.0
        %2662 = vmatprep.subr.mxu0 0.0
        %2663 = vmatpush1.msra.mxu0 0.0
        %2664 = vmatprep.subr.mxu0 0.0
        %2665 = vmatpush1.msra.mxu0 0.0
        %2666 = vmatprep.subr.mxu0 0.0
        %2667 = vmatpush1.msra.mxu0 %v2636
        %2668 = vmatprep.subr.mxu0 0.0
        %2669 = vmatpush1.msra.mxu0 %v2635
        %2670 = vmatprep.subr.mxu0 0.0
        %2671 = vmatpush1.msra.mxu0 %v2634
        %2672 = vmatprep.subr.mxu0 0.0
        %2673 = vmatpush1.msra.mxu0 %v2633
        %2674 = vmatprep.subr.mxu0 0.0
        %2675 = vmatpush2.msra.mxu0 0.0
        %2676 = vmatprep.subr.mxu0 0.0
        %2677 = vmatpush2.msra.mxu0 0.0
        %2678 = vmatprep.subr.mxu0 0.0
        %2679 = vmatpush2.msra.mxu0 0.0
        %2680 = vmatprep.subr.mxu0 0.0
        %2681 = vmatpush2.msra.mxu0 0.0
        %2682 = vmatprep.subr.mxu0 0.0
        %2683 = vmatpush2.msra.mxu0 0.0
        %2684 = vmatprep.subr.mxu0 0.0
        %2685 = vmatpush2.msra.mxu0 0.0
        %2686 = vmatprep.subr.mxu0 0.0
        %2687 = vmatpush2.msra.mxu0 0.0
        %2688 = vmatprep.subr.mxu0 0.0
        %2689 = vmatpush2.msra.mxu0 0.0
        %2690 = vmatprep.subr.mxu0 0.0
        %2691 = vmatpush2.msra.mxu0 0.0
        %2692 = vmatprep.subr.mxu0 0.0
        %2693 = vmatpush2.msra.mxu0 0.0
        %2694 = vmatprep.subr.mxu0 0.0
        %2695 = vmatpush2.msra.mxu0 0.0
        %2696 = vmatprep.subr.mxu0 0.0
        %2697 = vmatpush2.msra.mxu0 0.0
        %2698 = vmatprep.subr.mxu0 0.0
        %2699 = vmatpush2.msra.mxu0 0.0
        %2700 = vmatprep.subr.mxu0 0.0
        %2701 = vmatpush2.msra.mxu0 0.0
        %2702 = vmatprep.subr.mxu0 0.0
        %2703 = vmatpush2.msra.mxu0 0.0
        %2704 = vmatprep.subr.mxu0 0.0
        %2705 = vmatpush2.msra.mxu0 0.0
        %2706 = vmatprep.mubr.f32.mxu0 0.0
        %2707 = vmatmul.mubr.f32.gmra.mxu0 %v2081
        %v2708 = vpop.f32.mrf.mxu0
        %v2709 = vadd.f32 %v2641, %v2708
        %v2710 = vpop.f32.mrf.mxu0
        %2711 = vdwg.mxu0
        %v2713 = vsel %vm2311, %v2551, 0
        %v2716 = vsel %vm2311, %v2630, 0
        %2718 = vmatprep.subr.mxu0 0.0
        %2719 = vmatpush1.xpose.msra.mxu0 0.0
        %2720 = vmatprep.subr.mxu0 0.0
        %2721 = vmatpush1.xpose.msra.mxu0 0.0
        %2722 = vmatprep.subr.mxu0 0.0
        %2723 = vmatpush1.xpose.msra.mxu0 0.0
        %2724 = vmatprep.subr.mxu0 0.0
        %2725 = vmatpush1.xpose.msra.mxu0 0.0
        %2726 = vmatprep.subr.mxu0 0.0
        %2727 = vmatpush1.xpose.msra.mxu0 0.0
        %2728 = vmatprep.subr.mxu0 0.0
        %2729 = vmatpush1.xpose.msra.mxu0 0.0
        %2730 = vmatprep.subr.mxu0 0.0
        %2731 = vmatpush1.xpose.msra.mxu0 0.0
        %2732 = vmatprep.subr.mxu0 0.0
        %2733 = vmatpush1.xpose.msra.mxu0 0.0
        %2734 = vmatprep.subr.mxu0 0.0
        %2735 = vmatpush1.xpose.msra.mxu0 0.0
        %2736 = vmatprep.subr.mxu0 0.0
        %2737 = vmatpush1.xpose.msra.mxu0 0.0
        %2738 = vmatprep.subr.mxu0 0.0
        %2739 = vmatpush1.xpose.msra.mxu0 0.0
        %2740 = vmatprep.subr.mxu0 0.0
        %2741 = vmatpush1.xpose.msra.mxu0 0.0
        %2742 = vmatprep.subr.mxu0 0.0
        %2743 = vmatpush1.xpose.msra.mxu0 0.0
        %2744 = vmatprep.subr.mxu0 0.0
        %2745 = vmatpush1.xpose.msra.mxu0 0.0
        %2746 = vmatprep.subr.mxu0 0.0
        %2747 = vmatpush1.xpose.msra.mxu0 0.0
        %2748 = vmatprep.subr.mxu0 0.0
        %2749 = vmatpush1.xpose.msra.mxu0 %v2716
        %2750 = vmatprep.subr.mxu0 0.0
        %2751 = vmatpush2.xpose.msra.mxu0 0.0
        %2752 = vmatprep.subr.mxu0 0.0
        %2753 = vmatpush2.xpose.msra.mxu0 0.0
        %2754 = vmatprep.subr.mxu0 0.0
        %2755 = vmatpush2.xpose.msra.mxu0 0.0
        %2756 = vmatprep.subr.mxu0 0.0
        %2757 = vmatpush2.xpose.msra.mxu0 0.0
        %2758 = vmatprep.subr.mxu0 0.0
        %2759 = vmatpush2.xpose.msra.mxu0 0.0
        %2760 = vmatprep.subr.mxu0 0.0
        %2761 = vmatpush2.xpose.msra.mxu0 0.0
        %2762 = vmatprep.subr.mxu0 0.0
        %2763 = vmatpush2.xpose.msra.mxu0 0.0
        %2764 = vmatprep.subr.mxu0 0.0
        %2765 = vmatpush2.xpose.msra.mxu0 0.0
        %2766 = vmatprep.subr.mxu0 0.0
        %2767 = vmatpush2.xpose.msra.mxu0 0.0
        %2768 = vmatprep.subr.mxu0 0.0
        %2769 = vmatpush2.xpose.msra.mxu0 0.0
        %2770 = vmatprep.subr.mxu0 0.0
        %2771 = vmatpush2.xpose.msra.mxu0 0.0
        %2772 = vmatprep.subr.mxu0 0.0
        %2773 = vmatpush2.xpose.msra.mxu0 0.0
        %2774 = vmatprep.subr.mxu0 0.0
        %2775 = vmatpush2.xpose.msra.mxu0 0.0
        %2776 = vmatprep.subr.mxu0 0.0
        %2777 = vmatpush2.xpose.msra.mxu0 0.0
        %2778 = vmatprep.subr.mxu0 0.0
        %2779 = vmatpush2.xpose.msra.mxu0 0.0
        %2780 = vmatprep.subr.mxu0 0.0
        %2781 = vmatpush2.xpose.msra.mxu0 0.0
        %2782 = vmatprep.mubr.f32.mxu0 0.0
        %2783 = vmatmul.mubr.f32.gmra.mxu0 %v2713
        %v2784 = vpop.f32.mrf.mxu0
        %v2785 = vadd.f32 %v2043, %v2784
        %v2786 = vpop.f32.mrf.mxu0
        %2787 = vdwg.mxu0
        %v2788 = vsel %vm2388, %v2785, -inf
        %2789 = vmax.xlane.f32.xlu0 %v2788
        %v2790 = vpop.xlane.xlu0 %2789
        %v2791 = vsub.f32 %v2785, %v2790
        %v2792 = vmul.f32 %v2791, 1.442695
        %v2793 = vpow.pop %v2792
        %v2794 = vsel %vm2388, %v2793, 0.0
        %2795 = vadd.xlane.f32.xlu0 %v2794
        %v2796 = vpop.xlane.xlu0 %2795
        %v2797 = vrcp.pop %v2796
        %v2798 = vmul.f32 %v2793, %v2797
        %v2800 = vsel %vm2388, %v2798, 0
        %2802 = vmatprep.subr.mxu0 0.0
        %2803 = vmatpush1.msra.mxu0 0.0
        %2804 = vmatprep.subr.mxu0 0.0
        %2805 = vmatpush1.msra.mxu0 0.0
        %2806 = vmatprep.subr.mxu0 0.0
        %2807 = vmatpush1.msra.mxu0 0.0
        %2808 = vmatprep.subr.mxu0 0.0
        %2809 = vmatpush1.msra.mxu0 0.0
        %2810 = vmatprep.subr.mxu0 0.0
        %2811 = vmatpush1.msra.mxu0 0.0
        %2812 = vmatprep.subr.mxu0 0.0
        %2813 = vmatpush1.msra.mxu0 0.0
        %2814 = vmatprep.subr.mxu0 0.0
        %2815 = vmatpush1.msra.mxu0 0.0
        %2816 = vmatprep.subr.mxu0 0.0
        %2817 = vmatpush1.msra.mxu0 0.0
        %2818 = vmatprep.subr.mxu0 0.0
        %2819 = vmatpush1.msra.mxu0 0.0
        %2820 = vmatprep.subr.mxu0 0.0
        %2821 = vmatpush1.msra.mxu0 0.0
        %2822 = vmatprep.subr.mxu0 0.0
        %2823 = vmatpush1.msra.mxu0 0.0
        %2824 = vmatprep.subr.mxu0 0.0
        %2825 = vmatpush1.msra.mxu0 0.0
        %2826 = vmatprep.subr.mxu0 0.0
        %2827 = vmatpush1.msra.mxu0 0.0
        %2828 = vmatprep.subr.mxu0 0.0
        %2829 = vmatpush1.msra.mxu0 0.0
        %2830 = vmatprep.subr.mxu0 0.0
        %2831 = vmatpush1.msra.mxu0 0.0
        %2832 = vmatprep.subr.mxu0 0.0
        %2833 = vmatpush1.msra.mxu0 %v2709
        %2834 = vmatprep.subr.mxu0 0.0
        %2835 = vmatpush2.msra.mxu0 0.0
        %2836 = vmatprep.subr.mxu0 0.0
        %2837 = vmatpush2.msra.mxu0 0.0
        %2838 = vmatprep.subr.mxu0 0.0
        %2839 = vmatpush2.msra.mxu0 0.0
        %2840 = vmatprep.subr.mxu0 0.0
        %2841 = vmatpush2.msra.mxu0 0.0
        %2842 = vmatprep.subr.mxu0 0.0
        %2843 = vmatpush2.msra.mxu0 0.0
        %2844 = vmatprep.subr.mxu0 0.0
        %2845 = vmatpush2.msra.mxu0 0.0
        %2846 = vmatprep.subr.mxu0 0.0
        %2847 = vmatpush2.msra.mxu0 0.0
        %2848 = vmatprep.subr.mxu0 0.0
        %2849 = vmatpush2.msra.mxu0 0.0
        %2850 = vmatprep.subr.mxu0 0.0
        %2851 = vmatpush2.msra.mxu0 0.0
        %2852 = vmatprep.subr.mxu0 0.0
        %2853 = vmatpush2.msra.mxu0 0.0
        %2854 = vmatprep.subr.mxu0 0.0
        %2855 = vmatpush2.msra.mxu0 0.0
        %2856 = vmatprep.subr.mxu0 0.0
        %2857 = vmatpush2.msra.mxu0 0.0
        %2858 = vmatprep.subr.mxu0 0.0
        %2859 = vmatpush2.msra.mxu0 0.0
        %2860 = vmatprep.subr.mxu0 0.0
        %2861 = vmatpush2.msra.mxu0 0.0
        %2862 = vmatprep.subr.mxu0 0.0
        %2863 = vmatpush2.msra.mxu0 0.0
        %2864 = vmatprep.subr.mxu0 0.0
        %2865 = vmatpush2.msra.mxu0 0.0
        %2866 = vmatprep.mubr.f32.mxu0 0.0
        %2867 = vmatmul.mubr.f32.gmra.mxu0 %v2800
        %v2868 = vpop.f32.mrf.mxu0
        %v2869 = vadd.f32 0.0, %v2868
        %v2870 = vpop.f32.mrf.mxu0
        %2871 = vdwg.mxu0
        %v2872 = vld [vmem:[%s3 + $0x158] sm:$0xff]
        %v2873 = vld [vmem:[%s3 + $0x160] sm:$0xff]
        %v2875 = vsel %vm2311, %v2869, 0
        %2877 = vmatprep.subr.mxu0 0.0
        %2878 = vmatpush1.msra.mxu0 0.0
        %2879 = vmatprep.subr.mxu0 0.0
        %2880 = vmatpush1.msra.mxu0 0.0
        %2881 = vmatprep.subr.mxu0 0.0
        %2882 = vmatpush1.msra.mxu0 0.0
        %2883 = vmatprep.subr.mxu0 0.0
        %2884 = vmatpush1.msra.mxu0 0.0
        %2885 = vmatprep.subr.mxu0 0.0
        %2886 = vmatpush1.msra.mxu0 0.0
        %2887 = vmatprep.subr.mxu0 0.0
        %2888 = vmatpush1.msra.mxu0 0.0
        %2889 = vmatprep.subr.mxu0 0.0
        %2890 = vmatpush1.msra.mxu0 0.0
        %2891 = vmatprep.subr.mxu0 0.0
        %2892 = vmatpush1.msra.mxu0 0.0
        %2893 = vmatprep.subr.mxu0 0.0
        %2894 = vmatpush1.msra.mxu0 0.0
        %2895 = vmatprep.subr.mxu0 0.0
        %2896 = vmatpush1.msra.mxu0 0.0
        %2897 = vmatprep.subr.mxu0 0.0
        %2898 = vmatpush1.msra.mxu0 0.0
        %2899 = vmatprep.subr.mxu0 0.0
        %2900 = vmatpush1.msra.mxu0 0.0
        %2901 = vmatprep.subr.mxu0 0.0
        %2902 = vmatpush1.msra.mxu0 0.0
        %2903 = vmatprep.subr.mxu0 0.0
        %2904 = vmatpush1.msra.mxu0 0.0
        %2905 = vmatprep.subr.mxu0 0.0
        %2906 = vmatpush1.msra.mxu0 %v2873
        %2907 = vmatprep.subr.mxu0 0.0
        %2908 = vmatpush1.msra.mxu0 %v2872
        %2909 = vmatprep.subr.mxu0 0.0
        %2910 = vmatpush2.msra.mxu0 0.0
        %2911 = vmatprep.subr.mxu0 0.0
        %2912 = vmatpush2.msra.mxu0 0.0
        %2913 = vmatprep.subr.mxu0 0.0
        %2914 = vmatpush2.msra.mxu0 0.0
        %2915 = vmatprep.subr.mxu0 0.0
        %2916 = vmatpush2.msra.mxu0 0.0
        %2917 = vmatprep.subr.mxu0 0.0
        %2918 = vmatpush2.msra.mxu0 0.0
        %2919 = vmatprep.subr.mxu0 0.0
        %2920 = vmatpush2.msra.mxu0 0.0
        %2921 = vmatprep.subr.mxu0 0.0
        %2922 = vmatpush2.msra.mxu0 0.0
        %2923 = vmatprep.subr.mxu0 0.0
        %2924 = vmatpush2.msra.mxu0 0.0
        %2925 = vmatprep.subr.mxu0 0.0
        %2926 = vmatpush2.msra.mxu0 0.0
        %2927 = vmatprep.subr.mxu0 0.0
        %2928 = vmatpush2.msra.mxu0 0.0
        %2929 = vmatprep.subr.mxu0 0.0
        %2930 = vmatpush2.msra.mxu0 0.0
        %2931 = vmatprep.subr.mxu0 0.0
        %2932 = vmatpush2.msra.mxu0 0.0
        %2933 = vmatprep.subr.mxu0 0.0
        %2934 = vmatpush2.msra.mxu0 0.0
        %2935 = vmatprep.subr.mxu0 0.0
        %2936 = vmatpush2.msra.mxu0 0.0
        %2937 = vmatprep.subr.mxu0 0.0
        %2938 = vmatpush2.msra.mxu0 0.0
        %2939 = vmatprep.subr.mxu0 0.0
        %2940 = vmatpush2.msra.mxu0 0.0
        %2941 = vmatprep.mubr.f32.mxu0 0.0
        %2942 = vmatmul.mubr.f32.gmra.mxu0 %v2875
        %v2943 = vpop.f32.mrf.mxu0
        %v2944 = vadd.f32 0.0, %v2943
        %v2945 = vpop.f32.mrf.mxu0
        %2946 = vdwg.mxu0
        %v2948 = vsel %vm2311, %v2470, 0
        %2950 = vmatprep.subr.mxu0 0.0
        %2951 = vmatpush1.msra.mxu0 0.0
        %2952 = vmatprep.subr.mxu0 0.0
        %2953 = vmatpush1.msra.mxu0 0.0
        %2954 = vmatprep.subr.mxu0 0.0
        %2955 = vmatpush1.msra.mxu0 0.0
        %2956 = vmatprep.subr.mxu0 0.0
        %2957 = vmatpush1.msra.mxu0 0.0
        %2958 = vmatprep.subr.mxu0 0.0
        %2959 = vmatpush1.msra.mxu0 0.0
        %2960 = vmatprep.subr.mxu0 0.0
        %2961 = vmatpush1.msra.mxu0 0.0
        %2962 = vmatprep.subr.mxu0 0.0
        %2963 = vmatpush1.msra.mxu0 0.0
        %2964 = vmatprep.subr.mxu0 0.0
        %2965 = vmatpush1.msra.mxu0 0.0
        %2966 = vmatprep.subr.mxu0 0.0
        %2967 = vmatpush1.msra.mxu0 0.0
        %2968 = vmatprep.subr.mxu0 0.0
        %2969 = vmatpush1.msra.mxu0 0.0
        %2970 = vmatprep.subr.mxu0 0.0
        %2971 = vmatpush1.msra.mxu0 0.0
        %2972 = vmatprep.subr.mxu0 0.0
        %2973 = vmatpush1.msra.mxu0 0.0
        %2974 = vmatprep.subr.mxu0 0.0
        %2975 = vmatpush1.msra.mxu0 0.0
        %2976 = vmatprep.subr.mxu0 0.0
        %2977 = vmatpush1.msra.mxu0 0.0
        %2978 = vmatprep.subr.mxu0 0.0
        %2979 = vmatpush1.msra.mxu0 %v2474
        %2980 = vmatprep.subr.mxu0 0.0
        %2981 = vmatpush1.msra.mxu0 %v2473
        %2982 = vmatprep.subr.mxu0 0.0
        %2983 = vmatpush2.msra.mxu0 0.0
        %2984 = vmatprep.subr.mxu0 0.0
        %2985 = vmatpush2.msra.mxu0 0.0
        %2986 = vmatprep.subr.mxu0 0.0
        %2987 = vmatpush2.msra.mxu0 0.0
        %2988 = vmatprep.subr.mxu0 0.0
        %2989 = vmatpush2.msra.mxu0 0.0
        %2990 = vmatprep.subr.mxu0 0.0
        %2991 = vmatpush2.msra.mxu0 0.0
        %2992 = vmatprep.subr.mxu0 0.0
        %2993 = vmatpush2.msra.mxu0 0.0
        %2994 = vmatprep.subr.mxu0 0.0
        %2995 = vmatpush2.msra.mxu0 0.0
        %2996 = vmatprep.subr.mxu0 0.0
        %2997 = vmatpush2.msra.mxu0 0.0
        %2998 = vmatprep.subr.mxu0 0.0
        %2999 = vmatpush2.msra.mxu0 0.0
        %3000 = vmatprep.subr.mxu0 0.0
        %3001 = vmatpush2.msra.mxu0 0.0
        %3002 = vmatprep.subr.mxu0 0.0
        %3003 = vmatpush2.msra.mxu0 0.0
        %3004 = vmatprep.subr.mxu0 0.0
        %3005 = vmatpush2.msra.mxu0 0.0
        %3006 = vmatprep.subr.mxu0 0.0
        %3007 = vmatpush2.msra.mxu0 0.0
        %3008 = vmatprep.subr.mxu0 0.0
        %3009 = vmatpush2.msra.mxu0 0.0
        %3010 = vmatprep.subr.mxu0 0.0
        %3011 = vmatpush2.msra.mxu0 0.0
        %3012 = vmatprep.subr.mxu0 0.0
        %3013 = vmatpush2.msra.mxu0 0.0
        %3014 = vmatprep.mubr.f32.mxu0 0.0
        %3015 = vmatmul.mubr.f32.gmra.mxu0 %v2948
        %v3016 = vpop.f32.mrf.mxu0
        %v3017 = vadd.f32 %v2944, %v3016
        %v3018 = vpop.f32.mrf.mxu0
        %3019 = vdwg.mxu0
        %v3020 = vadd.f32 %v2037, %v3017
        %v3021 = vld [vmem:[%s3 + $0x168] sm:$0x1]
        %v3022 = vlaneseq
        %v3023 = vshrl.u32 %v3022, 7
        %v3024 = vsub.s32 0, %v3023
        %v3025 = vrot.slane %v3021, %v3024
        %v3026 = vadd.f32 %v3020, %v3025
        %v3027 = vld [vmem:[%s3 + $0x170] sm:$0x1]
        %v3028 = vld [vmem:[%s3 + $0x178] sm:$0x1]
        %v3029 = vsel %vm2046, %v3026, 0.0
        %3030 = vadd.xlane.f32.xlu0 %v3029
        %v3031 = vpop.xlane.xlu0 %3030
        %v3032 = vmul.f32 %v3031, %v2050
        %v3033 = vsub.f32 %v3026, %v3032
        %v3034 = vmul.f32 %v3033, %v3033
        %v3035 = vsel %vm2046, %v3034, 0.0
        %3036 = vadd.xlane.f32.xlu0 %v3035
        %v3037 = vpop.xlane.xlu0 %3036
        %v3038 = vmul.f32 %v3037, %v2050
        %v3039 = vadd.f32 %v3038, 1e-05
        %v3040 = vrsqrt.pop %v3039
        %v3041 = vmul.f32 %v3033, %v3040
        %v3042 = vlaneseq
        %v3043 = vshrl.u32 %v3042, 7
        %v3044 = vsub.s32 0, %v3043
        %v3045 = vrot.slane %v3027, %v3044
        %v3046 = vmul.f32 %v3041, %v3045
        %v3047 = vlaneseq
        %v3048 = vshrl.u32 %v3047, 7
        %v3049 = vsub.s32 0, %v3048
        %v3050 = vrot.slane %v3028, %v3049
        %v3051 = vadd.f32 %v3046, %v3050
        %v3052 = vld [vmem:[%s3 + $0x180] sm:$0xff]
        %v3053 = vld [vmem:[%s3 + $0x188] sm:$0xff]
        %v3054 = vld [vmem:[%s3 + $0x190] sm:$0xff]
        %v3055 = vld [vmem:[%s3 + $0x198] sm:$0xff]
        %v3056 = vld [vmem:[%s3 + $0x1a0] sm:$0x1]
        %v3057 = vlaneseq
        %v3058 = vshrl.u32 %v3057, 7
        %v3059 = vsub.s32 0, %v3058
        %v3060 = vrot.slane %v3056, %v3059
        %v3062 = vsel %vm2046, %v3051, 0
        %3064 = vmatprep.subr.mxu0 0.0
        %3065 = vmatpush1.msra.mxu0 0.0
        %3066 = vmatprep.subr.mxu0 0.0
        %3067 = vmatpush1.msra.mxu0 0.0
        %3068 = vmatprep.subr.mxu0 0.0
        %3069 = vmatpush1.msra.mxu0 0.0
        %3070 = vmatprep.subr.mxu0 0.0
        %3071 = vmatpush1.msra.mxu0 0.0
        %3072 = vmatprep.subr.mxu0 0.0
        %3073 = vmatpush1.msra.mxu0 0.0
        %3074 = vmatprep.subr.mxu0 0.0
        %3075 = vmatpush1.msra.mxu0 0.0
        %3076 = vmatprep.subr.mxu0 0.0
        %3077 = vmatpush1.msra.mxu0 0.0
        %3078 = vmatprep.subr.mxu0 0.0
        %3079 = vmatpush1.msra.mxu0 0.0
        %3080 = vmatprep.subr.mxu0 0.0
        %3081 = vmatpush1.msra.mxu0 0.0
        %3082 = vmatprep.subr.mxu0 0.0
        %3083 = vmatpush1.msra.mxu0 0.0
        %3084 = vmatprep.subr.mxu0 0.0
        %3085 = vmatpush1.msra.mxu0 0.0
        %3086 = vmatprep.subr.mxu0 0.0
        %3087 = vmatpush1.msra.mxu0 0.0
        %3088 = vmatprep.subr.mxu0 0.0
        %3089 = vmatpush1.msra.mxu0 %v3055
        %3090 = vmatprep.subr.mxu0 0.0
        %3091 = vmatpush1.msra.mxu0 %v3054
        %3092 = vmatprep.subr.mxu0 0.0
        %3093 = vmatpush1.msra.mxu0 %v3053
        %3094 = vmatprep.subr.mxu0 0.0
        %3095 = vmatpush1.msra.mxu0 %v3052
        %3096 = vmatprep.subr.mxu0 0.0
        %3097 = vmatpush2.msra.mxu0 0.0
        %3098 = vmatprep.subr.mxu0 0.0
        %3099 = vmatpush2.msra.mxu0 0.0
        %3100 = vmatprep.subr.mxu0 0.0
        %3101 = vmatpush2.msra.mxu0 0.0
        %3102 = vmatprep.subr.mxu0 0.0
        %3103 = vmatpush2.msra.mxu0 0.0
        %3104 = vmatprep.subr.mxu0 0.0
        %3105 = vmatpush2.msra.mxu0 0.0
        %3106 = vmatprep.subr.mxu0 0.0
        %3107 = vmatpush2.msra.mxu0 0.0
        %3108 = vmatprep.subr.mxu0 0.0
        %3109 = vmatpush2.msra.mxu0 0.0
        %3110 = vmatprep.subr.mxu0 0.0
        %3111 = vmatpush2.msra.mxu0 0.0
        %3112 = vmatprep.subr.mxu0 0.0
        %3113 = vmatpush2.msra.mxu0 0.0
        %3114 = vmatprep.subr.mxu0 0.0
        %3115 = vmatpush2.msra.mxu0 0.0
        %3116 = vmatprep.subr.mxu0 0.0
        %3117 = vmatpush2.msra.mxu0 0.0
        %3118 = vmatprep.subr.mxu0 0.0
        %3119 = vmatpush2.msra.mxu0 0.0
        %3120 = vmatprep.subr.mxu0 0.0
        %3121 = vmatpush2.msra.mxu0 0.0
        %3122 = vmatprep.subr.mxu0 0.0
        %3123 = vmatpush2.msra.mxu0 0.0
        %3124 = vmatprep.subr.mxu0 0.0
        %3125 = vmatpush2.msra.mxu0 0.0
        %3126 = vmatprep.subr.mxu0 0.0
        %3127 = vmatpush2.msra.mxu0 0.0
        %3128 = vmatprep.mubr.f32.mxu0 0.0
        %3129 = vmatmul.mubr.f32.gmra.mxu0 %v3062
        %v3130 = vpop.f32.mrf.mxu0
        %v3131 = vadd.f32 %v3060, %v3130
        %v3132 = vpop.f32.mrf.mxu0
        %3133 = vdwg.mxu0
        %v3134 = vmul.f32 %v3131, -1.702
        %v3135 = vmul.f32 %v3134, 1.442695
        %v3136 = vpow.pop %v3135
        %v3137 = vadd.f32 %v3136, 1.0
        %v3138 = vrcp.pop %v3137
        %v3139 = vmul.f32 %v3131, %v3138
        %v3140 = vld [vmem:[%s3 + $0x1a8] sm:$0xff]
        %v3141 = vld [vmem:[%s3 + $0x1b0] sm:$0xff]
        %v3142 = vld [vmem:[%s3 + $0x1b8] sm:$0xff]
        %v3143 = vld [vmem:[%s3 + $0x1c0] sm:$0xff]
        %v3144 = vld [vmem:[%s3 + $0x1c8] sm:$0xff]
        %v3145 = vld [vmem:[%s3 + $0x1d0] sm:$0xff]
        %v3146 = vld [vmem:[%s3 + $0x1d8] sm:$0xff]
        %v3147 = vld [vmem:[%s3 + $0x1e0] sm:$0xff]
        %v3149 = vsel %vm1966, %v3139, 0
        %3151 = vmatprep.subr.mxu0 0.0
        %3152 = vmatpush1.msra.mxu0 0.0
        %3153 = vmatprep.subr.mxu0 0.0
        %3154 = vmatpush1.msra.mxu0 0.0
        %3155 = vmatprep.subr.mxu0 0.0
        %3156 = vmatpush1.msra.mxu0 0.0
        %3157 = vmatprep.subr.mxu0 0.0
        %3158 = vmatpush1.msra.mxu0 0.0
        %3159 = vmatprep.subr.mxu0 0.0
        %3160 = vmatpush1.msra.mxu0 0.0
        %3161 = vmatprep.subr.mxu0 0.0
        %3162 = vmatpush1.msra.mxu0 0.0
        %3163 = vmatprep.subr.mxu0 0.0
        %3164 = vmatpush1.msra.mxu0 0.0
        %3165 = vmatprep.subr.mxu0 0.0
        %3166 = vmatpush1.msra.mxu0 0.0
        %3167 = vmatprep.subr.mxu0 0.0
        %3168 = vmatpush1.msra.mxu0 %v3147
        %3169 = vmatprep.subr.mxu0 0.0
        %3170 = vmatpush1.msra.mxu0 %v3146
        %3171 = vmatprep.subr.mxu0 0.0
        %3172 = vmatpush1.msra.mxu0 %v3145
        %3173 = vmatprep.subr.mxu0 0.0
        %3174 = vmatpush1.msra.mxu0 %v3144
        %3175 = vmatprep.subr.mxu0 0.0
        %3176 = vmatpush1.msra.mxu0 %v3143
        %3177 = vmatprep.subr.mxu0 0.0
        %3178 = vmatpush1.msra.mxu0 %v3142
        %3179 = vmatprep.subr.mxu0 0.0
        %3180 = vmatpush1.msra.mxu0 %v3141
        %3181 = vmatprep.subr.mxu0 0.0
        %3182 = vmatpush1.msra.mxu0 %v3140
        %3183 = vmatprep.subr.mxu0 0.0
        %3184 = vmatpush2.msra.mxu0 0.0
        %3185 = vmatprep.subr.mxu0 0.0
        %3186 = vmatpush2.msra.mxu0 0.0
        %3187 = vmatprep.subr.mxu0 0.0
        %3188 = vmatpush2.msra.mxu0 0.0
        %3189 = vmatprep.subr.mxu0 0.0
        %3190 = vmatpush2.msra.mxu0 0.0
        %3191 = vmatprep.subr.mxu0 0.0
        %3192 = vmatpush2.msra.mxu0 0.0
        %3193 = vmatprep.subr.mxu0 0.0
        %3194 = vmatpush2.msra.mxu0 0.0
        %3195 = vmatprep.subr.mxu0 0.0
        %3196 = vmatpush2.msra.mxu0 0.0
        %3197 = vmatprep.subr.mxu0 0.0
        %3198 = vmatpush2.msra.mxu0 0.0
        %3199 = vmatprep.subr.mxu0 0.0
        %3200 = vmatpush2.msra.mxu0 0.0
        %3201 = vmatprep.subr.mxu0 0.0
        %3202 = vmatpush2.msra.mxu0 0.0
        %3203 = vmatprep.subr.mxu0 0.0
        %3204 = vmatpush2.msra.mxu0 0.0
        %3205 = vmatprep.subr.mxu0 0.0
        %3206 = vmatpush2.msra.mxu0 0.0
        %3207 = vmatprep.subr.mxu0 0.0
        %3208 = vmatpush2.msra.mxu0 0.0
        %3209 = vmatprep.subr.mxu0 0.0
        %3210 = vmatpush2.msra.mxu0 0.0
        %3211 = vmatprep.subr.mxu0 0.0
        %3212 = vmatpush2.msra.mxu0 0.0
        %3213 = vmatprep.subr.mxu0 0.0
        %3214 = vmatpush2.msra.mxu0 0.0
        %3215 = vmatprep.mubr.f32.mxu0 0.0
        %3216 = vmatmul.mubr.f32.gmra.mxu0 %v3149
        %v3217 = vpop.f32.mrf.mxu0
        %v3218 = vadd.f32 0.0, %v3217
        %v3219 = vpop.f32.mrf.mxu0
        %3220 = vdwg.mxu0
        %v3221 = vadd.f32 %v3026, %v3218
        %v3222 = vld [vmem:[%s3 + $0x1e8] sm:$0x1]
        %v3223 = vlaneseq
        %v3224 = vshrl.u32 %v3223, 7
        %v3225 = vsub.s32 0, %v3224
        %v3226 = vrot.slane %v3222, %v3225
        %v3227 = vadd.f32 %v3221, %v3226
        %v3228 = vld [vmem:[%s3 + $0x1f0] sm:$0x1]
        %v3229 = vld [vmem:[%s3 + $0x1f8] sm:$0x1]
        %v3230 = vsel %vm2046, %v3227, 0.0
        %3231 = vadd.xlane.f32.xlu0 %v3230
        %v3232 = vpop.xlane.xlu0 %3231
        %v3233 = vmul.f32 %v3232, %v2050
        %v3234 = vsub.f32 %v3227, %v3233
        %v3235 = vmul.f32 %v3234, %v3234
        %v3236 = vsel %vm2046, %v3235, 0.0
        %3237 = vadd.xlane.f32.xlu0 %v3236
        %v3238 = vpop.xlane.xlu0 %3237
        %v3239 = vmul.f32 %v3238, %v2050
        %v3240 = vadd.f32 %v3239, 1e-05
        %v3241 = vrsqrt.pop %v3240
        %v3242 = vmul.f32 %v3234, %v3241
        %v3243 = vlaneseq
        %v3244 = vshrl.u32 %v3243, 7
        %v3245 = vsub.s32 0, %v3244
        %v3246 = vrot.slane %v3228, %v3245
        %v3247 = vmul.f32 %v3242, %v3246
        %v3248 = vlaneseq
        %v3249 = vshrl.u32 %v3248, 7
        %v3250 = vsub.s32 0, %v3249
        %v3251 = vrot.slane %v3229, %v3250
        %v3252 = vadd.f32 %v3247, %v3251
        %vm3253 = vcmask 7168
        %v3254 = vsel %vm3253, %v1948, 2147483648
        %v3255 = vand.u32 %v3254, 65535
        %v3256 = vshra.s32 %v3254, 16
        %v3257 = vcvt.s32.f32 %v3255
        %v3258 = vcvt.s32.f32 %v3256
        %3259 = vmax.xlane.f32.xlu0 %v3258
        %v3260 = vpop.xlane.xlu0 %3259
        %vm3261 = vcmp.eq.f32.partialorder %v3258, %v3260
        %v3262 = vsel %vm3261, %v3257, -inf
        %3263 = vmax.xlane.f32.xlu0 %v3262
        %v3264 = vpop.xlane.xlu0 %3263
        %v3265 = vcvt.f32.s32 %v3264
        %v3266 = vcvt.f32.s32 %v3260
        %v3267 = vshll.u32 %v3266, 16
        %v3268 = vadd.s32 %v3267, %v3265
        %v3269 = vrot.slane %v3268, 4
        %vm3270 = vcmp.gt.s32.totalorder %v3268, %v3269
        %v3271 = vsel %vm3270, %v3268, %v3269
        %v3272 = vrot.slane %v3271, 2
        %vm3273 = vcmp.gt.s32.totalorder %v3271, %v3272
        %v3274 = vsel %vm3273, %v3271, %v3272
        %v3275 = vrot.slane %v3274, 1
        %vm3276 = vcmp.gt.s32.totalorder %v3274, %v3275
        %v3277 = vsel %vm3276, %v3274, %v3275
        %s3278 = vtos %v3277
        %v3279 = vstv %s3278
        %vm3280 = vcmp.eq.s32.totalorder %v1948, %v3279
        %v3281 = vsel %vm3280, %v2041, 8
        %v3282 = vsel %vm3253, %v3281, 2147483647
        %v3283 = vand.u32 %v3282, 65535
        %v3284 = vshra.s32 %v3282, 16
        %v3285 = vcvt.s32.f32 %v3283
        %v3286 = vcvt.s32.f32 %v3284
        %3287 = vmin.xlane.f32.xlu0 %v3286
        %v3288 = vpop.xlane.xlu0 %3287
        %vm3289 = vcmp.eq.f32.partialorder %v3286, %v3288
        %v3290 = vsel %vm3289, %v3285, inf
        %3291 = vmin.xlane.f32.xlu0 %v3290
        %v3292 = vpop.xlane.xlu0 %3291
        %v3293 = vcvt.f32.s32 %v3292
        %v3294 = vcvt.f32.s32 %v3288
        %v3295 = vshll.u32 %v3294, 16
        %v3296 = vadd.s32 %v3295, %v3293
        %v3297 = vrot.slane %v3296, 4
        %vm3298 = vcmp.lt.s32.totalorder %v3296, %v3297
        %v3299 = vsel %vm3298, %v3296, %v3297
        %v3300 = vrot.slane %v3299, 2
        %vm3301 = vcmp.lt.s32.totalorder %v3299, %v3300
        %v3302 = vsel %vm3301, %v3299, %v3300
        %v3303 = vrot.slane %v3302, 1
        %vm3304 = vcmp.lt.s32.totalorder %v3302, %v3303
        %v3305 = vsel %vm3304, %v3302, %v3303
        %s3306 = vtos %v3305
        %v3307 = vstv %s3306
        %vm3308 = vcmp.eq.s32.totalorder %v2041, %v3307
        %v3309 = vsel %vm3308, 1, 0
        %v3310 = vcvt.s32.f32 %v3309
        %v3311 = vmul.f32 %v3252, %v3310
        %v3312 = vsel %vm2046, %v3311, 0.0
        %v3313 = vrot.slane %v3312, 4
        %v3314 = vadd.f32 %v3312, %v3313
        %v3315 = vrot.slane %v3314, 2
        %v3316 = vadd.f32 %v3314, %v3315
        %v3317 = vrot.slane %v3316, 1
        %v3318 = vadd.f32 %v3316, %v3317
        %v3319 = vld [vmem:[%s3 + $0x200] sm:$0xff]
        %v3320 = vld [vmem:[%s3 + $0x208] sm:$0xff]
        %v3321 = vld [vmem:[%s3 + $0x210] sm:$0xff]
        %v3322 = vld [vmem:[%s3 + $0x218] sm:$0xff]
        %v3324 = vsel %vm2046, %v3318, 0
        %3326 = vmatprep.subr.mxu0 0.0
        %3327 = vmatpush1.msra.mxu0 0.0
        %3328 = vmatprep.subr.mxu0 0.0
        %3329 = vmatpush1.msra.mxu0 0.0
        %3330 = vmatprep.subr.mxu0 0.0
        %3331 = vmatpush1.msra.mxu0 0.0
        %3332 = vmatprep.subr.mxu0 0.0
        %3333 = vmatpush1.msra.mxu0 0.0
        %3334 = vmatprep.subr.mxu0 0.0
        %3335 = vmatpush1.msra.mxu0 0.0
        %3336 = vmatprep.subr.mxu0 0.0
        %3337 = vmatpush1.msra.mxu0 0.0
        %3338 = vmatprep.subr.mxu0 0.0
        %3339 = vmatpush1.msra.mxu0 0.0
        %3340 = vmatprep.subr.mxu0 0.0
        %3341 = vmatpush1.msra.mxu0 0.0
        %3342 = vmatprep.subr.mxu0 0.0
        %3343 = vmatpush1.msra.mxu0 0.0
        %3344 = vmatprep.subr.mxu0 0.0
        %3345 = vmatpush1.msra.mxu0 0.0
        %3346 = vmatprep.subr.mxu0 0.0
        %3347 = vmatpush1.msra.mxu0 0.0
        %3348 = vmatprep.subr.mxu0 0.0
        %3349 = vmatpush1.msra.mxu0 0.0
        %3350 = vmatprep.subr.mxu0 0.0
        %3351 = vmatpush1.msra.mxu0 %v3322
        %3352 = vmatprep.subr.mxu0 0.0
        %3353 = vmatpush1.msra.mxu0 %v3321
        %3354 = vmatprep.subr.mxu0 0.0
        %3355 = vmatpush1.msra.mxu0 %v3320
        %3356 = vmatprep.subr.mxu0 0.0
        %3357 = vmatpush1.msra.mxu0 %v3319
        %3358 = vmatprep.subr.mxu0 0.0
        %3359 = vmatpush2.msra.mxu0 0.0
        %3360 = vmatprep.subr.mxu0 0.0
        %3361 = vmatpush2.msra.mxu0 0.0
        %3362 = vmatprep.subr.mxu0 0.0
        %3363 = vmatpush2.msra.mxu0 0.0
        %3364 = vmatprep.subr.mxu0 0.0
        %3365 = vmatpush2.msra.mxu0 0.0
        %3366 = vmatprep.subr.mxu0 0.0
        %3367 = vmatpush2.msra.mxu0 0.0
        %3368 = vmatprep.subr.mxu0 0.0
        %3369 = vmatpush2.msra.mxu0 0.0
        %3370 = vmatprep.subr.mxu0 0.0
        %3371 = vmatpush2.msra.mxu0 0.0
        %3372 = vmatprep.subr.mxu0 0.0
        %3373 = vmatpush2.msra.mxu0 0.0
        %3374 = vmatprep.subr.mxu0 0.0
        %3375 = vmatpush2.msra.mxu0 0.0
        %3376 = vmatprep.subr.mxu0 0.0
        %3377 = vmatpush2.msra.mxu0 0.0
        %3378 = vmatprep.subr.mxu0 0.0
        %3379 = vmatpush2.msra.mxu0 0.0
        %3380 = vmatprep.subr.mxu0 0.0
        %3381 = vmatpush2.msra.mxu0 0.0
        %3382 = vmatprep.subr.mxu0 0.0
        %3383 = vmatpush2.msra.mxu0 0.0
        %3384 = vmatprep.subr.mxu0 0.0
        %3385 = vmatpush2.msra.mxu0 0.0
        %3386 = vmatprep.subr.mxu0 0.0
        %3387 = vmatpush2.msra.mxu0 0.0
        %3388 = vmatprep.subr.mxu0 0.0
        %3389 = vmatpush2.msra.mxu0 0.0
        %3390 = vmatprep.mubr.f32.mxu0 0.0
        %3391 = vmatmul.mubr.f32.gmra.mxu0 %v3324
        %v3392 = vpop.f32.mrf.mxu0
        %v3393 = vadd.f32 0.0, %v3392
        %v3394 = vpop.f32.mrf.mxu0
        %3395 = vdwg.mxu0
        %vm3396 = vcmask 253952
        %3397 = vst.msk [vmem:[%s173] sm:$0x1] %vm3396, %v3393
      $region44: #{forward.1} parent=35 // pred_fallthru
        _
      %p3398 = scmp.lt.s32.totalorder %s15, 1
      %s3399 = scalar_select %p3398, %s15, 1
      %s3400 = scalar_lea.vmem %s4, %s3399
      // Predicated region
      $region45: #{forward.1} parent=35 // pred_check
        %p3401 = pneg %p117
      $region46: #{forward.1} parent=35 // pred_check_branch
        %3403 = sbr.rel (%p3401) target = $region48
      $region47: #{forward.1} parent=35 // pred_region
        _
      $region48: #{forward.1} parent=35 // pred_fallthru
        _
    $region36: #{forward.1} parent=5 // pred_fallthru
      _
    %p3404 = scmp.le.s32.totalorder 2, %s10
    // Predicated region
    $region49: #{forward.1} parent=5 // pred_check
      %p3405 = pneg %p3404
    $region50: #{forward.1} parent=5 // pred_check_branch
      %3407 = sbr.rel (%p3405) target = $region52
    $region51: #{forward.1} parent=5 // pred_region
      %s3408 = ssub.s32 %s10, 2
      // Predicated region
      $region53: #{forward.1} parent=51 // pred_check
        %p3409 = pneg %p123
      $region54: #{forward.1} parent=51 // pred_check_branch
        %3411 = sbr.rel (%p3409) target = $region56
      $region55: #{forward.1} parent=51 // pred_region
        %p3412 = scmp.lt.s32.totalorder %s16, 1
        %s3413 = scalar_select %p3412, %s16, 1
        %s3414 = scalar_lea.vmem %s4, %s3413
      $region56: #{forward.1} parent=51 // pred_fallthru
        _
    $region52: #{forward.1} parent=5 // pred_fallthru
      _
  $region6: #{forward.1} parent=0 // loop_footer
    %s14 = sadd.s32 1, %s10
  $region7: #{forward.1} parent=0 // loop_footer_branch
    %9 = sbr.rel target = $region3
  $region8: #{forward.1} parent=0 // loop_exit
    _

</llo_original>
